<compile_context>
chip_gen: v7x
topology: tpu7x:2x2x1
jax: 0.10.0
libtpu: 0.0.40
codegen_flags: <defaults>
</compile_context>

<pallas_src>
import numpy as np
import jax
import jax.numpy as jnp
from jax import lax
from jax.experimental import pallas as pl
from jax.experimental.pallas import tpu as pltpu


_IN = 28 * 28            # 784  flattened input image
_INP = 896               # 784 padded to 7*128: lane-dense input / stage-1 K
_N1 = 6 * 12 * 12        # 864  conv1+pool1 activation, NCHW-flattened
_N1P = 896               # 864 padded to a multiple of 128 (lane dense)
_N2 = 16 * 4 * 4         # 256  conv2+pool2 activation == PyTorch x.view(B,-1)
_NFP = 128               # padded FC width (120 / 84 / 10 -> 128)


def _round_up(x, m):
    return -(-x // m) * m


# ---------------------------------------------------------------------------
# Fused kernel: the whole LeNet5 forward for one batch tile.
# ---------------------------------------------------------------------------
def _lenet5_fused_kernel(x_ref, m1_ref, b1_ref, m2_ref, b2_ref,
                         w3_ref, b3_ref, w4_ref, b4_ref, w5_ref, b5_ref,
                         o_ref):
    cdt = m1_ref.dtype                       # MXU input dtype (bf16 or f32)

    def affine_relu(h, w_ref, b_ref):
        acc = jnp.dot(h, w_ref[...], preferred_element_type=jnp.float32)
        acc = acc + b_ref[...]               # (1, N) f32 bias, lane broadcast
        return jnp.maximum(acc, 0.0)         # f32

    h = x_ref[...]                                        # (TB, 896)
    h = affine_relu(h, m1_ref, b1_ref).astype(cdt)        # conv1+pool1+relu -> (TB, 896)
    h = affine_relu(h, m2_ref, b2_ref).astype(cdt)        # conv2+pool2+relu -> (TB, 256)
    h = affine_relu(h, w3_ref, b3_ref).astype(cdt)        # fc1 + relu       -> (TB, 128)
    h = affine_relu(h, w4_ref, b4_ref).astype(cdt)        # fc2 + relu       -> (TB, 128)
    h = affine_relu(h, w5_ref, b5_ref)                    # fc3 + relu       -> (TB, 128)
    o_ref[...] = h.astype(o_ref.dtype)


# ---------------------------------------------------------------------------
# One-time host-side weight prepack (outside the jitted hot path).
# ---------------------------------------------------------------------------
def prepare_params(params, compute_dtype=jnp.bfloat16):
    w1, b1, w2, b2, fw1, fb1, fw2, fb2, fw3, fb3 = [
        np.asarray(p, np.float32) for p in params]

    def fold_pool(w):
        # conv(k=5, s=1) followed by avg_pool(2, 2) == conv(k=6, s=2) with the
        # kernel averaged over the 4 pooling offsets (both ops are linear).
        cout, cin = w.shape[:2]
        we = np.zeros((cout, cin, 6, 6), np.float32)
        for di in (0, 1):
            for dj in (0, 1):
                we[:, :, di:di + 5, dj:dj + 5] += 0.25 * w
        return we

    w1e = fold_pool(w1)                      # (6, 1, 6, 6)
    w2e = fold_pool(w2)                      # (16, 6, 6, 6)
    k = np.arange(6)

    # Stage 1: dense affine map on the (padded) flattened 28x28 image.
    # Rows 784..895 stay zero (input pad region); output column order =
    # NCHW flatten of the (6, 12, 12) activation, columns 864..895 zero.
    m1 = np.zeros((_INP, _N1P), np.float32)
    for c in range(6):
        for oh in range(12):
            for ow in range(12):
                rows = (2 * oh + k)[:, None] * 28 + (2 * ow + k)[None, :]
                m1[rows, c * 144 + oh * 12 + ow] = w1e[c, 0]
    b1e = np.zeros((1, _N1P), np.float32)
    b1e[0, :_N1] = np.repeat(b1, 144)

    # Stage 2: consumes stage-1 columns directly, emits the (16, 4, 4)
    # activation in NCHW flatten order == exactly PyTorch's x.view(B, -1),
    # so fc1 applies with no reordering.
    m2 = np.zeros((_N1P, _N2), np.float32)
    for co in range(16):
        for oh in range(4):
            for ow in range(4):
                col = co * 16 + oh * 4 + ow
                for ci in range(6):
                    rows = (ci * 144
                            + (2 * oh + k)[:, None] * 12
                            + (2 * ow + k)[None, :])
                    m2[rows, col] = w2e[co, ci]
    b2e = np.zeros((1, _N2), np.float32)
    b2e[0, :] = np.repeat(b2, 16)

    def pack_fc(wt, bt, k_pad, n_pad):
        n, kk = wt.shape                     # PyTorch layout (out, in)
        w = np.zeros((k_pad, n_pad), np.float32)
        w[:kk, :n] = wt.T
        b = np.zeros((1, n_pad), np.float32)
        b[0, :n] = bt
        return w, b

    w3, b3e = pack_fc(fw1, fb1, _N2, _NFP)   # 256 -> 120 (padded to 128)
    w4, b4e = pack_fc(fw2, fb2, _NFP, _NFP)  # 120 -> 84  (padded 128x128)
    w5, b5e = pack_fc(fw3, fb3, _NFP, _NFP)  # 84  -> 10  (padded 128x128)

    cd = compute_dtype                       # biases stay f32 (f32 accumulate)
    return (jnp.asarray(m1, cd), jnp.asarray(b1e),
            jnp.asarray(m2, cd), jnp.asarray(b2e),
            jnp.asarray(w3, cd), jnp.asarray(b3e),
            jnp.asarray(w4, cd), jnp.asarray(b4e),
            jnp.asarray(w5, cd), jnp.asarray(b5e))


# ---------------------------------------------------------------------------
# Generation-aware batch-tile selection (trace-time, static).
# ---------------------------------------------------------------------------
def _pick_batch_tile(B, compute_dtype):
    # bf16 packs 16 rows per sublane-packed vreg; never emit tb=8 with bf16.
    pack = 16 if jnp.dtype(compute_dtype) == jnp.dtype(jnp.bfloat16) else 8
    try:
        kind = jax.devices()[0].device_kind.lower()
    except Exception:
        kind = ""
    # v5e MXU is 4x128x128 (M=128 saturates it); v6e/v7x MXUs are 2x256x256.
    mxu_rows = 128 if "v5" in kind else 256
    tb = min(mxu_rows, _round_up(B, pack))
    if "v7" in kind and B >= 2 * pack:
        # v7x has 2 TensorCores: keep >=2 grid steps so the "parallel" batch
        # axis can be sharded across both cores instead of idling one.
        tb = min(tb, _round_up(-(-B // 2), pack))
    return max(tb, pack)


# ---------------------------------------------------------------------------
# Forward: one fused pallas_call, batch tiled on a "parallel" grid axis.
# ---------------------------------------------------------------------------
def lenet5_forward(x, packed):
    """x: (B, 1, 28, 28) -> (B, 10)."""
    cdt = packed[0].dtype
    B = x.shape[0]
    x_flat = x.reshape(B, _IN).astype(cdt)
    # Lane-dense streamed input: pad 784 -> 896 (7*128); m1 pad rows are zero.
    x_flat = jnp.pad(x_flat, ((0, 0), (0, _INP - _IN)))

    tb = _pick_batch_tile(B, cdt)
    n_tiles = -(-B // tb)
    bp = n_tiles * tb
    if bp != B:
        x_flat = jnp.pad(x_flat, ((0, bp - B), (0, 0)))

    def resident(arr):                       # grid-invariant full-array block
        return pl.BlockSpec(arr.shape, lambda i: (0, 0))

    # Advisory cost estimate for XLA scheduling around the custom call.
    w_bytes = sum(int(np.prod(a.shape)) * a.dtype.itemsize for a in packed)
    flops = 2 * bp * (_INP * _N1P + _N1P * _N2 + _N2 * _NFP
                      + _NFP * _NFP + _NFP * _NFP)
    bytes_acc = (bp * _INP * x_flat.dtype.itemsize + w_bytes + bp * _NFP * 4)

    out = pl.pallas_call(
        _lenet5_fused_kernel,
        out_shape=jax.ShapeDtypeStruct((bp, _NFP), jnp.float32),
        grid=(n_tiles,),
        in_specs=[pl.BlockSpec((tb, _INP), lambda i: (i, 0))]
                 + [resident(a) for a in packed],
        out_specs=pl.BlockSpec((tb, _NFP), lambda i: (i, 0)),
        compiler_params=pltpu.CompilerParams(
            dimension_semantics=("parallel",)),
        cost_estimate=pl.CostEstimate(flops=flops, transcendentals=0,
                                      bytes_accessed=bytes_acc),
    )(x_flat, *packed)
    return out[:B, :10]


# ---------------------------------------------------------------------------
# Pure-JAX reference (matches the PyTorch module, incl. ReLU on fc3).
# ---------------------------------------------------------------------------
def lenet5_reference(x, params):
    w1, b1, w2, b2, fw1, fb1, fw2, fb2, fw3, fb3 = params
    dn = ("NCHW", "OIHW", "NCHW")

    def avg_pool(v):
        s = lax.reduce_window(v, 0.0, lax.add, (1, 1, 2, 2), (1, 1, 2, 2), "VALID")
        return s / 4.0

    c1 = lax.conv_general_dilated(x, w1, (1, 1), "VALID", dimension_numbers=dn)
    c1 = c1 + b1[None, :, None, None]
    p1 = jax.nn.relu(avg_pool(c1))
    c2 = lax.conv_general_dilated(p1, w2, (1, 1), "VALID", dimension_numbers=dn)
    c2 = c2 + b2[None, :, None, None]
    p2 = jax.nn.relu(avg_pool(c2))
    flat = p2.reshape(x.shape[0], -1)
    h1 = jax.nn.relu(flat @ fw1.T + fb1)
    h2 = jax.nn.relu(h1 @ fw2.T + fb2)
    h3 = jax.nn.relu(h2 @ fw3.T + fb3)
    return h3


def init_params(key):
    """Deterministic init mimicking PyTorch's uniform(-1/sqrt(fan_in), ...)."""
    def uni(k, shape, fan_in):
        bound = 1.0 / np.sqrt(fan_in)
        return jax.random.uniform(k, shape, jnp.float32, -bound, bound)

    ks = jax.random.split(key, 10)
    w1 = uni(ks[0], (6, 1, 5, 5), 1 * 5 * 5)
    b1 = uni(ks[1], (6,), 1 * 5 * 5)
    w2 = uni(ks[2], (16, 6, 5, 5), 6 * 5 * 5)
    b2 = uni(ks[3], (16,), 6 * 5 * 5)
    fw1 = uni(ks[4], (120, 256), 256)
    fb1 = uni(ks[5], (120,), 256)
    fw2 = uni(ks[6], (84, 120), 120)
    fb2 = uni(ks[7], (84,), 120)
    fw3 = uni(ks[8], (10, 84), 84)
    fb3 = uni(ks[9], (10,), 84)
    return (w1, b1, w2, b2, fw1, fb1, fw2, fb2, fw3, fb3)


if __name__ == "__main__":
    key = jax.random.PRNGKey(0)
    k_in, k_par = jax.random.split(key)

    # LeNet5's fc1(256) implies a 1x28x28 input; small batch of 2.
    x = jax.random.normal(k_in, (2, 1, 28, 28), jnp.float32)
    params = init_params(k_par)

    fwd = jax.jit(lenet5_forward)
    ref = jax.block_until_ready(lenet5_reference(x, params))

    # Default bf16 MXU-input path (f32 accumulation in-kernel).
    packed_bf16 = prepare_params(params)              # compute_dtype=bf16
    out_bf16 = jax.block_until_ready(fwd(x, packed_bf16))
    assert out_bf16.shape == (2, 10), out_bf16.shape
    np.testing.assert_allclose(np.asarray(out_bf16), np.asarray(ref),
                               rtol=1e-1, atol=1e-1)

    # f32 path: exact algebraic rewrite of the PyTorch forward.
    packed_f32 = prepare_params(params, jnp.float32)
    out_f32 = jax.block_until_ready(fwd(x, packed_f32))
    np.testing.assert_allclose(np.asarray(out_f32), np.asarray(ref),
                               rtol=2e-3, atol=2e-4)

    print("KERNEL_OK")
</pallas_src>

<mosaic_0001>
module attributes {stable_mosaic.version = 11 : i64} {
  func.func @_lenet5_fused_kernel(%arg0: i32, %arg1: memref<16x896xbf16, #tpu.memory_space<vmem>>, %arg2: memref<896x896xbf16, #tpu.memory_space<vmem>>, %arg3: memref<1x896xf32, #tpu.memory_space<vmem>>, %arg4: memref<896x256xbf16, #tpu.memory_space<vmem>>, %arg5: memref<1x256xf32, #tpu.memory_space<vmem>>, %arg6: memref<256x128xbf16, #tpu.memory_space<vmem>>, %arg7: memref<1x128xf32, #tpu.memory_space<vmem>>, %arg8: memref<128x128xbf16, #tpu.memory_space<vmem>>, %arg9: memref<1x128xf32, #tpu.memory_space<vmem>>, %arg10: memref<128x128xbf16, #tpu.memory_space<vmem>>, %arg11: memref<1x128xf32, #tpu.memory_space<vmem>>, %arg12: memref<16x128xf32, #tpu.memory_space<vmem>>) attributes {dimension_semantics = [#tpu.dimension_semantics<parallel>], iteration_bounds = array<i64: 1>, scalar_prefetch = 0 : i64, scratch_operands = 0 : i64, tpu.core_type = #tpu.core_type<tc>, window_params = [{transform_indices = @transform_0, window_bounds = array<i64: 16, 896>}, {pipeline_mode = #tpu.pipeline_mode<synchronous>, transform_indices = @transform_1, window_bounds = array<i64: 896, 896>}, {pipeline_mode = #tpu.pipeline_mode<synchronous>, transform_indices = @transform_2, window_bounds = array<i64: 1, 896>}, {pipeline_mode = #tpu.pipeline_mode<synchronous>, transform_indices = @transform_3, window_bounds = array<i64: 896, 256>}, {pipeline_mode = #tpu.pipeline_mode<synchronous>, transform_indices = @transform_4, window_bounds = array<i64: 1, 256>}, {pipeline_mode = #tpu.pipeline_mode<synchronous>, transform_indices = @transform_5, window_bounds = array<i64: 256, 128>}, {pipeline_mode = #tpu.pipeline_mode<synchronous>, transform_indices = @transform_6, window_bounds = array<i64: 1, 128>}, {pipeline_mode = #tpu.pipeline_mode<synchronous>, transform_indices = @transform_7, window_bounds = array<i64: 128, 128>}, {pipeline_mode = #tpu.pipeline_mode<synchronous>, transform_indices = @transform_8, window_bounds = array<i64: 1, 128>}, {pipeline_mode = #tpu.pipeline_mode<synchronous>, transform_indices = @transform_9, window_bounds = array<i64: 128, 128>}, {pipeline_mode = #tpu.pipeline_mode<synchronous>, transform_indices = @transform_10, window_bounds = array<i64: 1, 128>}, {transform_indices = @transform_11, window_bounds = array<i64: 16, 128>}]} {
    %c0 = arith.constant 0 : index
    %c0_0 = arith.constant 0 : index
    %0 = vector.load %arg1[%c0, %c0_0] : memref<16x896xbf16, #tpu.memory_space<vmem>>, vector<16x896xbf16>
    %c0_1 = arith.constant 0 : index
    %c0_2 = arith.constant 0 : index
    %1 = vector.load %arg2[%c0_1, %c0_2] : memref<896x896xbf16, #tpu.memory_space<vmem>>, vector<896x896xbf16>
    %cst = arith.constant dense<0.000000e+00> : vector<16x896xf32>
    %2 = tpu.matmul %0, %1, %cst {dimension_numbers = #tpu.dot_dimension_numbers<[1], [0], [0], [1], [0, 0, 1, 1], [], []>} : vector<16x896xbf16>, vector<896x896xbf16>, vector<16x896xf32> -> vector<16x896xf32>
    %c0_3 = arith.constant 0 : index
    %c0_4 = arith.constant 0 : index
    %3 = vector.load %arg3[%c0_3, %c0_4] : memref<1x896xf32, #tpu.memory_space<vmem>>, vector<1x896xf32>
    %4 = vector.broadcast %3 : vector<1x896xf32> to vector<16x896xf32>
    %5 = arith.addf %2, %4 : vector<16x896xf32>
    %cst_5 = arith.constant 0.000000e+00 : f32
    %6 = vector.broadcast %cst_5 : f32 to vector<16x896xf32>
    %7 = arith.maximumf %5, %6 : vector<16x896xf32>
    %8 = arith.truncf %7 : vector<16x896xf32> to vector<16x896xbf16>
    %c0_6 = arith.constant 0 : index
    %c0_7 = arith.constant 0 : index
    %9 = vector.load %arg4[%c0_6, %c0_7] : memref<896x256xbf16, #tpu.memory_space<vmem>>, vector<896x256xbf16>
    %cst_8 = arith.constant dense<0.000000e+00> : vector<16x256xf32>
    %10 = tpu.matmul %8, %9, %cst_8 {dimension_numbers = #tpu.dot_dimension_numbers<[1], [0], [0], [1], [0, 0, 1, 1], [], []>} : vector<16x896xbf16>, vector<896x256xbf16>, vector<16x256xf32> -> vector<16x256xf32>
    %c0_9 = arith.constant 0 : index
    %c0_10 = arith.constant 0 : index
    %11 = vector.load %arg5[%c0_9, %c0_10] : memref<1x256xf32, #tpu.memory_space<vmem>>, vector<1x256xf32>
    %12 = vector.broadcast %11 : vector<1x256xf32> to vector<16x256xf32>
    %13 = arith.addf %10, %12 : vector<16x256xf32>
    %cst_11 = arith.constant 0.000000e+00 : f32
    %14 = vector.broadcast %cst_11 : f32 to vector<16x256xf32>
    %15 = arith.maximumf %13, %14 : vector<16x256xf32>
    %16 = arith.truncf %15 : vector<16x256xf32> to vector<16x256xbf16>
    %c0_12 = arith.constant 0 : index
    %c0_13 = arith.constant 0 : index
    %17 = vector.load %arg6[%c0_12, %c0_13] : memref<256x128xbf16, #tpu.memory_space<vmem>>, vector<256x128xbf16>
    %cst_14 = arith.constant dense<0.000000e+00> : vector<16x128xf32>
    %18 = tpu.matmul %16, %17, %cst_14 {dimension_numbers = #tpu.dot_dimension_numbers<[1], [0], [0], [1], [0, 0, 1, 1], [], []>} : vector<16x256xbf16>, vector<256x128xbf16>, vector<16x128xf32> -> vector<16x128xf32>
    %c0_15 = arith.constant 0 : index
    %c0_16 = arith.constant 0 : index
    %19 = vector.load %arg7[%c0_15, %c0_16] : memref<1x128xf32, #tpu.memory_space<vmem>>, vector<1x128xf32>
    %20 = vector.broadcast %19 : vector<1x128xf32> to vector<16x128xf32>
    %21 = arith.addf %18, %20 : vector<16x128xf32>
    %cst_17 = arith.constant 0.000000e+00 : f32
    %22 = vector.broadcast %cst_17 : f32 to vector<16x128xf32>
    %23 = arith.maximumf %21, %22 : vector<16x128xf32>
    %24 = arith.truncf %23 : vector<16x128xf32> to vector<16x128xbf16>
    %c0_18 = arith.constant 0 : index
    %c0_19 = arith.constant 0 : index
    %25 = vector.load %arg8[%c0_18, %c0_19] : memref<128x128xbf16, #tpu.memory_space<vmem>>, vector<128x128xbf16>
    %cst_20 = arith.constant dense<0.000000e+00> : vector<16x128xf32>
    %26 = tpu.matmul %24, %25, %cst_20 {dimension_numbers = #tpu.dot_dimension_numbers<[1], [0], [0], [1], [0, 0, 1, 1], [], []>} : vector<16x128xbf16>, vector<128x128xbf16>, vector<16x128xf32> -> vector<16x128xf32>
    %c0_21 = arith.constant 0 : index
    %c0_22 = arith.constant 0 : index
    %27 = vector.load %arg9[%c0_21, %c0_22] : memref<1x128xf32, #tpu.memory_space<vmem>>, vector<1x128xf32>
    %28 = vector.broadcast %27 : vector<1x128xf32> to vector<16x128xf32>
    %29 = arith.addf %26, %28 : vector<16x128xf32>
    %cst_23 = arith.constant 0.000000e+00 : f32
    %30 = vector.broadcast %cst_23 : f32 to vector<16x128xf32>
    %31 = arith.maximumf %29, %30 : vector<16x128xf32>
    %32 = arith.truncf %31 : vector<16x128xf32> to vector<16x128xbf16>
    %c0_24 = arith.constant 0 : index
    %c0_25 = arith.constant 0 : index
    %33 = vector.load %arg10[%c0_24, %c0_25] : memref<128x128xbf16, #tpu.memory_space<vmem>>, vector<128x128xbf16>
    %cst_26 = arith.constant dense<0.000000e+00> : vector<16x128xf32>
    %34 = tpu.matmul %32, %33, %cst_26 {dimension_numbers = #tpu.dot_dimension_numbers<[1], [0], [0], [1], [0, 0, 1, 1], [], []>} : vector<16x128xbf16>, vector<128x128xbf16>, vector<16x128xf32> -> vector<16x128xf32>
    %c0_27 = arith.constant 0 : index
    %c0_28 = arith.constant 0 : index
    %35 = vector.load %arg11[%c0_27, %c0_28] : memref<1x128xf32, #tpu.memory_space<vmem>>, vector<1x128xf32>
    %36 = vector.broadcast %35 : vector<1x128xf32> to vector<16x128xf32>
    %37 = arith.addf %34, %36 : vector<16x128xf32>
    %cst_29 = arith.constant 0.000000e+00 : f32
    %38 = vector.broadcast %cst_29 : f32 to vector<16x128xf32>
    %39 = arith.maximumf %37, %38 : vector<16x128xf32>
    %c0_30 = arith.constant 0 : index
    %c0_31 = arith.constant 0 : index
    %40 = vector.load %arg12[%c0_30, %c0_31] : memref<16x128xf32, #tpu.memory_space<vmem>>, vector<16x128xf32>
    tpu.vector_store %arg12[%c0_30, %c0_31], %39 {strides = array<i32>} : memref<16x128xf32, #tpu.memory_space<vmem>>, vector<16x128xf32>,
    return
  }
  func.func @transform_0(%arg0: i32) -> (i32, i32) {
    %c0_i32 = arith.constant 0 : i32
    %c0_i32_0 = arith.constant 0 : i32
    return %arg0, %c0_i32 : i32, i32
  }
  func.func @transform_1(%arg0: i32) -> (i32, i32) {
    %c0_i32 = arith.constant 0 : i32
    %c0_i32_0 = arith.constant 0 : i32
    %c0_i32_1 = arith.constant 0 : i32
    return %c0_i32, %c0_i32_0 : i32, i32
  }
  func.func @transform_2(%arg0: i32) -> (i32, i32) {
    %c0_i32 = arith.constant 0 : i32
    %c0_i32_0 = arith.constant 0 : i32
    %c0_i32_1 = arith.constant 0 : i32
    return %c0_i32, %c0_i32_0 : i32, i32
  }
  func.func @transform_3(%arg0: i32) -> (i32, i32) {
    %c0_i32 = arith.constant 0 : i32
    %c0_i32_0 = arith.constant 0 : i32
    %c0_i32_1 = arith.constant 0 : i32
    return %c0_i32, %c0_i32_0 : i32, i32
  }
  func.func @transform_4(%arg0: i32) -> (i32, i32) {
    %c0_i32 = arith.constant 0 : i32
    %c0_i32_0 = arith.constant 0 : i32
    %c0_i32_1 = arith.constant 0 : i32
    return %c0_i32, %c0_i32_0 : i32, i32
  }
  func.func @transform_5(%arg0: i32) -> (i32, i32) {
    %c0_i32 = arith.constant 0 : i32
    %c0_i32_0 = arith.constant 0 : i32
    %c0_i32_1 = arith.constant 0 : i32
    return %c0_i32, %c0_i32_0 : i32, i32
  }
  func.func @transform_6(%arg0: i32) -> (i32, i32) {
    %c0_i32 = arith.constant 0 : i32
    %c0_i32_0 = arith.constant 0 : i32
    %c0_i32_1 = arith.constant 0 : i32
    return %c0_i32, %c0_i32_0 : i32, i32
  }
  func.func @transform_7(%arg0: i32) -> (i32, i32) {
    %c0_i32 = arith.constant 0 : i32
    %c0_i32_0 = arith.constant 0 : i32
    %c0_i32_1 = arith.constant 0 : i32
    return %c0_i32, %c0_i32_0 : i32, i32
  }
  func.func @transform_8(%arg0: i32) -> (i32, i32) {
    %c0_i32 = arith.constant 0 : i32
    %c0_i32_0 = arith.constant 0 : i32
    %c0_i32_1 = arith.constant 0 : i32
    return %c0_i32, %c0_i32_0 : i32, i32
  }
  func.func @transform_9(%arg0: i32) -> (i32, i32) {
    %c0_i32 = arith.constant 0 : i32
    %c0_i32_0 = arith.constant 0 : i32
    %c0_i32_1 = arith.constant 0 : i32
    return %c0_i32, %c0_i32_0 : i32, i32
  }
  func.func @transform_10(%arg0: i32) -> (i32, i32) {
    %c0_i32 = arith.constant 0 : i32
    %c0_i32_0 = arith.constant 0 : i32
    %c0_i32_1 = arith.constant 0 : i32
    return %c0_i32, %c0_i32_0 : i32, i32
  }
  func.func @transform_11(%arg0: i32) -> (i32, i32) {
    %c0_i32 = arith.constant 0 : i32
    %c0_i32_0 = arith.constant 0 : i32
    return %arg0, %c0_i32 : i32, i32
  }
}

</mosaic_0001>

<llo_original>
// kernel: lenet5_forward.1
$region0: #{lenet5_forward.1}
  #allocation0 [shape = 'u32[]', space=smem, size = 0x4, offset = 0x4, fixed_abs, tag = 'smem constant byte address 0x4 - core index']
  #allocation1 [shape = 'u32[144,128]{1,0:T(1,128)}', space=vmem, size = 0x12000, scoped, tag = 'internal scratch']
  %s0 = inlined_call_operand.vmem [shape: bf16[16,896], index: 0, kind: input, shape index: {}]
  %s1 = inlined_call_operand.hbm [shape: bf16[896,896], index: 1, kind: input, shape index: {}]
  %s2 = inlined_call_operand.hbm [shape: f32[1,896], index: 2, kind: input, shape index: {}]
  %s3 = inlined_call_operand.hbm [shape: bf16[896,256], index: 3, kind: input, shape index: {}]
  %s4 = inlined_call_operand.hbm [shape: f32[1,256], index: 4, kind: input, shape index: {}]
  %s5 = inlined_call_operand.hbm [shape: bf16[256,128], index: 5, kind: input, shape index: {}]
  %s6 = inlined_call_operand.hbm [shape: f32[1,128], index: 6, kind: input, shape index: {}]
  %s7 = inlined_call_operand.hbm [shape: bf16[128,128], index: 7, kind: input, shape index: {}]
  %s8 = inlined_call_operand.hbm [shape: f32[1,128], index: 8, kind: input, shape index: {}]
  %s9 = inlined_call_operand.hbm [shape: bf16[128,128], index: 9, kind: input, shape index: {}]
  %s10 = inlined_call_operand.hbm [shape: f32[1,128], index: 10, kind: input, shape index: {}]
  %s11 = inlined_call_operand.vmem [shape: f32[16,128], index: 11, kind: output, shape index: {}]
  %s12 = sld [smem:[#allocation0]]
  $region94: #{lenet5_forward.1} parent=0
    _
  %s14 = ssub.s32 1, %s12
  %s15 = scalar_select 0, %s14, %s12
  $region1: #{lenet5_forward.1} parent=0
    #allocation2 [shape = 'u8[1605632]{0}', space=vmem, size = 0x188000, scoped, tag = 'input window, operand 1, single buffered']
    #allocation3 [shape = 's32[1]{0}', space=sflag, size = 0x4, scoped, tag = 'scoped memory for lenet5_forward.1']
    #allocation4 [shape = 'u8[3584]{0}', space=vmem, size = 0x1000, scoped, tag = 'input window, operand 2, single buffered']
    #allocation5 [shape = 's32[1]{0}', space=sflag, size = 0x4, scoped, tag = 'scoped memory for lenet5_forward.1']
    #allocation6 [shape = 'u8[458752]{0}', space=vmem, size = 0x70000, scoped, tag = 'input window, operand 3, single buffered']
    #allocation7 [shape = 'u8[1024]{0}', space=vmem, size = 0x400, scoped, tag = 'input window, operand 4, single buffered']
    #allocation8 [shape = 's32[1]{0}', space=sflag, size = 0x4, scoped, tag = 'scoped memory for lenet5_forward.1']
    #allocation9 [shape = 'u8[65536]{0}', space=vmem, size = 0x10000, scoped, tag = 'input window, operand 5, single buffered']
    #allocation10 [shape = 'u8[512]{0}', space=vmem, size = 0x400, scoped, tag = 'input window, operand 6, single buffered']
    #allocation11 [shape = 's32[1]{0}', space=sflag, size = 0x4, scoped, tag = 'scoped memory for lenet5_forward.1']
    #allocation12 [shape = 'u8[32768]{0}', space=vmem, size = 0x8000, scoped, tag = 'input window, operand 7, single buffered']
    #allocation13 [shape = 'u8[512]{0}', space=vmem, size = 0x400, scoped, tag = 'input window, operand 8, single buffered']
    #allocation14 [shape = 's32[1]{0}', space=sflag, size = 0x4, scoped, tag = 'scoped memory for lenet5_forward.1']
    #allocation15 [shape = 'u8[32768]{0}', space=vmem, size = 0x8000, scoped, tag = 'input window, operand 9, single buffered']
    #allocation16 [shape = 'u8[512]{0}', space=vmem, size = 0x400, scoped, tag = 'input window, operand 10, single buffered']
    #allocation17 [shape = 's32[1]{0}', space=sflag, size = 0x4, scoped, tag = 'scoped memory for lenet5_forward.1']
    %16 = vsyncpa [#allocation3], 0
    %17 = vsyncpa [#allocation5], 0
    %18 = vsyncpa [#allocation8], 0
    %19 = vsyncpa [#allocation11], 0
    %20 = vsyncpa [#allocation14], 0
    %21 = vsyncpa [#allocation17], 0
    // Predicated region
    $region2: #{lenet5_forward.1} parent=1 // pred_check
      _
    $region3: #{lenet5_forward.1} parent=1 // pred_check_branch
      %23 = sbr.rel (0) target = $region5
    $region4: #{lenet5_forward.1} parent=1 // pred_region
      _
    $region5: #{lenet5_forward.1} parent=1 // pred_fallthru
      _
    // Predicated region
    $region6: #{lenet5_forward.1} parent=1 // pred_check
      _
    $region7: #{lenet5_forward.1} parent=1 // pred_check_branch
      %25 = sbr.rel (0) target = $region9
    $region8: #{lenet5_forward.1} parent=1 // pred_region
      %s27 = ssub.s32 50176, 50176
      %28 = vsyncadd [#allocation3], %s27
      %s29 = sshll.u32 [#allocation2], 4
      %s30 = int_to_ptr.vmem [resolvable:$true] %s29
      %35 = dma.hbm_to_vmem [thread:$0]  %s1, 50176, %s30, [#allocation3], 448, 448, 28
    $region9: #{lenet5_forward.1} parent=1 // pred_fallthru
      _
    // Predicated region
    $region10: #{lenet5_forward.1} parent=1 // pred_check
      _
    $region11: #{lenet5_forward.1} parent=1 // pred_check_branch
      %37 = sbr.rel (0) target = $region13
    $region12: #{lenet5_forward.1} parent=1 // pred_region
      %s39 = ssub.s32 112, 112
      %40 = vsyncadd [#allocation5], %s39
      %s42 = sshll.u32 [#allocation4], 4
      %s43 = int_to_ptr.vmem [resolvable:$true] %s42
      %45 = dma.hbm_to_vmem [thread:$0]  %s2, 112, %s43, [#allocation5]
    $region13: #{lenet5_forward.1} parent=1 // pred_fallthru
      _
    // Predicated region
    $region14: #{lenet5_forward.1} parent=1 // pred_check
      _
    $region15: #{lenet5_forward.1} parent=1 // pred_check_branch
      %47 = sbr.rel (0) target = $region17
    $region16: #{lenet5_forward.1} parent=1 // pred_region
      %s49 = ssub.s32 14336, 14336
      %50 = vsyncadd [#allocation5], %s49
      %s51 = sshll.u32 [#allocation6], 4
      %s52 = int_to_ptr.vmem [resolvable:$true] %s51
      %57 = dma.hbm_to_vmem [thread:$0]  %s3, 14336, %s52, [#allocation5], 128, 128, 8
    $region17: #{lenet5_forward.1} parent=1 // pred_fallthru
      _
    // Predicated region
    $region18: #{lenet5_forward.1} parent=1 // pred_check
      _
    $region19: #{lenet5_forward.1} parent=1 // pred_check_branch
      %59 = sbr.rel (0) target = $region21
    $region20: #{lenet5_forward.1} parent=1 // pred_region
      %s61 = ssub.s32 32, 32
      %62 = vsyncadd [#allocation8], %s61
      %s64 = sshll.u32 [#allocation7], 4
      %s65 = int_to_ptr.vmem [resolvable:$true] %s64
      %67 = dma.hbm_to_vmem [thread:$0]  %s4, 32, %s65, [#allocation8]
    $region21: #{lenet5_forward.1} parent=1 // pred_fallthru
      _
    // Predicated region
    $region22: #{lenet5_forward.1} parent=1 // pred_check
      _
    $region23: #{lenet5_forward.1} parent=1 // pred_check_branch
      %69 = sbr.rel (0) target = $region25
    $region24: #{lenet5_forward.1} parent=1 // pred_region
      %s71 = ssub.s32 2048, 2048
      %72 = vsyncadd [#allocation8], %s71
      %s73 = sshll.u32 [#allocation9], 4
      %s74 = int_to_ptr.vmem [resolvable:$true] %s73
      %79 = dma.hbm_to_vmem [thread:$0]  %s5, 2048, %s74, [#allocation8], 64, 64, 4
    $region25: #{lenet5_forward.1} parent=1 // pred_fallthru
      _
    // Predicated region
    $region26: #{lenet5_forward.1} parent=1 // pred_check
      _
    $region27: #{lenet5_forward.1} parent=1 // pred_check_branch
      %81 = sbr.rel (0) target = $region29
    $region28: #{lenet5_forward.1} parent=1 // pred_region
      %s83 = ssub.s32 16, 16
      %84 = vsyncadd [#allocation11], %s83
      %s86 = sshll.u32 [#allocation10], 4
      %s87 = int_to_ptr.vmem [resolvable:$true] %s86
      %89 = dma.hbm_to_vmem [thread:$0]  %s6, 16, %s87, [#allocation11]
    $region29: #{lenet5_forward.1} parent=1 // pred_fallthru
      _
    // Predicated region
    $region30: #{lenet5_forward.1} parent=1 // pred_check
      _
    $region31: #{lenet5_forward.1} parent=1 // pred_check_branch
      %91 = sbr.rel (0) target = $region33
    $region32: #{lenet5_forward.1} parent=1 // pred_region
      %s93 = ssub.s32 1024, 1024
      %94 = vsyncadd [#allocation11], %s93
      %s95 = sshll.u32 [#allocation12], 4
      %s96 = int_to_ptr.vmem [resolvable:$true] %s95
      %101 = dma.hbm_to_vmem [thread:$0]  %s7, 1024, %s96, [#allocation11], 64, 64, 4
    $region33: #{lenet5_forward.1} parent=1 // pred_fallthru
      _
    // Predicated region
    $region34: #{lenet5_forward.1} parent=1 // pred_check
      _
    $region35: #{lenet5_forward.1} parent=1 // pred_check_branch
      %103 = sbr.rel (0) target = $region37
    $region36: #{lenet5_forward.1} parent=1 // pred_region
      %s105 = ssub.s32 16, 16
      %106 = vsyncadd [#allocation14], %s105
      %s108 = sshll.u32 [#allocation13], 4
      %s109 = int_to_ptr.vmem [resolvable:$true] %s108
      %111 = dma.hbm_to_vmem [thread:$0]  %s8, 16, %s109, [#allocation14]
    $region37: #{lenet5_forward.1} parent=1 // pred_fallthru
      _
    // Predicated region
    $region38: #{lenet5_forward.1} parent=1 // pred_check
      _
    $region39: #{lenet5_forward.1} parent=1 // pred_check_branch
      %113 = sbr.rel (0) target = $region41
    $region40: #{lenet5_forward.1} parent=1 // pred_region
      %s115 = ssub.s32 1024, 1024
      %116 = vsyncadd [#allocation14], %s115
      %s117 = sshll.u32 [#allocation15], 4
      %s118 = int_to_ptr.vmem [resolvable:$true] %s117
      %123 = dma.hbm_to_vmem [thread:$0]  %s9, 1024, %s118, [#allocation14], 64, 64, 4
    $region41: #{lenet5_forward.1} parent=1 // pred_fallthru
      _
    // Predicated region
    $region42: #{lenet5_forward.1} parent=1 // pred_check
      _
    $region43: #{lenet5_forward.1} parent=1 // pred_check_branch
      %125 = sbr.rel (0) target = $region45
    $region44: #{lenet5_forward.1} parent=1 // pred_region
      %s127 = ssub.s32 16, 16
      %128 = vsyncadd [#allocation17], %s127
      %s130 = sshll.u32 [#allocation16], 4
      %s131 = int_to_ptr.vmem [resolvable:$true] %s130
      %133 = dma.hbm_to_vmem [thread:$0]  %s10, 16, %s131, [#allocation17]
    $region45: #{lenet5_forward.1} parent=1 // pred_fallthru
      _
    // Predicated region
    $region46: #{lenet5_forward.1} parent=1 // pred_check
      _
    $region47: #{lenet5_forward.1} parent=1 // pred_check_branch
      %135 = sbr.rel (0) target = $region49
    $region48: #{lenet5_forward.1} parent=1 // pred_region
      %136 = dma.done [#allocation3], 50176
    $region49: #{lenet5_forward.1} parent=1 // pred_fallthru
      _
    // Predicated region
    $region50: #{lenet5_forward.1} parent=1 // pred_check
      _
    $region51: #{lenet5_forward.1} parent=1 // pred_check_branch
      %138 = sbr.rel (0) target = $region53
    $region52: #{lenet5_forward.1} parent=1 // pred_region
      %139 = dma.done [#allocation5], 112
    $region53: #{lenet5_forward.1} parent=1 // pred_fallthru
      _
    // Predicated region
    $region54: #{lenet5_forward.1} parent=1 // pred_check
      _
    $region55: #{lenet5_forward.1} parent=1 // pred_check_branch
      %141 = sbr.rel (0) target = $region57
    $region56: #{lenet5_forward.1} parent=1 // pred_region
      %142 = dma.done [#allocation5], 14336
    $region57: #{lenet5_forward.1} parent=1 // pred_fallthru
      _
    // Predicated region
    $region58: #{lenet5_forward.1} parent=1 // pred_check
      _
    $region59: #{lenet5_forward.1} parent=1 // pred_check_branch
      %144 = sbr.rel (0) target = $region61
    $region60: #{lenet5_forward.1} parent=1 // pred_region
      %145 = dma.done [#allocation8], 32
    $region61: #{lenet5_forward.1} parent=1 // pred_fallthru
      _
    // Predicated region
    $region62: #{lenet5_forward.1} parent=1 // pred_check
      _
    $region63: #{lenet5_forward.1} parent=1 // pred_check_branch
      %147 = sbr.rel (0) target = $region65
    $region64: #{lenet5_forward.1} parent=1 // pred_region
      %148 = dma.done [#allocation8], 2048
    $region65: #{lenet5_forward.1} parent=1 // pred_fallthru
      _
    // Predicated region
    $region66: #{lenet5_forward.1} parent=1 // pred_check
      _
    $region67: #{lenet5_forward.1} parent=1 // pred_check_branch
      %150 = sbr.rel (0) target = $region69
    $region68: #{lenet5_forward.1} parent=1 // pred_region
      %151 = dma.done [#allocation11], 16
    $region69: #{lenet5_forward.1} parent=1 // pred_fallthru
      _
    // Predicated region
    $region70: #{lenet5_forward.1} parent=1 // pred_check
      _
    $region71: #{lenet5_forward.1} parent=1 // pred_check_branch
      %153 = sbr.rel (0) target = $region73
    $region72: #{lenet5_forward.1} parent=1 // pred_region
      %154 = dma.done [#allocation11], 1024
    $region73: #{lenet5_forward.1} parent=1 // pred_fallthru
      _
    // Predicated region
    $region74: #{lenet5_forward.1} parent=1 // pred_check
      _
    $region75: #{lenet5_forward.1} parent=1 // pred_check_branch
      %156 = sbr.rel (0) target = $region77
    $region76: #{lenet5_forward.1} parent=1 // pred_region
      %157 = dma.done [#allocation14], 16
    $region77: #{lenet5_forward.1} parent=1 // pred_fallthru
      _
    // Predicated region
    $region78: #{lenet5_forward.1} parent=1 // pred_check
      _
    $region79: #{lenet5_forward.1} parent=1 // pred_check_branch
      %159 = sbr.rel (0) target = $region81
    $region80: #{lenet5_forward.1} parent=1 // pred_region
      %160 = dma.done [#allocation14], 1024
    $region81: #{lenet5_forward.1} parent=1 // pred_fallthru
      _
    // Predicated region
    $region82: #{lenet5_forward.1} parent=1 // pred_check
      _
    $region83: #{lenet5_forward.1} parent=1 // pred_check_branch
      %162 = sbr.rel (0) target = $region85
    $region84: #{lenet5_forward.1} parent=1 // pred_region
      %163 = dma.done [#allocation17], 16
    $region85: #{lenet5_forward.1} parent=1 // pred_fallthru
      _
    %v165 = vld [vmem:[%s0] sm:$0xff]
    %v166 = vld [vmem:[%s0 + $0x8] sm:$0xff]
    %v167 = vld [vmem:[%s0 + $0x10] sm:$0xff]
    %v168 = vld [vmem:[%s0 + $0x18] sm:$0xf]
    %v169 = vld [vmem:[%s0 + $0x1c] sm:$0xff]
    %v170 = vld [vmem:[%s0 + $0x24] sm:$0xff]
    %v171 = vld [vmem:[%s0 + $0x2c] sm:$0xff]
    %v172 = vld [vmem:[%s0 + $0x34] sm:$0xf]
    %v173 = vld [vmem:[#allocation2] sm:$0xff]
    %v174 = vld [vmem:[#allocation2 + $0x8] sm:$0xff]
    %v175 = vld [vmem:[#allocation2 + $0x10] sm:$0xff]
    %v176 = vld [vmem:[#allocation2 + $0x18] sm:$0xf]
    %v177 = vld [vmem:[#allocation2 + $0x1c] sm:$0xff]
    %v178 = vld [vmem:[#allocation2 + $0x24] sm:$0xff]
    %v179 = vld [vmem:[#allocation2 + $0x2c] sm:$0xff]
    %v180 = vld [vmem:[#allocation2 + $0x34] sm:$0xf]
    %v181 = vld [vmem:[#allocation2 + $0x38] sm:$0xff]
    %v182 = vld [vmem:[#allocation2 + $0x40] sm:$0xff]
    %v183 = vld [vmem:[#allocation2 + $0x48] sm:$0xff]
    %v184 = vld [vmem:[#allocation2 + $0x50] sm:$0xf]
    %v185 = vld [vmem:[#allocation2 + $0x54] sm:$0xff]
    %v186 = vld [vmem:[#allocation2 + $0x5c] sm:$0xff]
    %v187 = vld [vmem:[#allocation2 + $0x64] sm:$0xff]
    %v188 = vld [vmem:[#allocation2 + $0x6c] sm:$0xf]
    %v189 = vld [vmem:[#allocation2 + $0x70] sm:$0xff]
    %v190 = vld [vmem:[#allocation2 + $0x78] sm:$0xff]
    %v191 = vld [vmem:[#allocation2 + $0x80] sm:$0xff]
    %v192 = vld [vmem:[#allocation2 + $0x88] sm:$0xf]
    %v193 = vld [vmem:[#allocation2 + $0x8c] sm:$0xff]
    %v194 = vld [vmem:[#allocation2 + $0x94] sm:$0xff]
    %v195 = vld [vmem:[#allocation2 + $0x9c] sm:$0xff]
    %v196 = vld [vmem:[#allocation2 + $0xa4] sm:$0xf]
    %v197 = vld [vmem:[#allocation2 + $0xa8] sm:$0xff]
    %v198 = vld [vmem:[#allocation2 + $0xb0] sm:$0xff]
    %v199 = vld [vmem:[#allocation2 + $0xb8] sm:$0xff]
    %v200 = vld [vmem:[#allocation2 + $0xc0] sm:$0xf]
    %v201 = vld [vmem:[#allocation2 + $0xc4] sm:$0xff]
    %v202 = vld [vmem:[#allocation2 + $0xcc] sm:$0xff]
    %v203 = vld [vmem:[#allocation2 + $0xd4] sm:$0xff]
    %v204 = vld [vmem:[#allocation2 + $0xdc] sm:$0xf]
    %v205 = vld [vmem:[#allocation2 + $0xe0] sm:$0xff]
    %v206 = vld [vmem:[#allocation2 + $0xe8] sm:$0xff]
    %v207 = vld [vmem:[#allocation2 + $0xf0] sm:$0xff]
    %v208 = vld [vmem:[#allocation2 + $0xf8] sm:$0xf]
    %v209 = vld [vmem:[#allocation2 + $0xfc] sm:$0xff]
    %v210 = vld [vmem:[#allocation2 + $0x104] sm:$0xff]
    %v211 = vld [vmem:[#allocation2 + $0x10c] sm:$0xff]
    %v212 = vld [vmem:[#allocation2 + $0x114] sm:$0xf]
    %v213 = vld [vmem:[#allocation2 + $0x118] sm:$0xff]
    %v214 = vld [vmem:[#allocation2 + $0x120] sm:$0xff]
    %v215 = vld [vmem:[#allocation2 + $0x128] sm:$0xff]
    %v216 = vld [vmem:[#allocation2 + $0x130] sm:$0xf]
    %v217 = vld [vmem:[#allocation2 + $0x134] sm:$0xff]
    %v218 = vld [vmem:[#allocation2 + $0x13c] sm:$0xff]
    %v219 = vld [vmem:[#allocation2 + $0x144] sm:$0xff]
    %v220 = vld [vmem:[#allocation2 + $0x14c] sm:$0xf]
    %v221 = vld [vmem:[#allocation2 + $0x150] sm:$0xff]
    %v222 = vld [vmem:[#allocation2 + $0x158] sm:$0xff]
    %v223 = vld [vmem:[#allocation2 + $0x160] sm:$0xff]
    %v224 = vld [vmem:[#allocation2 + $0x168] sm:$0xf]
    %v225 = vld [vmem:[#allocation2 + $0x16c] sm:$0xff]
    %v226 = vld [vmem:[#allocation2 + $0x174] sm:$0xff]
    %v227 = vld [vmem:[#allocation2 + $0x17c] sm:$0xff]
    %v228 = vld [vmem:[#allocation2 + $0x184] sm:$0xf]
    %v229 = vld [vmem:[#allocation2 + $0x188] sm:$0xff]
    %v230 = vld [vmem:[#allocation2 + $0x190] sm:$0xff]
    %v231 = vld [vmem:[#allocation2 + $0x198] sm:$0xff]
    %v232 = vld [vmem:[#allocation2 + $0x1a0] sm:$0xf]
    %v233 = vld [vmem:[#allocation2 + $0x1a4] sm:$0xff]
    %v234 = vld [vmem:[#allocation2 + $0x1ac] sm:$0xff]
    %v235 = vld [vmem:[#allocation2 + $0x1b4] sm:$0xff]
    %v236 = vld [vmem:[#allocation2 + $0x1bc] sm:$0xf]
    %v237 = vld [vmem:[#allocation2 + $0x1c0] sm:$0xff]
    %v238 = vld [vmem:[#allocation2 + $0x1c8] sm:$0xff]
    %v239 = vld [vmem:[#allocation2 + $0x1d0] sm:$0xff]
    %v240 = vld [vmem:[#allocation2 + $0x1d8] sm:$0xf]
    %v241 = vld [vmem:[#allocation2 + $0x1dc] sm:$0xff]
    %v242 = vld [vmem:[#allocation2 + $0x1e4] sm:$0xff]
    %v243 = vld [vmem:[#allocation2 + $0x1ec] sm:$0xff]
    %v244 = vld [vmem:[#allocation2 + $0x1f4] sm:$0xf]
    %v245 = vld [vmem:[#allocation2 + $0x1f8] sm:$0xff]
    %v246 = vld [vmem:[#allocation2 + $0x200] sm:$0xff]
    %v247 = vld [vmem:[#allocation2 + $0x208] sm:$0xff]
    %v248 = vld [vmem:[#allocation2 + $0x210] sm:$0xf]
    %v249 = vld [vmem:[#allocation2 + $0x214] sm:$0xff]
    %v250 = vld [vmem:[#allocation2 + $0x21c] sm:$0xff]
    %v251 = vld [vmem:[#allocation2 + $0x224] sm:$0xff]
    %v252 = vld [vmem:[#allocation2 + $0x22c] sm:$0xf]
    %v253 = vld [vmem:[#allocation2 + $0x230] sm:$0xff]
    %v254 = vld [vmem:[#allocation2 + $0x238] sm:$0xff]
    %v255 = vld [vmem:[#allocation2 + $0x240] sm:$0xff]
    %v256 = vld [vmem:[#allocation2 + $0x248] sm:$0xf]
    %v257 = vld [vmem:[#allocation2 + $0x24c] sm:$0xff]
    %v258 = vld [vmem:[#allocation2 + $0x254] sm:$0xff]
    %v259 = vld [vmem:[#allocation2 + $0x25c] sm:$0xff]
    %v260 = vld [vmem:[#allocation2 + $0x264] sm:$0xf]
    %v261 = vld [vmem:[#allocation2 + $0x268] sm:$0xff]
    %v262 = vld [vmem:[#allocation2 + $0x270] sm:$0xff]
    %v263 = vld [vmem:[#allocation2 + $0x278] sm:$0xff]
    %v264 = vld [vmem:[#allocation2 + $0x280] sm:$0xf]
    %v265 = vld [vmem:[#allocation2 + $0x284] sm:$0xff]
    %v266 = vld [vmem:[#allocation2 + $0x28c] sm:$0xff]
    %v267 = vld [vmem:[#allocation2 + $0x294] sm:$0xff]
    %v268 = vld [vmem:[#allocation2 + $0x29c] sm:$0xf]
    %v269 = vld [vmem:[#allocation2 + $0x2a0] sm:$0xff]
    %v270 = vld [vmem:[#allocation2 + $0x2a8] sm:$0xff]
    %v271 = vld [vmem:[#allocation2 + $0x2b0] sm:$0xff]
    %v272 = vld [vmem:[#allocation2 + $0x2b8] sm:$0xf]
    %v273 = vld [vmem:[#allocation2 + $0x2bc] sm:$0xff]
    %v274 = vld [vmem:[#allocation2 + $0x2c4] sm:$0xff]
    %v275 = vld [vmem:[#allocation2 + $0x2cc] sm:$0xff]
    %v276 = vld [vmem:[#allocation2 + $0x2d4] sm:$0xf]
    %v277 = vld [vmem:[#allocation2 + $0x2d8] sm:$0xff]
    %v278 = vld [vmem:[#allocation2 + $0x2e0] sm:$0xff]
    %v279 = vld [vmem:[#allocation2 + $0x2e8] sm:$0xff]
    %v280 = vld [vmem:[#allocation2 + $0x2f0] sm:$0xf]
    %v281 = vld [vmem:[#allocation2 + $0x2f4] sm:$0xff]
    %v282 = vld [vmem:[#allocation2 + $0x2fc] sm:$0xff]
    %v283 = vld [vmem:[#allocation2 + $0x304] sm:$0xff]
    %v284 = vld [vmem:[#allocation2 + $0x30c] sm:$0xf]
    %v285 = vld [vmem:[#allocation2 + $0x310] sm:$0xff]
    %v286 = vld [vmem:[#allocation2 + $0x318] sm:$0xff]
    %v287 = vld [vmem:[#allocation2 + $0x320] sm:$0xff]
    %v288 = vld [vmem:[#allocation2 + $0x328] sm:$0xf]
    %v289 = vld [vmem:[#allocation2 + $0x32c] sm:$0xff]
    %v290 = vld [vmem:[#allocation2 + $0x334] sm:$0xff]
    %v291 = vld [vmem:[#allocation2 + $0x33c] sm:$0xff]
    %v292 = vld [vmem:[#allocation2 + $0x344] sm:$0xf]
    %v293 = vld [vmem:[#allocation2 + $0x348] sm:$0xff]
    %v294 = vld [vmem:[#allocation2 + $0x350] sm:$0xff]
    %v295 = vld [vmem:[#allocation2 + $0x358] sm:$0xff]
    %v296 = vld [vmem:[#allocation2 + $0x360] sm:$0xf]
    %v297 = vld [vmem:[#allocation2 + $0x364] sm:$0xff]
    %v298 = vld [vmem:[#allocation2 + $0x36c] sm:$0xff]
    %v299 = vld [vmem:[#allocation2 + $0x374] sm:$0xff]
    %v300 = vld [vmem:[#allocation2 + $0x37c] sm:$0xf]
    %v301 = vld [vmem:[#allocation2 + $0x380] sm:$0xff]
    %v302 = vld [vmem:[#allocation2 + $0x388] sm:$0xff]
    %v303 = vld [vmem:[#allocation2 + $0x390] sm:$0xff]
    %v304 = vld [vmem:[#allocation2 + $0x398] sm:$0xf]
    %v305 = vld [vmem:[#allocation2 + $0x39c] sm:$0xff]
    %v306 = vld [vmem:[#allocation2 + $0x3a4] sm:$0xff]
    %v307 = vld [vmem:[#allocation2 + $0x3ac] sm:$0xff]
    %v308 = vld [vmem:[#allocation2 + $0x3b4] sm:$0xf]
    %v309 = vld [vmem:[#allocation2 + $0x3b8] sm:$0xff]
    %v310 = vld [vmem:[#allocation2 + $0x3c0] sm:$0xff]
    %v311 = vld [vmem:[#allocation2 + $0x3c8] sm:$0xff]
    %v312 = vld [vmem:[#allocation2 + $0x3d0] sm:$0xf]
    %v313 = vld [vmem:[#allocation2 + $0x3d4] sm:$0xff]
    %v314 = vld [vmem:[#allocation2 + $0x3dc] sm:$0xff]
    %v315 = vld [vmem:[#allocation2 + $0x3e4] sm:$0xff]
    %v316 = vld [vmem:[#allocation2 + $0x3ec] sm:$0xf]
    %v317 = vld [vmem:[#allocation2 + $0x3f0] sm:$0xff]
    %v318 = vld [vmem:[#allocation2 + $0x3f8] sm:$0xff]
    %v319 = vld [vmem:[#allocation2 + $0x400] sm:$0xff]
    %v320 = vld [vmem:[#allocation2 + $0x408] sm:$0xf]
    %v321 = vld [vmem:[#allocation2 + $0x40c] sm:$0xff]
    %v322 = vld [vmem:[#allocation2 + $0x414] sm:$0xff]
    %v323 = vld [vmem:[#allocation2 + $0x41c] sm:$0xff]
    %v324 = vld [vmem:[#allocation2 + $0x424] sm:$0xf]
    %v325 = vld [vmem:[#allocation2 + $0x428] sm:$0xff]
    %v326 = vld [vmem:[#allocation2 + $0x430] sm:$0xff]
    %v327 = vld [vmem:[#allocation2 + $0x438] sm:$0xff]
    %v328 = vld [vmem:[#allocation2 + $0x440] sm:$0xf]
    %v329 = vld [vmem:[#allocation2 + $0x444] sm:$0xff]
    %v330 = vld [vmem:[#allocation2 + $0x44c] sm:$0xff]
    %v331 = vld [vmem:[#allocation2 + $0x454] sm:$0xff]
    %v332 = vld [vmem:[#allocation2 + $0x45c] sm:$0xf]
    %v333 = vld [vmem:[#allocation2 + $0x460] sm:$0xff]
    %v334 = vld [vmem:[#allocation2 + $0x468] sm:$0xff]
    %v335 = vld [vmem:[#allocation2 + $0x470] sm:$0xff]
    %v336 = vld [vmem:[#allocation2 + $0x478] sm:$0xf]
    %v337 = vld [vmem:[#allocation2 + $0x47c] sm:$0xff]
    %v338 = vld [vmem:[#allocation2 + $0x484] sm:$0xff]
    %v339 = vld [vmem:[#allocation2 + $0x48c] sm:$0xff]
    %v340 = vld [vmem:[#allocation2 + $0x494] sm:$0xf]
    %v341 = vld [vmem:[#allocation2 + $0x498] sm:$0xff]
    %v342 = vld [vmem:[#allocation2 + $0x4a0] sm:$0xff]
    %v343 = vld [vmem:[#allocation2 + $0x4a8] sm:$0xff]
    %v344 = vld [vmem:[#allocation2 + $0x4b0] sm:$0xf]
    %v345 = vld [vmem:[#allocation2 + $0x4b4] sm:$0xff]
    %v346 = vld [vmem:[#allocation2 + $0x4bc] sm:$0xff]
    %v347 = vld [vmem:[#allocation2 + $0x4c4] sm:$0xff]
    %v348 = vld [vmem:[#allocation2 + $0x4cc] sm:$0xf]
    %v349 = vld [vmem:[#allocation2 + $0x4d0] sm:$0xff]
    %v350 = vld [vmem:[#allocation2 + $0x4d8] sm:$0xff]
    %v351 = vld [vmem:[#allocation2 + $0x4e0] sm:$0xff]
    %v352 = vld [vmem:[#allocation2 + $0x4e8] sm:$0xf]
    %v353 = vld [vmem:[#allocation2 + $0x4ec] sm:$0xff]
    %v354 = vld [vmem:[#allocation2 + $0x4f4] sm:$0xff]
    %v355 = vld [vmem:[#allocation2 + $0x4fc] sm:$0xff]
    %v356 = vld [vmem:[#allocation2 + $0x504] sm:$0xf]
    %v357 = vld [vmem:[#allocation2 + $0x508] sm:$0xff]
    %v358 = vld [vmem:[#allocation2 + $0x510] sm:$0xff]
    %v359 = vld [vmem:[#allocation2 + $0x518] sm:$0xff]
    %v360 = vld [vmem:[#allocation2 + $0x520] sm:$0xf]
    %v361 = vld [vmem:[#allocation2 + $0x524] sm:$0xff]
    %v362 = vld [vmem:[#allocation2 + $0x52c] sm:$0xff]
    %v363 = vld [vmem:[#allocation2 + $0x534] sm:$0xff]
    %v364 = vld [vmem:[#allocation2 + $0x53c] sm:$0xf]
    %v365 = vld [vmem:[#allocation2 + $0x540] sm:$0xff]
    %v366 = vld [vmem:[#allocation2 + $0x548] sm:$0xff]
    %v367 = vld [vmem:[#allocation2 + $0x550] sm:$0xff]
    %v368 = vld [vmem:[#allocation2 + $0x558] sm:$0xf]
    %v369 = vld [vmem:[#allocation2 + $0x55c] sm:$0xff]
    %v370 = vld [vmem:[#allocation2 + $0x564] sm:$0xff]
    %v371 = vld [vmem:[#allocation2 + $0x56c] sm:$0xff]
    %v372 = vld [vmem:[#allocation2 + $0x574] sm:$0xf]
    %v373 = vld [vmem:[#allocation2 + $0x578] sm:$0xff]
    %v374 = vld [vmem:[#allocation2 + $0x580] sm:$0xff]
    %v375 = vld [vmem:[#allocation2 + $0x588] sm:$0xff]
    %v376 = vld [vmem:[#allocation2 + $0x590] sm:$0xf]
    %v377 = vld [vmem:[#allocation2 + $0x594] sm:$0xff]
    %v378 = vld [vmem:[#allocation2 + $0x59c] sm:$0xff]
    %v379 = vld [vmem:[#allocation2 + $0x5a4] sm:$0xff]
    %v380 = vld [vmem:[#allocation2 + $0x5ac] sm:$0xf]
    %v381 = vld [vmem:[#allocation2 + $0x5b0] sm:$0xff]
    %v382 = vld [vmem:[#allocation2 + $0x5b8] sm:$0xff]
    %v383 = vld [vmem:[#allocation2 + $0x5c0] sm:$0xff]
    %v384 = vld [vmem:[#allocation2 + $0x5c8] sm:$0xf]
    %v385 = vld [vmem:[#allocation2 + $0x5cc] sm:$0xff]
    %v386 = vld [vmem:[#allocation2 + $0x5d4] sm:$0xff]
    %v387 = vld [vmem:[#allocation2 + $0x5dc] sm:$0xff]
    %v388 = vld [vmem:[#allocation2 + $0x5e4] sm:$0xf]
    %v389 = vld [vmem:[#allocation2 + $0x5e8] sm:$0xff]
    %v390 = vld [vmem:[#allocation2 + $0x5f0] sm:$0xff]
    %v391 = vld [vmem:[#allocation2 + $0x5f8] sm:$0xff]
    %v392 = vld [vmem:[#allocation2 + $0x600] sm:$0xf]
    %v393 = vld [vmem:[#allocation2 + $0x604] sm:$0xff]
    %v394 = vld [vmem:[#allocation2 + $0x60c] sm:$0xff]
    %v395 = vld [vmem:[#allocation2 + $0x614] sm:$0xff]
    %v396 = vld [vmem:[#allocation2 + $0x61c] sm:$0xf]
    %v397 = vld [vmem:[#allocation2 + $0x620] sm:$0xff]
    %v398 = vld [vmem:[#allocation2 + $0x628] sm:$0xff]
    %v399 = vld [vmem:[#allocation2 + $0x630] sm:$0xff]
    %v400 = vld [vmem:[#allocation2 + $0x638] sm:$0xf]
    %v401 = vld [vmem:[#allocation2 + $0x63c] sm:$0xff]
    %v402 = vld [vmem:[#allocation2 + $0x644] sm:$0xff]
    %v403 = vld [vmem:[#allocation2 + $0x64c] sm:$0xff]
    %v404 = vld [vmem:[#allocation2 + $0x654] sm:$0xf]
    %v405 = vld [vmem:[#allocation2 + $0x658] sm:$0xff]
    %v406 = vld [vmem:[#allocation2 + $0x660] sm:$0xff]
    %v407 = vld [vmem:[#allocation2 + $0x668] sm:$0xff]
    %v408 = vld [vmem:[#allocation2 + $0x670] sm:$0xf]
    %v409 = vld [vmem:[#allocation2 + $0x674] sm:$0xff]
    %v410 = vld [vmem:[#allocation2 + $0x67c] sm:$0xff]
    %v411 = vld [vmem:[#allocation2 + $0x684] sm:$0xff]
    %v412 = vld [vmem:[#allocation2 + $0x68c] sm:$0xf]
    %v413 = vld [vmem:[#allocation2 + $0x690] sm:$0xff]
    %v414 = vld [vmem:[#allocation2 + $0x698] sm:$0xff]
    %v415 = vld [vmem:[#allocation2 + $0x6a0] sm:$0xff]
    %v416 = vld [vmem:[#allocation2 + $0x6a8] sm:$0xf]
    %v417 = vld [vmem:[#allocation2 + $0x6ac] sm:$0xff]
    %v418 = vld [vmem:[#allocation2 + $0x6b4] sm:$0xff]
    %v419 = vld [vmem:[#allocation2 + $0x6bc] sm:$0xff]
    %v420 = vld [vmem:[#allocation2 + $0x6c4] sm:$0xf]
    %v421 = vld [vmem:[#allocation2 + $0x6c8] sm:$0xff]
    %v422 = vld [vmem:[#allocation2 + $0x6d0] sm:$0xff]
    %v423 = vld [vmem:[#allocation2 + $0x6d8] sm:$0xff]
    %v424 = vld [vmem:[#allocation2 + $0x6e0] sm:$0xf]
    %v425 = vld [vmem:[#allocation2 + $0x6e4] sm:$0xff]
    %v426 = vld [vmem:[#allocation2 + $0x6ec] sm:$0xff]
    %v427 = vld [vmem:[#allocation2 + $0x6f4] sm:$0xff]
    %v428 = vld [vmem:[#allocation2 + $0x6fc] sm:$0xf]
    %v429 = vld [vmem:[#allocation2 + $0x700] sm:$0xff]
    %v430 = vld [vmem:[#allocation2 + $0x708] sm:$0xff]
    %v431 = vld [vmem:[#allocation2 + $0x710] sm:$0xff]
    %v432 = vld [vmem:[#allocation2 + $0x718] sm:$0xf]
    %v433 = vld [vmem:[#allocation2 + $0x71c] sm:$0xff]
    %v434 = vld [vmem:[#allocation2 + $0x724] sm:$0xff]
    %v435 = vld [vmem:[#allocation2 + $0x72c] sm:$0xff]
    %v436 = vld [vmem:[#allocation2 + $0x734] sm:$0xf]
    %v437 = vld [vmem:[#allocation2 + $0x738] sm:$0xff]
    %v438 = vld [vmem:[#allocation2 + $0x740] sm:$0xff]
    %v439 = vld [vmem:[#allocation2 + $0x748] sm:$0xff]
    %v440 = vld [vmem:[#allocation2 + $0x750] sm:$0xf]
    %v441 = vld [vmem:[#allocation2 + $0x754] sm:$0xff]
    %v442 = vld [vmem:[#allocation2 + $0x75c] sm:$0xff]
    %v443 = vld [vmem:[#allocation2 + $0x764] sm:$0xff]
    %v444 = vld [vmem:[#allocation2 + $0x76c] sm:$0xf]
    %v445 = vld [vmem:[#allocation2 + $0x770] sm:$0xff]
    %v446 = vld [vmem:[#allocation2 + $0x778] sm:$0xff]
    %v447 = vld [vmem:[#allocation2 + $0x780] sm:$0xff]
    %v448 = vld [vmem:[#allocation2 + $0x788] sm:$0xf]
    %v449 = vld [vmem:[#allocation2 + $0x78c] sm:$0xff]
    %v450 = vld [vmem:[#allocation2 + $0x794] sm:$0xff]
    %v451 = vld [vmem:[#allocation2 + $0x79c] sm:$0xff]
    %v452 = vld [vmem:[#allocation2 + $0x7a4] sm:$0xf]
    %v453 = vld [vmem:[#allocation2 + $0x7a8] sm:$0xff]
    %v454 = vld [vmem:[#allocation2 + $0x7b0] sm:$0xff]
    %v455 = vld [vmem:[#allocation2 + $0x7b8] sm:$0xff]
    %v456 = vld [vmem:[#allocation2 + $0x7c0] sm:$0xf]
    %v457 = vld [vmem:[#allocation2 + $0x7c4] sm:$0xff]
    %v458 = vld [vmem:[#allocation2 + $0x7cc] sm:$0xff]
    %v459 = vld [vmem:[#allocation2 + $0x7d4] sm:$0xff]
    %v460 = vld [vmem:[#allocation2 + $0x7dc] sm:$0xf]
    %v461 = vld [vmem:[#allocation2 + $0x7e0] sm:$0xff]
    %v462 = vld [vmem:[#allocation2 + $0x7e8] sm:$0xff]
    %v463 = vld [vmem:[#allocation2 + $0x7f0] sm:$0xff]
    %v464 = vld [vmem:[#allocation2 + $0x7f8] sm:$0xf]
    %v465 = vld [vmem:[#allocation2 + $0x7fc] sm:$0xff]
    %v466 = vld [vmem:[#allocation2 + $0x804] sm:$0xff]
    %v467 = vld [vmem:[#allocation2 + $0x80c] sm:$0xff]
    %v468 = vld [vmem:[#allocation2 + $0x814] sm:$0xf]
    %v469 = vld [vmem:[#allocation2 + $0x818] sm:$0xff]
    %v470 = vld [vmem:[#allocation2 + $0x820] sm:$0xff]
    %v471 = vld [vmem:[#allocation2 + $0x828] sm:$0xff]
    %v472 = vld [vmem:[#allocation2 + $0x830] sm:$0xf]
    %v473 = vld [vmem:[#allocation2 + $0x834] sm:$0xff]
    %v474 = vld [vmem:[#allocation2 + $0x83c] sm:$0xff]
    %v475 = vld [vmem:[#allocation2 + $0x844] sm:$0xff]
    %v476 = vld [vmem:[#allocation2 + $0x84c] sm:$0xf]
    %v477 = vld [vmem:[#allocation2 + $0x850] sm:$0xff]
    %v478 = vld [vmem:[#allocation2 + $0x858] sm:$0xff]
    %v479 = vld [vmem:[#allocation2 + $0x860] sm:$0xff]
    %v480 = vld [vmem:[#allocation2 + $0x868] sm:$0xf]
    %v481 = vld [vmem:[#allocation2 + $0x86c] sm:$0xff]
    %v482 = vld [vmem:[#allocation2 + $0x874] sm:$0xff]
    %v483 = vld [vmem:[#allocation2 + $0x87c] sm:$0xff]
    %v484 = vld [vmem:[#allocation2 + $0x884] sm:$0xf]
    %v485 = vld [vmem:[#allocation2 + $0x888] sm:$0xff]
    %v486 = vld [vmem:[#allocation2 + $0x890] sm:$0xff]
    %v487 = vld [vmem:[#allocation2 + $0x898] sm:$0xff]
    %v488 = vld [vmem:[#allocation2 + $0x8a0] sm:$0xf]
    %v489 = vld [vmem:[#allocation2 + $0x8a4] sm:$0xff]
    %v490 = vld [vmem:[#allocation2 + $0x8ac] sm:$0xff]
    %v491 = vld [vmem:[#allocation2 + $0x8b4] sm:$0xff]
    %v492 = vld [vmem:[#allocation2 + $0x8bc] sm:$0xf]
    %v493 = vld [vmem:[#allocation2 + $0x8c0] sm:$0xff]
    %v494 = vld [vmem:[#allocation2 + $0x8c8] sm:$0xff]
    %v495 = vld [vmem:[#allocation2 + $0x8d0] sm:$0xff]
    %v496 = vld [vmem:[#allocation2 + $0x8d8] sm:$0xf]
    %v497 = vld [vmem:[#allocation2 + $0x8dc] sm:$0xff]
    %v498 = vld [vmem:[#allocation2 + $0x8e4] sm:$0xff]
    %v499 = vld [vmem:[#allocation2 + $0x8ec] sm:$0xff]
    %v500 = vld [vmem:[#allocation2 + $0x8f4] sm:$0xf]
    %v501 = vld [vmem:[#allocation2 + $0x8f8] sm:$0xff]
    %v502 = vld [vmem:[#allocation2 + $0x900] sm:$0xff]
    %v503 = vld [vmem:[#allocation2 + $0x908] sm:$0xff]
    %v504 = vld [vmem:[#allocation2 + $0x910] sm:$0xf]
    %v505 = vld [vmem:[#allocation2 + $0x914] sm:$0xff]
    %v506 = vld [vmem:[#allocation2 + $0x91c] sm:$0xff]
    %v507 = vld [vmem:[#allocation2 + $0x924] sm:$0xff]
    %v508 = vld [vmem:[#allocation2 + $0x92c] sm:$0xf]
    %v509 = vld [vmem:[#allocation2 + $0x930] sm:$0xff]
    %v510 = vld [vmem:[#allocation2 + $0x938] sm:$0xff]
    %v511 = vld [vmem:[#allocation2 + $0x940] sm:$0xff]
    %v512 = vld [vmem:[#allocation2 + $0x948] sm:$0xf]
    %v513 = vld [vmem:[#allocation2 + $0x94c] sm:$0xff]
    %v514 = vld [vmem:[#allocation2 + $0x954] sm:$0xff]
    %v515 = vld [vmem:[#allocation2 + $0x95c] sm:$0xff]
    %v516 = vld [vmem:[#allocation2 + $0x964] sm:$0xf]
    %v517 = vld [vmem:[#allocation2 + $0x968] sm:$0xff]
    %v518 = vld [vmem:[#allocation2 + $0x970] sm:$0xff]
    %v519 = vld [vmem:[#allocation2 + $0x978] sm:$0xff]
    %v520 = vld [vmem:[#allocation2 + $0x980] sm:$0xf]
    %v521 = vld [vmem:[#allocation2 + $0x984] sm:$0xff]
    %v522 = vld [vmem:[#allocation2 + $0x98c] sm:$0xff]
    %v523 = vld [vmem:[#allocation2 + $0x994] sm:$0xff]
    %v524 = vld [vmem:[#allocation2 + $0x99c] sm:$0xf]
    %v525 = vld [vmem:[#allocation2 + $0x9a0] sm:$0xff]
    %v526 = vld [vmem:[#allocation2 + $0x9a8] sm:$0xff]
    %v527 = vld [vmem:[#allocation2 + $0x9b0] sm:$0xff]
    %v528 = vld [vmem:[#allocation2 + $0x9b8] sm:$0xf]
    %v529 = vld [vmem:[#allocation2 + $0x9bc] sm:$0xff]
    %v530 = vld [vmem:[#allocation2 + $0x9c4] sm:$0xff]
    %v531 = vld [vmem:[#allocation2 + $0x9cc] sm:$0xff]
    %v532 = vld [vmem:[#allocation2 + $0x9d4] sm:$0xf]
    %v533 = vld [vmem:[#allocation2 + $0x9d8] sm:$0xff]
    %v534 = vld [vmem:[#allocation2 + $0x9e0] sm:$0xff]
    %v535 = vld [vmem:[#allocation2 + $0x9e8] sm:$0xff]
    %v536 = vld [vmem:[#allocation2 + $0x9f0] sm:$0xf]
    %v537 = vld [vmem:[#allocation2 + $0x9f4] sm:$0xff]
    %v538 = vld [vmem:[#allocation2 + $0x9fc] sm:$0xff]
    %v539 = vld [vmem:[#allocation2 + $0xa04] sm:$0xff]
    %v540 = vld [vmem:[#allocation2 + $0xa0c] sm:$0xf]
    %v541 = vld [vmem:[#allocation2 + $0xa10] sm:$0xff]
    %v542 = vld [vmem:[#allocation2 + $0xa18] sm:$0xff]
    %v543 = vld [vmem:[#allocation2 + $0xa20] sm:$0xff]
    %v544 = vld [vmem:[#allocation2 + $0xa28] sm:$0xf]
    %v545 = vld [vmem:[#allocation2 + $0xa2c] sm:$0xff]
    %v546 = vld [vmem:[#allocation2 + $0xa34] sm:$0xff]
    %v547 = vld [vmem:[#allocation2 + $0xa3c] sm:$0xff]
    %v548 = vld [vmem:[#allocation2 + $0xa44] sm:$0xf]
    %v549 = vld [vmem:[#allocation2 + $0xa48] sm:$0xff]
    %v550 = vld [vmem:[#allocation2 + $0xa50] sm:$0xff]
    %v551 = vld [vmem:[#allocation2 + $0xa58] sm:$0xff]
    %v552 = vld [vmem:[#allocation2 + $0xa60] sm:$0xf]
    %v553 = vld [vmem:[#allocation2 + $0xa64] sm:$0xff]
    %v554 = vld [vmem:[#allocation2 + $0xa6c] sm:$0xff]
    %v555 = vld [vmem:[#allocation2 + $0xa74] sm:$0xff]
    %v556 = vld [vmem:[#allocation2 + $0xa7c] sm:$0xf]
    %v557 = vld [vmem:[#allocation2 + $0xa80] sm:$0xff]
    %v558 = vld [vmem:[#allocation2 + $0xa88] sm:$0xff]
    %v559 = vld [vmem:[#allocation2 + $0xa90] sm:$0xff]
    %v560 = vld [vmem:[#allocation2 + $0xa98] sm:$0xf]
    %v561 = vld [vmem:[#allocation2 + $0xa9c] sm:$0xff]
    %v562 = vld [vmem:[#allocation2 + $0xaa4] sm:$0xff]
    %v563 = vld [vmem:[#allocation2 + $0xaac] sm:$0xff]
    %v564 = vld [vmem:[#allocation2 + $0xab4] sm:$0xf]
    %v565 = vld [vmem:[#allocation2 + $0xab8] sm:$0xff]
    %v566 = vld [vmem:[#allocation2 + $0xac0] sm:$0xff]
    %v567 = vld [vmem:[#allocation2 + $0xac8] sm:$0xff]
    %v568 = vld [vmem:[#allocation2 + $0xad0] sm:$0xf]
    %v569 = vld [vmem:[#allocation2 + $0xad4] sm:$0xff]
    %v570 = vld [vmem:[#allocation2 + $0xadc] sm:$0xff]
    %v571 = vld [vmem:[#allocation2 + $0xae4] sm:$0xff]
    %v572 = vld [vmem:[#allocation2 + $0xaec] sm:$0xf]
    %v573 = vld [vmem:[#allocation2 + $0xaf0] sm:$0xff]
    %v574 = vld [vmem:[#allocation2 + $0xaf8] sm:$0xff]
    %v575 = vld [vmem:[#allocation2 + $0xb00] sm:$0xff]
    %v576 = vld [vmem:[#allocation2 + $0xb08] sm:$0xf]
    %v577 = vld [vmem:[#allocation2 + $0xb0c] sm:$0xff]
    %v578 = vld [vmem:[#allocation2 + $0xb14] sm:$0xff]
    %v579 = vld [vmem:[#allocation2 + $0xb1c] sm:$0xff]
    %v580 = vld [vmem:[#allocation2 + $0xb24] sm:$0xf]
    %v581 = vld [vmem:[#allocation2 + $0xb28] sm:$0xff]
    %v582 = vld [vmem:[#allocation2 + $0xb30] sm:$0xff]
    %v583 = vld [vmem:[#allocation2 + $0xb38] sm:$0xff]
    %v584 = vld [vmem:[#allocation2 + $0xb40] sm:$0xf]
    %v585 = vld [vmem:[#allocation2 + $0xb44] sm:$0xff]
    %v586 = vld [vmem:[#allocation2 + $0xb4c] sm:$0xff]
    %v587 = vld [vmem:[#allocation2 + $0xb54] sm:$0xff]
    %v588 = vld [vmem:[#allocation2 + $0xb5c] sm:$0xf]
    %v589 = vld [vmem:[#allocation2 + $0xb60] sm:$0xff]
    %v590 = vld [vmem:[#allocation2 + $0xb68] sm:$0xff]
    %v591 = vld [vmem:[#allocation2 + $0xb70] sm:$0xff]
    %v592 = vld [vmem:[#allocation2 + $0xb78] sm:$0xf]
    %v593 = vld [vmem:[#allocation2 + $0xb7c] sm:$0xff]
    %v594 = vld [vmem:[#allocation2 + $0xb84] sm:$0xff]
    %v595 = vld [vmem:[#allocation2 + $0xb8c] sm:$0xff]
    %v596 = vld [vmem:[#allocation2 + $0xb94] sm:$0xf]
    %v597 = vld [vmem:[#allocation2 + $0xb98] sm:$0xff]
    %v598 = vld [vmem:[#allocation2 + $0xba0] sm:$0xff]
    %v599 = vld [vmem:[#allocation2 + $0xba8] sm:$0xff]
    %v600 = vld [vmem:[#allocation2 + $0xbb0] sm:$0xf]
    %v601 = vld [vmem:[#allocation2 + $0xbb4] sm:$0xff]
    %v602 = vld [vmem:[#allocation2 + $0xbbc] sm:$0xff]
    %v603 = vld [vmem:[#allocation2 + $0xbc4] sm:$0xff]
    %v604 = vld [vmem:[#allocation2 + $0xbcc] sm:$0xf]
    %v605 = vld [vmem:[#allocation2 + $0xbd0] sm:$0xff]
    %v606 = vld [vmem:[#allocation2 + $0xbd8] sm:$0xff]
    %v607 = vld [vmem:[#allocation2 + $0xbe0] sm:$0xff]
    %v608 = vld [vmem:[#allocation2 + $0xbe8] sm:$0xf]
    %v609 = vld [vmem:[#allocation2 + $0xbec] sm:$0xff]
    %v610 = vld [vmem:[#allocation2 + $0xbf4] sm:$0xff]
    %v611 = vld [vmem:[#allocation2 + $0xbfc] sm:$0xff]
    %v612 = vld [vmem:[#allocation2 + $0xc04] sm:$0xf]
    %v613 = vld [vmem:[#allocation2 + $0xc08] sm:$0xff]
    %v614 = vld [vmem:[#allocation2 + $0xc10] sm:$0xff]
    %v615 = vld [vmem:[#allocation2 + $0xc18] sm:$0xff]
    %v616 = vld [vmem:[#allocation2 + $0xc20] sm:$0xf]
    %v617 = vld [vmem:[#allocation2 + $0xc24] sm:$0xff]
    %v618 = vld [vmem:[#allocation2 + $0xc2c] sm:$0xff]
    %v619 = vld [vmem:[#allocation2 + $0xc34] sm:$0xff]
    %v620 = vld [vmem:[#allocation2 + $0xc3c] sm:$0xf]
    %v621 = vld [vmem:[#allocation4] sm:$0xff]
    %v623 = vlaneseq
    %v624 = vshrl.u32 %v623, 7
    %v625 = vsub.s32 0, %v624
    %v626 = vrot.slane %v621, %v625
    %v627 = vlaneseq
    %v628 = vshrl.u32 %v627, 7
    %v629 = vsub.s32 1, %v628
    %v630 = vrot.slane %v621, %v629
    %v631 = vlaneseq
    %v632 = vshrl.u32 %v631, 7
    %v633 = vsub.s32 2, %v632
    %v634 = vrot.slane %v621, %v633
    %v635 = vlaneseq
    %v636 = vshrl.u32 %v635, 7
    %v637 = vsub.s32 3, %v636
    %v638 = vrot.slane %v621, %v637
    %v639 = vlaneseq
    %v640 = vshrl.u32 %v639, 7
    %v641 = vsub.s32 4, %v640
    %v642 = vrot.slane %v621, %v641
    %v643 = vlaneseq
    %v644 = vshrl.u32 %v643, 7
    %v645 = vsub.s32 5, %v644
    %v646 = vrot.slane %v621, %v645
    %v647 = vlaneseq
    %v648 = vshrl.u32 %v647, 7
    %v649 = vsub.s32 6, %v648
    %v650 = vrot.slane %v621, %v649
    %v666 = vunpack.c.l.b16 %v165
    %v667 = vunpack.c.h.b16 %v165
    %v668 = vunpack.c.l.b16 %v166
    %v669 = vunpack.c.h.b16 %v166
    %v670 = vunpack.c.l.b16 %v167
    %v671 = vunpack.c.h.b16 %v167
    %v672 = vunpack.c.l.b16 %v168
    %v673 = vunpack.c.l.b16 %v169
    %v674 = vunpack.c.h.b16 %v169
    %v675 = vunpack.c.l.b16 %v170
    %v676 = vunpack.c.h.b16 %v170
    %v677 = vunpack.c.l.b16 %v171
    %v678 = vunpack.c.h.b16 %v171
    %v679 = vunpack.c.l.b16 %v172
    %v680 = vpack.c.b16 %v673, %v666
    %v681 = vpack.c.b16 %v674, %v667
    %v682 = vpack.c.b16 %v675, %v668
    %v683 = vpack.c.b16 %v676, %v669
    %v684 = vpack.c.b16 %v677, %v670
    %v685 = vpack.c.b16 %v678, %v671
    %v686 = vpack.c.b16 %v679, %v672
    %v1142 = vunpack.c.l.b16 %v173
    %v1143 = vunpack.c.h.b16 %v173
    %v1144 = vunpack.c.l.b16 %v174
    %v1145 = vunpack.c.h.b16 %v174
    %v1146 = vunpack.c.l.b16 %v175
    %v1147 = vunpack.c.h.b16 %v175
    %v1148 = vunpack.c.l.b16 %v176
    %v1149 = vunpack.c.l.b16 %v177
    %v1150 = vunpack.c.h.b16 %v177
    %v1151 = vunpack.c.l.b16 %v178
    %v1152 = vunpack.c.h.b16 %v178
    %v1153 = vunpack.c.l.b16 %v179
    %v1154 = vunpack.c.h.b16 %v179
    %v1155 = vunpack.c.l.b16 %v180
    %v1156 = vunpack.c.l.b16 %v181
    %v1157 = vunpack.c.h.b16 %v181
    %v1158 = vunpack.c.l.b16 %v182
    %v1159 = vunpack.c.h.b16 %v182
    %v1160 = vunpack.c.l.b16 %v183
    %v1161 = vunpack.c.h.b16 %v183
    %v1162 = vunpack.c.l.b16 %v184
    %v1163 = vunpack.c.l.b16 %v185
    %v1164 = vunpack.c.h.b16 %v185
    %v1165 = vunpack.c.l.b16 %v186
    %v1166 = vunpack.c.h.b16 %v186
    %v1167 = vunpack.c.l.b16 %v187
    %v1168 = vunpack.c.h.b16 %v187
    %v1169 = vunpack.c.l.b16 %v188
    %v1170 = vunpack.c.l.b16 %v189
    %v1171 = vunpack.c.h.b16 %v189
    %v1172 = vunpack.c.l.b16 %v190
    %v1173 = vunpack.c.h.b16 %v190
    %v1174 = vunpack.c.l.b16 %v191
    %v1175 = vunpack.c.h.b16 %v191
    %v1176 = vunpack.c.l.b16 %v192
    %v1177 = vunpack.c.l.b16 %v193
    %v1178 = vunpack.c.h.b16 %v193
    %v1179 = vunpack.c.l.b16 %v194
    %v1180 = vunpack.c.h.b16 %v194
    %v1181 = vunpack.c.l.b16 %v195
    %v1182 = vunpack.c.h.b16 %v195
    %v1183 = vunpack.c.l.b16 %v196
    %v1184 = vunpack.c.l.b16 %v197
    %v1185 = vunpack.c.h.b16 %v197
    %v1186 = vunpack.c.l.b16 %v198
    %v1187 = vunpack.c.h.b16 %v198
    %v1188 = vunpack.c.l.b16 %v199
    %v1189 = vunpack.c.h.b16 %v199
    %v1190 = vunpack.c.l.b16 %v200
    %v1191 = vunpack.c.l.b16 %v201
    %v1192 = vunpack.c.h.b16 %v201
    %v1193 = vunpack.c.l.b16 %v202
    %v1194 = vunpack.c.h.b16 %v202
    %v1195 = vunpack.c.l.b16 %v203
    %v1196 = vunpack.c.h.b16 %v203
    %v1197 = vunpack.c.l.b16 %v204
    %v1198 = vunpack.c.l.b16 %v205
    %v1199 = vunpack.c.h.b16 %v205
    %v1200 = vunpack.c.l.b16 %v206
    %v1201 = vunpack.c.h.b16 %v206
    %v1202 = vunpack.c.l.b16 %v207
    %v1203 = vunpack.c.h.b16 %v207
    %v1204 = vunpack.c.l.b16 %v208
    %v1205 = vunpack.c.l.b16 %v209
    %v1206 = vunpack.c.h.b16 %v209
    %v1207 = vunpack.c.l.b16 %v210
    %v1208 = vunpack.c.h.b16 %v210
    %v1209 = vunpack.c.l.b16 %v211
    %v1210 = vunpack.c.h.b16 %v211
    %v1211 = vunpack.c.l.b16 %v212
    %v1212 = vunpack.c.l.b16 %v213
    %v1213 = vunpack.c.h.b16 %v213
    %v1214 = vunpack.c.l.b16 %v214
    %v1215 = vunpack.c.h.b16 %v214
    %v1216 = vunpack.c.l.b16 %v215
    %v1217 = vunpack.c.h.b16 %v215
    %v1218 = vunpack.c.l.b16 %v216
    %v1219 = vunpack.c.l.b16 %v217
    %v1220 = vunpack.c.h.b16 %v217
    %v1221 = vunpack.c.l.b16 %v218
    %v1222 = vunpack.c.h.b16 %v218
    %v1223 = vunpack.c.l.b16 %v219
    %v1224 = vunpack.c.h.b16 %v219
    %v1225 = vunpack.c.l.b16 %v220
    %v1226 = vunpack.c.l.b16 %v221
    %v1227 = vunpack.c.h.b16 %v221
    %v1228 = vunpack.c.l.b16 %v222
    %v1229 = vunpack.c.h.b16 %v222
    %v1230 = vunpack.c.l.b16 %v223
    %v1231 = vunpack.c.h.b16 %v223
    %v1232 = vunpack.c.l.b16 %v224
    %v1233 = vunpack.c.l.b16 %v225
    %v1234 = vunpack.c.h.b16 %v225
    %v1235 = vunpack.c.l.b16 %v226
    %v1236 = vunpack.c.h.b16 %v226
    %v1237 = vunpack.c.l.b16 %v227
    %v1238 = vunpack.c.h.b16 %v227
    %v1239 = vunpack.c.l.b16 %v228
    %v1240 = vunpack.c.l.b16 %v229
    %v1241 = vunpack.c.h.b16 %v229
    %v1242 = vunpack.c.l.b16 %v230
    %v1243 = vunpack.c.h.b16 %v230
    %v1244 = vunpack.c.l.b16 %v231
    %v1245 = vunpack.c.h.b16 %v231
    %v1246 = vunpack.c.l.b16 %v232
    %v1247 = vunpack.c.l.b16 %v233
    %v1248 = vunpack.c.h.b16 %v233
    %v1249 = vunpack.c.l.b16 %v234
    %v1250 = vunpack.c.h.b16 %v234
    %v1251 = vunpack.c.l.b16 %v235
    %v1252 = vunpack.c.h.b16 %v235
    %v1253 = vunpack.c.l.b16 %v236
    %v1254 = vunpack.c.l.b16 %v237
    %v1255 = vunpack.c.h.b16 %v237
    %v1256 = vunpack.c.l.b16 %v238
    %v1257 = vunpack.c.h.b16 %v238
    %v1258 = vunpack.c.l.b16 %v239
    %v1259 = vunpack.c.h.b16 %v239
    %v1260 = vunpack.c.l.b16 %v240
    %v1261 = vunpack.c.l.b16 %v241
    %v1262 = vunpack.c.h.b16 %v241
    %v1263 = vunpack.c.l.b16 %v242
    %v1264 = vunpack.c.h.b16 %v242
    %v1265 = vunpack.c.l.b16 %v243
    %v1266 = vunpack.c.h.b16 %v243
    %v1267 = vunpack.c.l.b16 %v244
    %v1268 = vunpack.c.l.b16 %v245
    %v1269 = vunpack.c.h.b16 %v245
    %v1270 = vunpack.c.l.b16 %v246
    %v1271 = vunpack.c.h.b16 %v246
    %v1272 = vunpack.c.l.b16 %v247
    %v1273 = vunpack.c.h.b16 %v247
    %v1274 = vunpack.c.l.b16 %v248
    %v1275 = vunpack.c.l.b16 %v249
    %v1276 = vunpack.c.h.b16 %v249
    %v1277 = vunpack.c.l.b16 %v250
    %v1278 = vunpack.c.h.b16 %v250
    %v1279 = vunpack.c.l.b16 %v251
    %v1280 = vunpack.c.h.b16 %v251
    %v1281 = vunpack.c.l.b16 %v252
    %v1282 = vunpack.c.l.b16 %v253
    %v1283 = vunpack.c.h.b16 %v253
    %v1284 = vunpack.c.l.b16 %v254
    %v1285 = vunpack.c.h.b16 %v254
    %v1286 = vunpack.c.l.b16 %v255
    %v1287 = vunpack.c.h.b16 %v255
    %v1288 = vunpack.c.l.b16 %v256
    %v1289 = vunpack.c.l.b16 %v257
    %v1290 = vunpack.c.h.b16 %v257
    %v1291 = vunpack.c.l.b16 %v258
    %v1292 = vunpack.c.h.b16 %v258
    %v1293 = vunpack.c.l.b16 %v259
    %v1294 = vunpack.c.h.b16 %v259
    %v1295 = vunpack.c.l.b16 %v260
    %v1296 = vunpack.c.l.b16 %v261
    %v1297 = vunpack.c.h.b16 %v261
    %v1298 = vunpack.c.l.b16 %v262
    %v1299 = vunpack.c.h.b16 %v262
    %v1300 = vunpack.c.l.b16 %v263
    %v1301 = vunpack.c.h.b16 %v263
    %v1302 = vunpack.c.l.b16 %v264
    %v1303 = vunpack.c.l.b16 %v265
    %v1304 = vunpack.c.h.b16 %v265
    %v1305 = vunpack.c.l.b16 %v266
    %v1306 = vunpack.c.h.b16 %v266
    %v1307 = vunpack.c.l.b16 %v267
    %v1308 = vunpack.c.h.b16 %v267
    %v1309 = vunpack.c.l.b16 %v268
    %v1310 = vunpack.c.l.b16 %v269
    %v1311 = vunpack.c.h.b16 %v269
    %v1312 = vunpack.c.l.b16 %v270
    %v1313 = vunpack.c.h.b16 %v270
    %v1314 = vunpack.c.l.b16 %v271
    %v1315 = vunpack.c.h.b16 %v271
    %v1316 = vunpack.c.l.b16 %v272
    %v1317 = vunpack.c.l.b16 %v273
    %v1318 = vunpack.c.h.b16 %v273
    %v1319 = vunpack.c.l.b16 %v274
    %v1320 = vunpack.c.h.b16 %v274
    %v1321 = vunpack.c.l.b16 %v275
    %v1322 = vunpack.c.h.b16 %v275
    %v1323 = vunpack.c.l.b16 %v276
    %v1324 = vunpack.c.l.b16 %v277
    %v1325 = vunpack.c.h.b16 %v277
    %v1326 = vunpack.c.l.b16 %v278
    %v1327 = vunpack.c.h.b16 %v278
    %v1328 = vunpack.c.l.b16 %v279
    %v1329 = vunpack.c.h.b16 %v279
    %v1330 = vunpack.c.l.b16 %v280
    %v1331 = vunpack.c.l.b16 %v281
    %v1332 = vunpack.c.h.b16 %v281
    %v1333 = vunpack.c.l.b16 %v282
    %v1334 = vunpack.c.h.b16 %v282
    %v1335 = vunpack.c.l.b16 %v283
    %v1336 = vunpack.c.h.b16 %v283
    %v1337 = vunpack.c.l.b16 %v284
    %v1338 = vunpack.c.l.b16 %v285
    %v1339 = vunpack.c.h.b16 %v285
    %v1340 = vunpack.c.l.b16 %v286
    %v1341 = vunpack.c.h.b16 %v286
    %v1342 = vunpack.c.l.b16 %v287
    %v1343 = vunpack.c.h.b16 %v287
    %v1344 = vunpack.c.l.b16 %v288
    %v1345 = vunpack.c.l.b16 %v289
    %v1346 = vunpack.c.h.b16 %v289
    %v1347 = vunpack.c.l.b16 %v290
    %v1348 = vunpack.c.h.b16 %v290
    %v1349 = vunpack.c.l.b16 %v291
    %v1350 = vunpack.c.h.b16 %v291
    %v1351 = vunpack.c.l.b16 %v292
    %v1352 = vunpack.c.l.b16 %v293
    %v1353 = vunpack.c.h.b16 %v293
    %v1354 = vunpack.c.l.b16 %v294
    %v1355 = vunpack.c.h.b16 %v294
    %v1356 = vunpack.c.l.b16 %v295
    %v1357 = vunpack.c.h.b16 %v295
    %v1358 = vunpack.c.l.b16 %v296
    %v1359 = vunpack.c.l.b16 %v297
    %v1360 = vunpack.c.h.b16 %v297
    %v1361 = vunpack.c.l.b16 %v298
    %v1362 = vunpack.c.h.b16 %v298
    %v1363 = vunpack.c.l.b16 %v299
    %v1364 = vunpack.c.h.b16 %v299
    %v1365 = vunpack.c.l.b16 %v300
    %v1366 = vunpack.c.l.b16 %v301
    %v1367 = vunpack.c.h.b16 %v301
    %v1368 = vunpack.c.l.b16 %v302
    %v1369 = vunpack.c.h.b16 %v302
    %v1370 = vunpack.c.l.b16 %v303
    %v1371 = vunpack.c.h.b16 %v303
    %v1372 = vunpack.c.l.b16 %v304
    %v1373 = vunpack.c.l.b16 %v305
    %v1374 = vunpack.c.h.b16 %v305
    %v1375 = vunpack.c.l.b16 %v306
    %v1376 = vunpack.c.h.b16 %v306
    %v1377 = vunpack.c.l.b16 %v307
    %v1378 = vunpack.c.h.b16 %v307
    %v1379 = vunpack.c.l.b16 %v308
    %v1380 = vunpack.c.l.b16 %v309
    %v1381 = vunpack.c.h.b16 %v309
    %v1382 = vunpack.c.l.b16 %v310
    %v1383 = vunpack.c.h.b16 %v310
    %v1384 = vunpack.c.l.b16 %v311
    %v1385 = vunpack.c.h.b16 %v311
    %v1386 = vunpack.c.l.b16 %v312
    %v1387 = vunpack.c.l.b16 %v313
    %v1388 = vunpack.c.h.b16 %v313
    %v1389 = vunpack.c.l.b16 %v314
    %v1390 = vunpack.c.h.b16 %v314
    %v1391 = vunpack.c.l.b16 %v315
    %v1392 = vunpack.c.h.b16 %v315
    %v1393 = vunpack.c.l.b16 %v316
    %v1394 = vunpack.c.l.b16 %v317
    %v1395 = vunpack.c.h.b16 %v317
    %v1396 = vunpack.c.l.b16 %v318
    %v1397 = vunpack.c.h.b16 %v318
    %v1398 = vunpack.c.l.b16 %v319
    %v1399 = vunpack.c.h.b16 %v319
    %v1400 = vunpack.c.l.b16 %v320
    %v1401 = vunpack.c.l.b16 %v321
    %v1402 = vunpack.c.h.b16 %v321
    %v1403 = vunpack.c.l.b16 %v322
    %v1404 = vunpack.c.h.b16 %v322
    %v1405 = vunpack.c.l.b16 %v323
    %v1406 = vunpack.c.h.b16 %v323
    %v1407 = vunpack.c.l.b16 %v324
    %v1408 = vunpack.c.l.b16 %v325
    %v1409 = vunpack.c.h.b16 %v325
    %v1410 = vunpack.c.l.b16 %v326
    %v1411 = vunpack.c.h.b16 %v326
    %v1412 = vunpack.c.l.b16 %v327
    %v1413 = vunpack.c.h.b16 %v327
    %v1414 = vunpack.c.l.b16 %v328
    %v1415 = vunpack.c.l.b16 %v329
    %v1416 = vunpack.c.h.b16 %v329
    %v1417 = vunpack.c.l.b16 %v330
    %v1418 = vunpack.c.h.b16 %v330
    %v1419 = vunpack.c.l.b16 %v331
    %v1420 = vunpack.c.h.b16 %v331
    %v1421 = vunpack.c.l.b16 %v332
    %v1422 = vunpack.c.l.b16 %v333
    %v1423 = vunpack.c.h.b16 %v333
    %v1424 = vunpack.c.l.b16 %v334
    %v1425 = vunpack.c.h.b16 %v334
    %v1426 = vunpack.c.l.b16 %v335
    %v1427 = vunpack.c.h.b16 %v335
    %v1428 = vunpack.c.l.b16 %v336
    %v1429 = vunpack.c.l.b16 %v337
    %v1430 = vunpack.c.h.b16 %v337
    %v1431 = vunpack.c.l.b16 %v338
    %v1432 = vunpack.c.h.b16 %v338
    %v1433 = vunpack.c.l.b16 %v339
    %v1434 = vunpack.c.h.b16 %v339
    %v1435 = vunpack.c.l.b16 %v340
    %v1436 = vunpack.c.l.b16 %v341
    %v1437 = vunpack.c.h.b16 %v341
    %v1438 = vunpack.c.l.b16 %v342
    %v1439 = vunpack.c.h.b16 %v342
    %v1440 = vunpack.c.l.b16 %v343
    %v1441 = vunpack.c.h.b16 %v343
    %v1442 = vunpack.c.l.b16 %v344
    %v1443 = vunpack.c.l.b16 %v345
    %v1444 = vunpack.c.h.b16 %v345
    %v1445 = vunpack.c.l.b16 %v346
    %v1446 = vunpack.c.h.b16 %v346
    %v1447 = vunpack.c.l.b16 %v347
    %v1448 = vunpack.c.h.b16 %v347
    %v1449 = vunpack.c.l.b16 %v348
    %v1450 = vunpack.c.l.b16 %v349
    %v1451 = vunpack.c.h.b16 %v349
    %v1452 = vunpack.c.l.b16 %v350
    %v1453 = vunpack.c.h.b16 %v350
    %v1454 = vunpack.c.l.b16 %v351
    %v1455 = vunpack.c.h.b16 %v351
    %v1456 = vunpack.c.l.b16 %v352
    %v1457 = vunpack.c.l.b16 %v353
    %v1458 = vunpack.c.h.b16 %v353
    %v1459 = vunpack.c.l.b16 %v354
    %v1460 = vunpack.c.h.b16 %v354
    %v1461 = vunpack.c.l.b16 %v355
    %v1462 = vunpack.c.h.b16 %v355
    %v1463 = vunpack.c.l.b16 %v356
    %v1464 = vunpack.c.l.b16 %v357
    %v1465 = vunpack.c.h.b16 %v357
    %v1466 = vunpack.c.l.b16 %v358
    %v1467 = vunpack.c.h.b16 %v358
    %v1468 = vunpack.c.l.b16 %v359
    %v1469 = vunpack.c.h.b16 %v359
    %v1470 = vunpack.c.l.b16 %v360
    %v1471 = vunpack.c.l.b16 %v361
    %v1472 = vunpack.c.h.b16 %v361
    %v1473 = vunpack.c.l.b16 %v362
    %v1474 = vunpack.c.h.b16 %v362
    %v1475 = vunpack.c.l.b16 %v363
    %v1476 = vunpack.c.h.b16 %v363
    %v1477 = vunpack.c.l.b16 %v364
    %v1478 = vunpack.c.l.b16 %v365
    %v1479 = vunpack.c.h.b16 %v365
    %v1480 = vunpack.c.l.b16 %v366
    %v1481 = vunpack.c.h.b16 %v366
    %v1482 = vunpack.c.l.b16 %v367
    %v1483 = vunpack.c.h.b16 %v367
    %v1484 = vunpack.c.l.b16 %v368
    %v1485 = vunpack.c.l.b16 %v369
    %v1486 = vunpack.c.h.b16 %v369
    %v1487 = vunpack.c.l.b16 %v370
    %v1488 = vunpack.c.h.b16 %v370
    %v1489 = vunpack.c.l.b16 %v371
    %v1490 = vunpack.c.h.b16 %v371
    %v1491 = vunpack.c.l.b16 %v372
    %v1492 = vunpack.c.l.b16 %v373
    %v1493 = vunpack.c.h.b16 %v373
    %v1494 = vunpack.c.l.b16 %v374
    %v1495 = vunpack.c.h.b16 %v374
    %v1496 = vunpack.c.l.b16 %v375
    %v1497 = vunpack.c.h.b16 %v375
    %v1498 = vunpack.c.l.b16 %v376
    %v1499 = vunpack.c.l.b16 %v377
    %v1500 = vunpack.c.h.b16 %v377
    %v1501 = vunpack.c.l.b16 %v378
    %v1502 = vunpack.c.h.b16 %v378
    %v1503 = vunpack.c.l.b16 %v379
    %v1504 = vunpack.c.h.b16 %v379
    %v1505 = vunpack.c.l.b16 %v380
    %v1506 = vunpack.c.l.b16 %v381
    %v1507 = vunpack.c.h.b16 %v381
    %v1508 = vunpack.c.l.b16 %v382
    %v1509 = vunpack.c.h.b16 %v382
    %v1510 = vunpack.c.l.b16 %v383
    %v1511 = vunpack.c.h.b16 %v383
    %v1512 = vunpack.c.l.b16 %v384
    %v1513 = vunpack.c.l.b16 %v385
    %v1514 = vunpack.c.h.b16 %v385
    %v1515 = vunpack.c.l.b16 %v386
    %v1516 = vunpack.c.h.b16 %v386
    %v1517 = vunpack.c.l.b16 %v387
    %v1518 = vunpack.c.h.b16 %v387
    %v1519 = vunpack.c.l.b16 %v388
    %v1520 = vunpack.c.l.b16 %v389
    %v1521 = vunpack.c.h.b16 %v389
    %v1522 = vunpack.c.l.b16 %v390
    %v1523 = vunpack.c.h.b16 %v390
    %v1524 = vunpack.c.l.b16 %v391
    %v1525 = vunpack.c.h.b16 %v391
    %v1526 = vunpack.c.l.b16 %v392
    %v1527 = vunpack.c.l.b16 %v393
    %v1528 = vunpack.c.h.b16 %v393
    %v1529 = vunpack.c.l.b16 %v394
    %v1530 = vunpack.c.h.b16 %v394
    %v1531 = vunpack.c.l.b16 %v395
    %v1532 = vunpack.c.h.b16 %v395
    %v1533 = vunpack.c.l.b16 %v396
    %v1534 = vunpack.c.l.b16 %v397
    %v1535 = vunpack.c.h.b16 %v397
    %v1536 = vunpack.c.l.b16 %v398
    %v1537 = vunpack.c.h.b16 %v398
    %v1538 = vunpack.c.l.b16 %v399
    %v1539 = vunpack.c.h.b16 %v399
    %v1540 = vunpack.c.l.b16 %v400
    %v1541 = vunpack.c.l.b16 %v401
    %v1542 = vunpack.c.h.b16 %v401
    %v1543 = vunpack.c.l.b16 %v402
    %v1544 = vunpack.c.h.b16 %v402
    %v1545 = vunpack.c.l.b16 %v403
    %v1546 = vunpack.c.h.b16 %v403
    %v1547 = vunpack.c.l.b16 %v404
    %v1548 = vunpack.c.l.b16 %v405
    %v1549 = vunpack.c.h.b16 %v405
    %v1550 = vunpack.c.l.b16 %v406
    %v1551 = vunpack.c.h.b16 %v406
    %v1552 = vunpack.c.l.b16 %v407
    %v1553 = vunpack.c.h.b16 %v407
    %v1554 = vunpack.c.l.b16 %v408
    %v1555 = vunpack.c.l.b16 %v409
    %v1556 = vunpack.c.h.b16 %v409
    %v1557 = vunpack.c.l.b16 %v410
    %v1558 = vunpack.c.h.b16 %v410
    %v1559 = vunpack.c.l.b16 %v411
    %v1560 = vunpack.c.h.b16 %v411
    %v1561 = vunpack.c.l.b16 %v412
    %v1562 = vunpack.c.l.b16 %v413
    %v1563 = vunpack.c.h.b16 %v413
    %v1564 = vunpack.c.l.b16 %v414
    %v1565 = vunpack.c.h.b16 %v414
    %v1566 = vunpack.c.l.b16 %v415
    %v1567 = vunpack.c.h.b16 %v415
    %v1568 = vunpack.c.l.b16 %v416
    %v1569 = vunpack.c.l.b16 %v417
    %v1570 = vunpack.c.h.b16 %v417
    %v1571 = vunpack.c.l.b16 %v418
    %v1572 = vunpack.c.h.b16 %v418
    %v1573 = vunpack.c.l.b16 %v419
    %v1574 = vunpack.c.h.b16 %v419
    %v1575 = vunpack.c.l.b16 %v420
    %v1576 = vunpack.c.l.b16 %v421
    %v1577 = vunpack.c.h.b16 %v421
    %v1578 = vunpack.c.l.b16 %v422
    %v1579 = vunpack.c.h.b16 %v422
    %v1580 = vunpack.c.l.b16 %v423
    %v1581 = vunpack.c.h.b16 %v423
    %v1582 = vunpack.c.l.b16 %v424
    %v1583 = vunpack.c.l.b16 %v425
    %v1584 = vunpack.c.h.b16 %v425
    %v1585 = vunpack.c.l.b16 %v426
    %v1586 = vunpack.c.h.b16 %v426
    %v1587 = vunpack.c.l.b16 %v427
    %v1588 = vunpack.c.h.b16 %v427
    %v1589 = vunpack.c.l.b16 %v428
    %v1590 = vunpack.c.l.b16 %v429
    %v1591 = vunpack.c.h.b16 %v429
    %v1592 = vunpack.c.l.b16 %v430
    %v1593 = vunpack.c.h.b16 %v430
    %v1594 = vunpack.c.l.b16 %v431
    %v1595 = vunpack.c.h.b16 %v431
    %v1596 = vunpack.c.l.b16 %v432
    %v1597 = vunpack.c.l.b16 %v433
    %v1598 = vunpack.c.h.b16 %v433
    %v1599 = vunpack.c.l.b16 %v434
    %v1600 = vunpack.c.h.b16 %v434
    %v1601 = vunpack.c.l.b16 %v435
    %v1602 = vunpack.c.h.b16 %v435
    %v1603 = vunpack.c.l.b16 %v436
    %v1604 = vunpack.c.l.b16 %v437
    %v1605 = vunpack.c.h.b16 %v437
    %v1606 = vunpack.c.l.b16 %v438
    %v1607 = vunpack.c.h.b16 %v438
    %v1608 = vunpack.c.l.b16 %v439
    %v1609 = vunpack.c.h.b16 %v439
    %v1610 = vunpack.c.l.b16 %v440
    %v1611 = vunpack.c.l.b16 %v441
    %v1612 = vunpack.c.h.b16 %v441
    %v1613 = vunpack.c.l.b16 %v442
    %v1614 = vunpack.c.h.b16 %v442
    %v1615 = vunpack.c.l.b16 %v443
    %v1616 = vunpack.c.h.b16 %v443
    %v1617 = vunpack.c.l.b16 %v444
    %v1618 = vunpack.c.l.b16 %v445
    %v1619 = vunpack.c.h.b16 %v445
    %v1620 = vunpack.c.l.b16 %v446
    %v1621 = vunpack.c.h.b16 %v446
    %v1622 = vunpack.c.l.b16 %v447
    %v1623 = vunpack.c.h.b16 %v447
    %v1624 = vunpack.c.l.b16 %v448
    %v1625 = vunpack.c.l.b16 %v449
    %v1626 = vunpack.c.h.b16 %v449
    %v1627 = vunpack.c.l.b16 %v450
    %v1628 = vunpack.c.h.b16 %v450
    %v1629 = vunpack.c.l.b16 %v451
    %v1630 = vunpack.c.h.b16 %v451
    %v1631 = vunpack.c.l.b16 %v452
    %v1632 = vunpack.c.l.b16 %v453
    %v1633 = vunpack.c.h.b16 %v453
    %v1634 = vunpack.c.l.b16 %v454
    %v1635 = vunpack.c.h.b16 %v454
    %v1636 = vunpack.c.l.b16 %v455
    %v1637 = vunpack.c.h.b16 %v455
    %v1638 = vunpack.c.l.b16 %v456
    %v1639 = vunpack.c.l.b16 %v457
    %v1640 = vunpack.c.h.b16 %v457
    %v1641 = vunpack.c.l.b16 %v458
    %v1642 = vunpack.c.h.b16 %v458
    %v1643 = vunpack.c.l.b16 %v459
    %v1644 = vunpack.c.h.b16 %v459
    %v1645 = vunpack.c.l.b16 %v460
    %v1646 = vunpack.c.l.b16 %v461
    %v1647 = vunpack.c.h.b16 %v461
    %v1648 = vunpack.c.l.b16 %v462
    %v1649 = vunpack.c.h.b16 %v462
    %v1650 = vunpack.c.l.b16 %v463
    %v1651 = vunpack.c.h.b16 %v463
    %v1652 = vunpack.c.l.b16 %v464
    %v1653 = vunpack.c.l.b16 %v465
    %v1654 = vunpack.c.h.b16 %v465
    %v1655 = vunpack.c.l.b16 %v466
    %v1656 = vunpack.c.h.b16 %v466
    %v1657 = vunpack.c.l.b16 %v467
    %v1658 = vunpack.c.h.b16 %v467
    %v1659 = vunpack.c.l.b16 %v468
    %v1660 = vunpack.c.l.b16 %v469
    %v1661 = vunpack.c.h.b16 %v469
    %v1662 = vunpack.c.l.b16 %v470
    %v1663 = vunpack.c.h.b16 %v470
    %v1664 = vunpack.c.l.b16 %v471
    %v1665 = vunpack.c.h.b16 %v471
    %v1666 = vunpack.c.l.b16 %v472
    %v1667 = vunpack.c.l.b16 %v473
    %v1668 = vunpack.c.h.b16 %v473
    %v1669 = vunpack.c.l.b16 %v474
    %v1670 = vunpack.c.h.b16 %v474
    %v1671 = vunpack.c.l.b16 %v475
    %v1672 = vunpack.c.h.b16 %v475
    %v1673 = vunpack.c.l.b16 %v476
    %v1674 = vunpack.c.l.b16 %v477
    %v1675 = vunpack.c.h.b16 %v477
    %v1676 = vunpack.c.l.b16 %v478
    %v1677 = vunpack.c.h.b16 %v478
    %v1678 = vunpack.c.l.b16 %v479
    %v1679 = vunpack.c.h.b16 %v479
    %v1680 = vunpack.c.l.b16 %v480
    %v1681 = vunpack.c.l.b16 %v481
    %v1682 = vunpack.c.h.b16 %v481
    %v1683 = vunpack.c.l.b16 %v482
    %v1684 = vunpack.c.h.b16 %v482
    %v1685 = vunpack.c.l.b16 %v483
    %v1686 = vunpack.c.h.b16 %v483
    %v1687 = vunpack.c.l.b16 %v484
    %v1688 = vunpack.c.l.b16 %v485
    %v1689 = vunpack.c.h.b16 %v485
    %v1690 = vunpack.c.l.b16 %v486
    %v1691 = vunpack.c.h.b16 %v486
    %v1692 = vunpack.c.l.b16 %v487
    %v1693 = vunpack.c.h.b16 %v487
    %v1694 = vunpack.c.l.b16 %v488
    %v1695 = vunpack.c.l.b16 %v489
    %v1696 = vunpack.c.h.b16 %v489
    %v1697 = vunpack.c.l.b16 %v490
    %v1698 = vunpack.c.h.b16 %v490
    %v1699 = vunpack.c.l.b16 %v491
    %v1700 = vunpack.c.h.b16 %v491
    %v1701 = vunpack.c.l.b16 %v492
    %v1702 = vunpack.c.l.b16 %v493
    %v1703 = vunpack.c.h.b16 %v493
    %v1704 = vunpack.c.l.b16 %v494
    %v1705 = vunpack.c.h.b16 %v494
    %v1706 = vunpack.c.l.b16 %v495
    %v1707 = vunpack.c.h.b16 %v495
    %v1708 = vunpack.c.l.b16 %v496
    %v1709 = vunpack.c.l.b16 %v497
    %v1710 = vunpack.c.h.b16 %v497
    %v1711 = vunpack.c.l.b16 %v498
    %v1712 = vunpack.c.h.b16 %v498
    %v1713 = vunpack.c.l.b16 %v499
    %v1714 = vunpack.c.h.b16 %v499
    %v1715 = vunpack.c.l.b16 %v500
    %v1716 = vunpack.c.l.b16 %v501
    %v1717 = vunpack.c.h.b16 %v501
    %v1718 = vunpack.c.l.b16 %v502
    %v1719 = vunpack.c.h.b16 %v502
    %v1720 = vunpack.c.l.b16 %v503
    %v1721 = vunpack.c.h.b16 %v503
    %v1722 = vunpack.c.l.b16 %v504
    %v1723 = vunpack.c.l.b16 %v505
    %v1724 = vunpack.c.h.b16 %v505
    %v1725 = vunpack.c.l.b16 %v506
    %v1726 = vunpack.c.h.b16 %v506
    %v1727 = vunpack.c.l.b16 %v507
    %v1728 = vunpack.c.h.b16 %v507
    %v1729 = vunpack.c.l.b16 %v508
    %v1730 = vunpack.c.l.b16 %v509
    %v1731 = vunpack.c.h.b16 %v509
    %v1732 = vunpack.c.l.b16 %v510
    %v1733 = vunpack.c.h.b16 %v510
    %v1734 = vunpack.c.l.b16 %v511
    %v1735 = vunpack.c.h.b16 %v511
    %v1736 = vunpack.c.l.b16 %v512
    %v1737 = vunpack.c.l.b16 %v513
    %v1738 = vunpack.c.h.b16 %v513
    %v1739 = vunpack.c.l.b16 %v514
    %v1740 = vunpack.c.h.b16 %v514
    %v1741 = vunpack.c.l.b16 %v515
    %v1742 = vunpack.c.h.b16 %v515
    %v1743 = vunpack.c.l.b16 %v516
    %v1744 = vunpack.c.l.b16 %v517
    %v1745 = vunpack.c.h.b16 %v517
    %v1746 = vunpack.c.l.b16 %v518
    %v1747 = vunpack.c.h.b16 %v518
    %v1748 = vunpack.c.l.b16 %v519
    %v1749 = vunpack.c.h.b16 %v519
    %v1750 = vunpack.c.l.b16 %v520
    %v1751 = vunpack.c.l.b16 %v521
    %v1752 = vunpack.c.h.b16 %v521
    %v1753 = vunpack.c.l.b16 %v522
    %v1754 = vunpack.c.h.b16 %v522
    %v1755 = vunpack.c.l.b16 %v523
    %v1756 = vunpack.c.h.b16 %v523
    %v1757 = vunpack.c.l.b16 %v524
    %v1758 = vunpack.c.l.b16 %v525
    %v1759 = vunpack.c.h.b16 %v525
    %v1760 = vunpack.c.l.b16 %v526
    %v1761 = vunpack.c.h.b16 %v526
    %v1762 = vunpack.c.l.b16 %v527
    %v1763 = vunpack.c.h.b16 %v527
    %v1764 = vunpack.c.l.b16 %v528
    %v1765 = vunpack.c.l.b16 %v529
    %v1766 = vunpack.c.h.b16 %v529
    %v1767 = vunpack.c.l.b16 %v530
    %v1768 = vunpack.c.h.b16 %v530
    %v1769 = vunpack.c.l.b16 %v531
    %v1770 = vunpack.c.h.b16 %v531
    %v1771 = vunpack.c.l.b16 %v532
    %v1772 = vunpack.c.l.b16 %v533
    %v1773 = vunpack.c.h.b16 %v533
    %v1774 = vunpack.c.l.b16 %v534
    %v1775 = vunpack.c.h.b16 %v534
    %v1776 = vunpack.c.l.b16 %v535
    %v1777 = vunpack.c.h.b16 %v535
    %v1778 = vunpack.c.l.b16 %v536
    %v1779 = vunpack.c.l.b16 %v537
    %v1780 = vunpack.c.h.b16 %v537
    %v1781 = vunpack.c.l.b16 %v538
    %v1782 = vunpack.c.h.b16 %v538
    %v1783 = vunpack.c.l.b16 %v539
    %v1784 = vunpack.c.h.b16 %v539
    %v1785 = vunpack.c.l.b16 %v540
    %v1786 = vunpack.c.l.b16 %v541
    %v1787 = vunpack.c.h.b16 %v541
    %v1788 = vunpack.c.l.b16 %v542
    %v1789 = vunpack.c.h.b16 %v542
    %v1790 = vunpack.c.l.b16 %v543
    %v1791 = vunpack.c.h.b16 %v543
    %v1792 = vunpack.c.l.b16 %v544
    %v1793 = vunpack.c.l.b16 %v545
    %v1794 = vunpack.c.h.b16 %v545
    %v1795 = vunpack.c.l.b16 %v546
    %v1796 = vunpack.c.h.b16 %v546
    %v1797 = vunpack.c.l.b16 %v547
    %v1798 = vunpack.c.h.b16 %v547
    %v1799 = vunpack.c.l.b16 %v548
    %v1800 = vunpack.c.l.b16 %v549
    %v1801 = vunpack.c.h.b16 %v549
    %v1802 = vunpack.c.l.b16 %v550
    %v1803 = vunpack.c.h.b16 %v550
    %v1804 = vunpack.c.l.b16 %v551
    %v1805 = vunpack.c.h.b16 %v551
    %v1806 = vunpack.c.l.b16 %v552
    %v1807 = vunpack.c.l.b16 %v553
    %v1808 = vunpack.c.h.b16 %v553
    %v1809 = vunpack.c.l.b16 %v554
    %v1810 = vunpack.c.h.b16 %v554
    %v1811 = vunpack.c.l.b16 %v555
    %v1812 = vunpack.c.h.b16 %v555
    %v1813 = vunpack.c.l.b16 %v556
    %v1814 = vunpack.c.l.b16 %v557
    %v1815 = vunpack.c.h.b16 %v557
    %v1816 = vunpack.c.l.b16 %v558
    %v1817 = vunpack.c.h.b16 %v558
    %v1818 = vunpack.c.l.b16 %v559
    %v1819 = vunpack.c.h.b16 %v559
    %v1820 = vunpack.c.l.b16 %v560
    %v1821 = vunpack.c.l.b16 %v561
    %v1822 = vunpack.c.h.b16 %v561
    %v1823 = vunpack.c.l.b16 %v562
    %v1824 = vunpack.c.h.b16 %v562
    %v1825 = vunpack.c.l.b16 %v563
    %v1826 = vunpack.c.h.b16 %v563
    %v1827 = vunpack.c.l.b16 %v564
    %v1828 = vunpack.c.l.b16 %v565
    %v1829 = vunpack.c.h.b16 %v565
    %v1830 = vunpack.c.l.b16 %v566
    %v1831 = vunpack.c.h.b16 %v566
    %v1832 = vunpack.c.l.b16 %v567
    %v1833 = vunpack.c.h.b16 %v567
    %v1834 = vunpack.c.l.b16 %v568
    %v1835 = vunpack.c.l.b16 %v569
    %v1836 = vunpack.c.h.b16 %v569
    %v1837 = vunpack.c.l.b16 %v570
    %v1838 = vunpack.c.h.b16 %v570
    %v1839 = vunpack.c.l.b16 %v571
    %v1840 = vunpack.c.h.b16 %v571
    %v1841 = vunpack.c.l.b16 %v572
    %v1842 = vunpack.c.l.b16 %v573
    %v1843 = vunpack.c.h.b16 %v573
    %v1844 = vunpack.c.l.b16 %v574
    %v1845 = vunpack.c.h.b16 %v574
    %v1846 = vunpack.c.l.b16 %v575
    %v1847 = vunpack.c.h.b16 %v575
    %v1848 = vunpack.c.l.b16 %v576
    %v1849 = vunpack.c.l.b16 %v577
    %v1850 = vunpack.c.h.b16 %v577
    %v1851 = vunpack.c.l.b16 %v578
    %v1852 = vunpack.c.h.b16 %v578
    %v1853 = vunpack.c.l.b16 %v579
    %v1854 = vunpack.c.h.b16 %v579
    %v1855 = vunpack.c.l.b16 %v580
    %v1856 = vunpack.c.l.b16 %v581
    %v1857 = vunpack.c.h.b16 %v581
    %v1858 = vunpack.c.l.b16 %v582
    %v1859 = vunpack.c.h.b16 %v582
    %v1860 = vunpack.c.l.b16 %v583
    %v1861 = vunpack.c.h.b16 %v583
    %v1862 = vunpack.c.l.b16 %v584
    %v1863 = vunpack.c.l.b16 %v585
    %v1864 = vunpack.c.h.b16 %v585
    %v1865 = vunpack.c.l.b16 %v586
    %v1866 = vunpack.c.h.b16 %v586
    %v1867 = vunpack.c.l.b16 %v587
    %v1868 = vunpack.c.h.b16 %v587
    %v1869 = vunpack.c.l.b16 %v588
    %v1870 = vunpack.c.l.b16 %v589
    %v1871 = vunpack.c.h.b16 %v589
    %v1872 = vunpack.c.l.b16 %v590
    %v1873 = vunpack.c.h.b16 %v590
    %v1874 = vunpack.c.l.b16 %v591
    %v1875 = vunpack.c.h.b16 %v591
    %v1876 = vunpack.c.l.b16 %v592
    %v1877 = vunpack.c.l.b16 %v593
    %v1878 = vunpack.c.h.b16 %v593
    %v1879 = vunpack.c.l.b16 %v594
    %v1880 = vunpack.c.h.b16 %v594
    %v1881 = vunpack.c.l.b16 %v595
    %v1882 = vunpack.c.h.b16 %v595
    %v1883 = vunpack.c.l.b16 %v596
    %v1884 = vunpack.c.l.b16 %v597
    %v1885 = vunpack.c.h.b16 %v597
    %v1886 = vunpack.c.l.b16 %v598
    %v1887 = vunpack.c.h.b16 %v598
    %v1888 = vunpack.c.l.b16 %v599
    %v1889 = vunpack.c.h.b16 %v599
    %v1890 = vunpack.c.l.b16 %v600
    %v1891 = vunpack.c.l.b16 %v601
    %v1892 = vunpack.c.h.b16 %v601
    %v1893 = vunpack.c.l.b16 %v602
    %v1894 = vunpack.c.h.b16 %v602
    %v1895 = vunpack.c.l.b16 %v603
    %v1896 = vunpack.c.h.b16 %v603
    %v1897 = vunpack.c.l.b16 %v604
    %v1898 = vunpack.c.l.b16 %v605
    %v1899 = vunpack.c.h.b16 %v605
    %v1900 = vunpack.c.l.b16 %v606
    %v1901 = vunpack.c.h.b16 %v606
    %v1902 = vunpack.c.l.b16 %v607
    %v1903 = vunpack.c.h.b16 %v607
    %v1904 = vunpack.c.l.b16 %v608
    %v1905 = vunpack.c.l.b16 %v609
    %v1906 = vunpack.c.h.b16 %v609
    %v1907 = vunpack.c.l.b16 %v610
    %v1908 = vunpack.c.h.b16 %v610
    %v1909 = vunpack.c.l.b16 %v611
    %v1910 = vunpack.c.h.b16 %v611
    %v1911 = vunpack.c.l.b16 %v612
    %v1912 = vunpack.c.l.b16 %v613
    %v1913 = vunpack.c.h.b16 %v613
    %v1914 = vunpack.c.l.b16 %v614
    %v1915 = vunpack.c.h.b16 %v614
    %v1916 = vunpack.c.l.b16 %v615
    %v1917 = vunpack.c.h.b16 %v615
    %v1918 = vunpack.c.l.b16 %v616
    %v1919 = vunpack.c.l.b16 %v617
    %v1920 = vunpack.c.h.b16 %v617
    %v1921 = vunpack.c.l.b16 %v618
    %v1922 = vunpack.c.h.b16 %v618
    %v1923 = vunpack.c.l.b16 %v619
    %v1924 = vunpack.c.h.b16 %v619
    %v1925 = vunpack.c.l.b16 %v620
    %v1926 = vpack.c.b16 %v1149, %v1142
    %v1927 = vpack.c.b16 %v1150, %v1143
    %v1928 = vpack.c.b16 %v1151, %v1144
    %v1929 = vpack.c.b16 %v1152, %v1145
    %v1930 = vpack.c.b16 %v1153, %v1146
    %v1931 = vpack.c.b16 %v1154, %v1147
    %v1932 = vpack.c.b16 %v1155, %v1148
    %v1933 = vpack.c.b16 %v1163, %v1156
    %v1934 = vpack.c.b16 %v1164, %v1157
    %v1935 = vpack.c.b16 %v1165, %v1158
    %v1936 = vpack.c.b16 %v1166, %v1159
    %v1937 = vpack.c.b16 %v1167, %v1160
    %v1938 = vpack.c.b16 %v1168, %v1161
    %v1939 = vpack.c.b16 %v1169, %v1162
    %v1940 = vpack.c.b16 %v1177, %v1170
    %v1941 = vpack.c.b16 %v1178, %v1171
    %v1942 = vpack.c.b16 %v1179, %v1172
    %v1943 = vpack.c.b16 %v1180, %v1173
    %v1944 = vpack.c.b16 %v1181, %v1174
    %v1945 = vpack.c.b16 %v1182, %v1175
    %v1946 = vpack.c.b16 %v1183, %v1176
    %v1947 = vpack.c.b16 %v1191, %v1184
    %v1948 = vpack.c.b16 %v1192, %v1185
    %v1949 = vpack.c.b16 %v1193, %v1186
    %v1950 = vpack.c.b16 %v1194, %v1187
    %v1951 = vpack.c.b16 %v1195, %v1188
    %v1952 = vpack.c.b16 %v1196, %v1189
    %v1953 = vpack.c.b16 %v1197, %v1190
    %v1954 = vpack.c.b16 %v1205, %v1198
    %v1955 = vpack.c.b16 %v1206, %v1199
    %v1956 = vpack.c.b16 %v1207, %v1200
    %v1957 = vpack.c.b16 %v1208, %v1201
    %v1958 = vpack.c.b16 %v1209, %v1202
    %v1959 = vpack.c.b16 %v1210, %v1203
    %v1960 = vpack.c.b16 %v1211, %v1204
    %v1961 = vpack.c.b16 %v1219, %v1212
    %v1962 = vpack.c.b16 %v1220, %v1213
    %v1963 = vpack.c.b16 %v1221, %v1214
    %v1964 = vpack.c.b16 %v1222, %v1215
    %v1965 = vpack.c.b16 %v1223, %v1216
    %v1966 = vpack.c.b16 %v1224, %v1217
    %v1967 = vpack.c.b16 %v1225, %v1218
    %v1968 = vpack.c.b16 %v1233, %v1226
    %v1969 = vpack.c.b16 %v1234, %v1227
    %v1970 = vpack.c.b16 %v1235, %v1228
    %v1971 = vpack.c.b16 %v1236, %v1229
    %v1972 = vpack.c.b16 %v1237, %v1230
    %v1973 = vpack.c.b16 %v1238, %v1231
    %v1974 = vpack.c.b16 %v1239, %v1232
    %v1975 = vpack.c.b16 %v1247, %v1240
    %v1976 = vpack.c.b16 %v1248, %v1241
    %v1977 = vpack.c.b16 %v1249, %v1242
    %v1978 = vpack.c.b16 %v1250, %v1243
    %v1979 = vpack.c.b16 %v1251, %v1244
    %v1980 = vpack.c.b16 %v1252, %v1245
    %v1981 = vpack.c.b16 %v1253, %v1246
    %v1982 = vpack.c.b16 %v1261, %v1254
    %v1983 = vpack.c.b16 %v1262, %v1255
    %v1984 = vpack.c.b16 %v1263, %v1256
    %v1985 = vpack.c.b16 %v1264, %v1257
    %v1986 = vpack.c.b16 %v1265, %v1258
    %v1987 = vpack.c.b16 %v1266, %v1259
    %v1988 = vpack.c.b16 %v1267, %v1260
    %v1989 = vpack.c.b16 %v1275, %v1268
    %v1990 = vpack.c.b16 %v1276, %v1269
    %v1991 = vpack.c.b16 %v1277, %v1270
    %v1992 = vpack.c.b16 %v1278, %v1271
    %v1993 = vpack.c.b16 %v1279, %v1272
    %v1994 = vpack.c.b16 %v1280, %v1273
    %v1995 = vpack.c.b16 %v1281, %v1274
    %v1996 = vpack.c.b16 %v1289, %v1282
    %v1997 = vpack.c.b16 %v1290, %v1283
    %v1998 = vpack.c.b16 %v1291, %v1284
    %v1999 = vpack.c.b16 %v1292, %v1285
    %v2000 = vpack.c.b16 %v1293, %v1286
    %v2001 = vpack.c.b16 %v1294, %v1287
    %v2002 = vpack.c.b16 %v1295, %v1288
    %v2003 = vpack.c.b16 %v1303, %v1296
    %v2004 = vpack.c.b16 %v1304, %v1297
    %v2005 = vpack.c.b16 %v1305, %v1298
    %v2006 = vpack.c.b16 %v1306, %v1299
    %v2007 = vpack.c.b16 %v1307, %v1300
    %v2008 = vpack.c.b16 %v1308, %v1301
    %v2009 = vpack.c.b16 %v1309, %v1302
    %v2010 = vpack.c.b16 %v1317, %v1310
    %v2011 = vpack.c.b16 %v1318, %v1311
    %v2012 = vpack.c.b16 %v1319, %v1312
    %v2013 = vpack.c.b16 %v1320, %v1313
    %v2014 = vpack.c.b16 %v1321, %v1314
    %v2015 = vpack.c.b16 %v1322, %v1315
    %v2016 = vpack.c.b16 %v1323, %v1316
    %v2017 = vpack.c.b16 %v1331, %v1324
    %v2018 = vpack.c.b16 %v1332, %v1325
    %v2019 = vpack.c.b16 %v1333, %v1326
    %v2020 = vpack.c.b16 %v1334, %v1327
    %v2021 = vpack.c.b16 %v1335, %v1328
    %v2022 = vpack.c.b16 %v1336, %v1329
    %v2023 = vpack.c.b16 %v1337, %v1330
    %v2024 = vpack.c.b16 %v1345, %v1338
    %v2025 = vpack.c.b16 %v1346, %v1339
    %v2026 = vpack.c.b16 %v1347, %v1340
    %v2027 = vpack.c.b16 %v1348, %v1341
    %v2028 = vpack.c.b16 %v1349, %v1342
    %v2029 = vpack.c.b16 %v1350, %v1343
    %v2030 = vpack.c.b16 %v1351, %v1344
    %v2031 = vpack.c.b16 %v1359, %v1352
    %v2032 = vpack.c.b16 %v1360, %v1353
    %v2033 = vpack.c.b16 %v1361, %v1354
    %v2034 = vpack.c.b16 %v1362, %v1355
    %v2035 = vpack.c.b16 %v1363, %v1356
    %v2036 = vpack.c.b16 %v1364, %v1357
    %v2037 = vpack.c.b16 %v1365, %v1358
    %v2038 = vpack.c.b16 %v1373, %v1366
    %v2039 = vpack.c.b16 %v1374, %v1367
    %v2040 = vpack.c.b16 %v1375, %v1368
    %v2041 = vpack.c.b16 %v1376, %v1369
    %v2042 = vpack.c.b16 %v1377, %v1370
    %v2043 = vpack.c.b16 %v1378, %v1371
    %v2044 = vpack.c.b16 %v1379, %v1372
    %v2045 = vpack.c.b16 %v1387, %v1380
    %v2046 = vpack.c.b16 %v1388, %v1381
    %v2047 = vpack.c.b16 %v1389, %v1382
    %v2048 = vpack.c.b16 %v1390, %v1383
    %v2049 = vpack.c.b16 %v1391, %v1384
    %v2050 = vpack.c.b16 %v1392, %v1385
    %v2051 = vpack.c.b16 %v1393, %v1386
    %v2052 = vpack.c.b16 %v1401, %v1394
    %v2053 = vpack.c.b16 %v1402, %v1395
    %v2054 = vpack.c.b16 %v1403, %v1396
    %v2055 = vpack.c.b16 %v1404, %v1397
    %v2056 = vpack.c.b16 %v1405, %v1398
    %v2057 = vpack.c.b16 %v1406, %v1399
    %v2058 = vpack.c.b16 %v1407, %v1400
    %v2059 = vpack.c.b16 %v1415, %v1408
    %v2060 = vpack.c.b16 %v1416, %v1409
    %v2061 = vpack.c.b16 %v1417, %v1410
    %v2062 = vpack.c.b16 %v1418, %v1411
    %v2063 = vpack.c.b16 %v1419, %v1412
    %v2064 = vpack.c.b16 %v1420, %v1413
    %v2065 = vpack.c.b16 %v1421, %v1414
    %v2066 = vpack.c.b16 %v1429, %v1422
    %v2067 = vpack.c.b16 %v1430, %v1423
    %v2068 = vpack.c.b16 %v1431, %v1424
    %v2069 = vpack.c.b16 %v1432, %v1425
    %v2070 = vpack.c.b16 %v1433, %v1426
    %v2071 = vpack.c.b16 %v1434, %v1427
    %v2072 = vpack.c.b16 %v1435, %v1428
    %v2073 = vpack.c.b16 %v1443, %v1436
    %v2074 = vpack.c.b16 %v1444, %v1437
    %v2075 = vpack.c.b16 %v1445, %v1438
    %v2076 = vpack.c.b16 %v1446, %v1439
    %v2077 = vpack.c.b16 %v1447, %v1440
    %v2078 = vpack.c.b16 %v1448, %v1441
    %v2079 = vpack.c.b16 %v1449, %v1442
    %v2080 = vpack.c.b16 %v1457, %v1450
    %v2081 = vpack.c.b16 %v1458, %v1451
    %v2082 = vpack.c.b16 %v1459, %v1452
    %v2083 = vpack.c.b16 %v1460, %v1453
    %v2084 = vpack.c.b16 %v1461, %v1454
    %v2085 = vpack.c.b16 %v1462, %v1455
    %v2086 = vpack.c.b16 %v1463, %v1456
    %v2087 = vpack.c.b16 %v1471, %v1464
    %v2088 = vpack.c.b16 %v1472, %v1465
    %v2089 = vpack.c.b16 %v1473, %v1466
    %v2090 = vpack.c.b16 %v1474, %v1467
    %v2091 = vpack.c.b16 %v1475, %v1468
    %v2092 = vpack.c.b16 %v1476, %v1469
    %v2093 = vpack.c.b16 %v1477, %v1470
    %v2094 = vpack.c.b16 %v1485, %v1478
    %v2095 = vpack.c.b16 %v1486, %v1479
    %v2096 = vpack.c.b16 %v1487, %v1480
    %v2097 = vpack.c.b16 %v1488, %v1481
    %v2098 = vpack.c.b16 %v1489, %v1482
    %v2099 = vpack.c.b16 %v1490, %v1483
    %v2100 = vpack.c.b16 %v1491, %v1484
    %v2101 = vpack.c.b16 %v1499, %v1492
    %v2102 = vpack.c.b16 %v1500, %v1493
    %v2103 = vpack.c.b16 %v1501, %v1494
    %v2104 = vpack.c.b16 %v1502, %v1495
    %v2105 = vpack.c.b16 %v1503, %v1496
    %v2106 = vpack.c.b16 %v1504, %v1497
    %v2107 = vpack.c.b16 %v1505, %v1498
    %v2108 = vpack.c.b16 %v1513, %v1506
    %v2109 = vpack.c.b16 %v1514, %v1507
    %v2110 = vpack.c.b16 %v1515, %v1508
    %v2111 = vpack.c.b16 %v1516, %v1509
    %v2112 = vpack.c.b16 %v1517, %v1510
    %v2113 = vpack.c.b16 %v1518, %v1511
    %v2114 = vpack.c.b16 %v1519, %v1512
    %v2115 = vpack.c.b16 %v1527, %v1520
    %v2116 = vpack.c.b16 %v1528, %v1521
    %v2117 = vpack.c.b16 %v1529, %v1522
    %v2118 = vpack.c.b16 %v1530, %v1523
    %v2119 = vpack.c.b16 %v1531, %v1524
    %v2120 = vpack.c.b16 %v1532, %v1525
    %v2121 = vpack.c.b16 %v1533, %v1526
    %v2122 = vpack.c.b16 %v1541, %v1534
    %v2123 = vpack.c.b16 %v1542, %v1535
    %v2124 = vpack.c.b16 %v1543, %v1536
    %v2125 = vpack.c.b16 %v1544, %v1537
    %v2126 = vpack.c.b16 %v1545, %v1538
    %v2127 = vpack.c.b16 %v1546, %v1539
    %v2128 = vpack.c.b16 %v1547, %v1540
    %v2129 = vpack.c.b16 %v1555, %v1548
    %v2130 = vpack.c.b16 %v1556, %v1549
    %v2131 = vpack.c.b16 %v1557, %v1550
    %v2132 = vpack.c.b16 %v1558, %v1551
    %v2133 = vpack.c.b16 %v1559, %v1552
    %v2134 = vpack.c.b16 %v1560, %v1553
    %v2135 = vpack.c.b16 %v1561, %v1554
    %v2136 = vpack.c.b16 %v1569, %v1562
    %v2137 = vpack.c.b16 %v1570, %v1563
    %v2138 = vpack.c.b16 %v1571, %v1564
    %v2139 = vpack.c.b16 %v1572, %v1565
    %v2140 = vpack.c.b16 %v1573, %v1566
    %v2141 = vpack.c.b16 %v1574, %v1567
    %v2142 = vpack.c.b16 %v1575, %v1568
    %v2143 = vpack.c.b16 %v1583, %v1576
    %v2144 = vpack.c.b16 %v1584, %v1577
    %v2145 = vpack.c.b16 %v1585, %v1578
    %v2146 = vpack.c.b16 %v1586, %v1579
    %v2147 = vpack.c.b16 %v1587, %v1580
    %v2148 = vpack.c.b16 %v1588, %v1581
    %v2149 = vpack.c.b16 %v1589, %v1582
    %v2150 = vpack.c.b16 %v1597, %v1590
    %v2151 = vpack.c.b16 %v1598, %v1591
    %v2152 = vpack.c.b16 %v1599, %v1592
    %v2153 = vpack.c.b16 %v1600, %v1593
    %v2154 = vpack.c.b16 %v1601, %v1594
    %v2155 = vpack.c.b16 %v1602, %v1595
    %v2156 = vpack.c.b16 %v1603, %v1596
    %v2157 = vpack.c.b16 %v1611, %v1604
    %v2158 = vpack.c.b16 %v1612, %v1605
    %v2159 = vpack.c.b16 %v1613, %v1606
    %v2160 = vpack.c.b16 %v1614, %v1607
    %v2161 = vpack.c.b16 %v1615, %v1608
    %v2162 = vpack.c.b16 %v1616, %v1609
    %v2163 = vpack.c.b16 %v1617, %v1610
    %v2164 = vpack.c.b16 %v1625, %v1618
    %v2165 = vpack.c.b16 %v1626, %v1619
    %v2166 = vpack.c.b16 %v1627, %v1620
    %v2167 = vpack.c.b16 %v1628, %v1621
    %v2168 = vpack.c.b16 %v1629, %v1622
    %v2169 = vpack.c.b16 %v1630, %v1623
    %v2170 = vpack.c.b16 %v1631, %v1624
    %v2171 = vpack.c.b16 %v1639, %v1632
    %v2172 = vpack.c.b16 %v1640, %v1633
    %v2173 = vpack.c.b16 %v1641, %v1634
    %v2174 = vpack.c.b16 %v1642, %v1635
    %v2175 = vpack.c.b16 %v1643, %v1636
    %v2176 = vpack.c.b16 %v1644, %v1637
    %v2177 = vpack.c.b16 %v1645, %v1638
    %v2178 = vpack.c.b16 %v1653, %v1646
    %v2179 = vpack.c.b16 %v1654, %v1647
    %v2180 = vpack.c.b16 %v1655, %v1648
    %v2181 = vpack.c.b16 %v1656, %v1649
    %v2182 = vpack.c.b16 %v1657, %v1650
    %v2183 = vpack.c.b16 %v1658, %v1651
    %v2184 = vpack.c.b16 %v1659, %v1652
    %v2185 = vpack.c.b16 %v1667, %v1660
    %v2186 = vpack.c.b16 %v1668, %v1661
    %v2187 = vpack.c.b16 %v1669, %v1662
    %v2188 = vpack.c.b16 %v1670, %v1663
    %v2189 = vpack.c.b16 %v1671, %v1664
    %v2190 = vpack.c.b16 %v1672, %v1665
    %v2191 = vpack.c.b16 %v1673, %v1666
    %v2192 = vpack.c.b16 %v1681, %v1674
    %v2193 = vpack.c.b16 %v1682, %v1675
    %v2194 = vpack.c.b16 %v1683, %v1676
    %v2195 = vpack.c.b16 %v1684, %v1677
    %v2196 = vpack.c.b16 %v1685, %v1678
    %v2197 = vpack.c.b16 %v1686, %v1679
    %v2198 = vpack.c.b16 %v1687, %v1680
    %v2199 = vpack.c.b16 %v1695, %v1688
    %v2200 = vpack.c.b16 %v1696, %v1689
    %v2201 = vpack.c.b16 %v1697, %v1690
    %v2202 = vpack.c.b16 %v1698, %v1691
    %v2203 = vpack.c.b16 %v1699, %v1692
    %v2204 = vpack.c.b16 %v1700, %v1693
    %v2205 = vpack.c.b16 %v1701, %v1694
    %v2206 = vpack.c.b16 %v1709, %v1702
    %v2207 = vpack.c.b16 %v1710, %v1703
    %v2208 = vpack.c.b16 %v1711, %v1704
    %v2209 = vpack.c.b16 %v1712, %v1705
    %v2210 = vpack.c.b16 %v1713, %v1706
    %v2211 = vpack.c.b16 %v1714, %v1707
    %v2212 = vpack.c.b16 %v1715, %v1708
    %v2213 = vpack.c.b16 %v1723, %v1716
    %v2214 = vpack.c.b16 %v1724, %v1717
    %v2215 = vpack.c.b16 %v1725, %v1718
    %v2216 = vpack.c.b16 %v1726, %v1719
    %v2217 = vpack.c.b16 %v1727, %v1720
    %v2218 = vpack.c.b16 %v1728, %v1721
    %v2219 = vpack.c.b16 %v1729, %v1722
    %v2220 = vpack.c.b16 %v1737, %v1730
    %v2221 = vpack.c.b16 %v1738, %v1731
    %v2222 = vpack.c.b16 %v1739, %v1732
    %v2223 = vpack.c.b16 %v1740, %v1733
    %v2224 = vpack.c.b16 %v1741, %v1734
    %v2225 = vpack.c.b16 %v1742, %v1735
    %v2226 = vpack.c.b16 %v1743, %v1736
    %v2227 = vpack.c.b16 %v1751, %v1744
    %v2228 = vpack.c.b16 %v1752, %v1745
    %v2229 = vpack.c.b16 %v1753, %v1746
    %v2230 = vpack.c.b16 %v1754, %v1747
    %v2231 = vpack.c.b16 %v1755, %v1748
    %v2232 = vpack.c.b16 %v1756, %v1749
    %v2233 = vpack.c.b16 %v1757, %v1750
    %v2234 = vpack.c.b16 %v1765, %v1758
    %v2235 = vpack.c.b16 %v1766, %v1759
    %v2236 = vpack.c.b16 %v1767, %v1760
    %v2237 = vpack.c.b16 %v1768, %v1761
    %v2238 = vpack.c.b16 %v1769, %v1762
    %v2239 = vpack.c.b16 %v1770, %v1763
    %v2240 = vpack.c.b16 %v1771, %v1764
    %v2241 = vpack.c.b16 %v1779, %v1772
    %v2242 = vpack.c.b16 %v1780, %v1773
    %v2243 = vpack.c.b16 %v1781, %v1774
    %v2244 = vpack.c.b16 %v1782, %v1775
    %v2245 = vpack.c.b16 %v1783, %v1776
    %v2246 = vpack.c.b16 %v1784, %v1777
    %v2247 = vpack.c.b16 %v1785, %v1778
    %v2248 = vpack.c.b16 %v1793, %v1786
    %v2249 = vpack.c.b16 %v1794, %v1787
    %v2250 = vpack.c.b16 %v1795, %v1788
    %v2251 = vpack.c.b16 %v1796, %v1789
    %v2252 = vpack.c.b16 %v1797, %v1790
    %v2253 = vpack.c.b16 %v1798, %v1791
    %v2254 = vpack.c.b16 %v1799, %v1792
    %v2255 = vpack.c.b16 %v1807, %v1800
    %v2256 = vpack.c.b16 %v1808, %v1801
    %v2257 = vpack.c.b16 %v1809, %v1802
    %v2258 = vpack.c.b16 %v1810, %v1803
    %v2259 = vpack.c.b16 %v1811, %v1804
    %v2260 = vpack.c.b16 %v1812, %v1805
    %v2261 = vpack.c.b16 %v1813, %v1806
    %v2262 = vpack.c.b16 %v1821, %v1814
    %v2263 = vpack.c.b16 %v1822, %v1815
    %v2264 = vpack.c.b16 %v1823, %v1816
    %v2265 = vpack.c.b16 %v1824, %v1817
    %v2266 = vpack.c.b16 %v1825, %v1818
    %v2267 = vpack.c.b16 %v1826, %v1819
    %v2268 = vpack.c.b16 %v1827, %v1820
    %v2269 = vpack.c.b16 %v1835, %v1828
    %v2270 = vpack.c.b16 %v1836, %v1829
    %v2271 = vpack.c.b16 %v1837, %v1830
    %v2272 = vpack.c.b16 %v1838, %v1831
    %v2273 = vpack.c.b16 %v1839, %v1832
    %v2274 = vpack.c.b16 %v1840, %v1833
    %v2275 = vpack.c.b16 %v1841, %v1834
    %v2276 = vpack.c.b16 %v1849, %v1842
    %v2277 = vpack.c.b16 %v1850, %v1843
    %v2278 = vpack.c.b16 %v1851, %v1844
    %v2279 = vpack.c.b16 %v1852, %v1845
    %v2280 = vpack.c.b16 %v1853, %v1846
    %v2281 = vpack.c.b16 %v1854, %v1847
    %v2282 = vpack.c.b16 %v1855, %v1848
    %v2283 = vpack.c.b16 %v1863, %v1856
    %v2284 = vpack.c.b16 %v1864, %v1857
    %v2285 = vpack.c.b16 %v1865, %v1858
    %v2286 = vpack.c.b16 %v1866, %v1859
    %v2287 = vpack.c.b16 %v1867, %v1860
    %v2288 = vpack.c.b16 %v1868, %v1861
    %v2289 = vpack.c.b16 %v1869, %v1862
    %v2290 = vpack.c.b16 %v1877, %v1870
    %v2291 = vpack.c.b16 %v1878, %v1871
    %v2292 = vpack.c.b16 %v1879, %v1872
    %v2293 = vpack.c.b16 %v1880, %v1873
    %v2294 = vpack.c.b16 %v1881, %v1874
    %v2295 = vpack.c.b16 %v1882, %v1875
    %v2296 = vpack.c.b16 %v1883, %v1876
    %v2297 = vpack.c.b16 %v1891, %v1884
    %v2298 = vpack.c.b16 %v1892, %v1885
    %v2299 = vpack.c.b16 %v1893, %v1886
    %v2300 = vpack.c.b16 %v1894, %v1887
    %v2301 = vpack.c.b16 %v1895, %v1888
    %v2302 = vpack.c.b16 %v1896, %v1889
    %v2303 = vpack.c.b16 %v1897, %v1890
    %v2304 = vpack.c.b16 %v1905, %v1898
    %v2305 = vpack.c.b16 %v1906, %v1899
    %v2306 = vpack.c.b16 %v1907, %v1900
    %v2307 = vpack.c.b16 %v1908, %v1901
    %v2308 = vpack.c.b16 %v1909, %v1902
    %v2309 = vpack.c.b16 %v1910, %v1903
    %v2310 = vpack.c.b16 %v1911, %v1904
    %v2311 = vpack.c.b16 %v1919, %v1912
    %v2312 = vpack.c.b16 %v1920, %v1913
    %v2313 = vpack.c.b16 %v1921, %v1914
    %v2314 = vpack.c.b16 %v1922, %v1915
    %v2315 = vpack.c.b16 %v1923, %v1916
    %v2316 = vpack.c.b16 %v1924, %v1917
    %v2317 = vpack.c.b16 %v1925, %v1918
    %2710 = vmatprep.subr.bf16.mxu0 %v1927
    %2711 = vmatpush1.bf16.msra.mxu0 %v1926
    %2712 = vmatprep.subr.bf16.mxu0 %v1934
    %2713 = vmatpush1.bf16.msra.mxu0 %v1933
    %2714 = vmatprep.subr.bf16.mxu0 %v1941
    %2715 = vmatpush1.bf16.msra.mxu0 %v1940
    %2716 = vmatprep.subr.bf16.mxu0 %v1948
    %2717 = vmatpush1.bf16.msra.mxu0 %v1947
    %2718 = vmatprep.subr.bf16.mxu0 %v1955
    %2719 = vmatpush1.bf16.msra.mxu0 %v1954
    %2720 = vmatprep.subr.bf16.mxu0 %v1962
    %2721 = vmatpush1.bf16.msra.mxu0 %v1961
    %2722 = vmatprep.subr.bf16.mxu0 %v1969
    %2723 = vmatpush1.bf16.msra.mxu0 %v1968
    %2724 = vmatprep.subr.bf16.mxu0 %v1976
    %2725 = vmatpush1.bf16.msra.mxu0 %v1975
    %2726 = vmatprep.subr.bf16.mxu0 %v1983
    %2727 = vmatpush1.bf16.msra.mxu0 %v1982
    %2728 = vmatprep.subr.bf16.mxu0 %v1990
    %2729 = vmatpush1.bf16.msra.mxu0 %v1989
    %2730 = vmatprep.subr.bf16.mxu0 %v1997
    %2731 = vmatpush1.bf16.msra.mxu0 %v1996
    %2732 = vmatprep.subr.bf16.mxu0 %v2004
    %2733 = vmatpush1.bf16.msra.mxu0 %v2003
    %2734 = vmatprep.subr.bf16.mxu0 %v2011
    %2735 = vmatpush1.bf16.msra.mxu0 %v2010
    %2736 = vmatprep.subr.bf16.mxu0 %v2018
    %2737 = vmatpush1.bf16.msra.mxu0 %v2017
    %2738 = vmatprep.subr.bf16.mxu0 %v2025
    %2739 = vmatpush1.bf16.msra.mxu0 %v2024
    %2740 = vmatprep.subr.bf16.mxu0 %v2032
    %2741 = vmatpush1.bf16.msra.mxu0 %v2031
    %2742 = vmatprep.mubr.bf16.mxu0 %v681
    %2743 = vmatmul.mubr.bf16.gmra.mrb[0].mxu0 %v680
    %v2744 = vpop.f32.mrb[0].mxu0
    %v2745 = vadd.f32 %v626, %v2744
    %v2746 = vpop.f32.mrb[0].mxu0
    %v2747 = vadd.f32 %v630, %v2746
    %v2748 = vpop.f32.mrb[0].mxu0
    %v2749 = vadd.f32 %v626, %v2748
    %v2750 = vpop.f32.mrb[0].mxu0
    %v2751 = vadd.f32 %v630, %v2750
    %2752 = vdwg.mxu0
    %2753 = vmatprep.subr.bf16.mxu0 %v2039
    %2754 = vmatpush1.bf16.msra.mxu0 %v2038
    %2755 = vmatprep.subr.bf16.mxu0 %v2046
    %2756 = vmatpush1.bf16.msra.mxu0 %v2045
    %2757 = vmatprep.subr.bf16.mxu0 %v2053
    %2758 = vmatpush1.bf16.msra.mxu0 %v2052
    %2759 = vmatprep.subr.bf16.mxu0 %v2060
    %2760 = vmatpush1.bf16.msra.mxu0 %v2059
    %2761 = vmatprep.subr.bf16.mxu0 %v2067
    %2762 = vmatpush1.bf16.msra.mxu0 %v2066
    %2763 = vmatprep.subr.bf16.mxu0 %v2074
    %2764 = vmatpush1.bf16.msra.mxu0 %v2073
    %2765 = vmatprep.subr.bf16.mxu0 %v2081
    %2766 = vmatpush1.bf16.msra.mxu0 %v2080
    %2767 = vmatprep.subr.bf16.mxu0 %v2088
    %2768 = vmatpush1.bf16.msra.mxu0 %v2087
    %2769 = vmatprep.subr.bf16.mxu0 %v2095
    %2770 = vmatpush1.bf16.msra.mxu0 %v2094
    %2771 = vmatprep.subr.bf16.mxu0 %v2102
    %2772 = vmatpush1.bf16.msra.mxu0 %v2101
    %2773 = vmatprep.subr.bf16.mxu0 %v2109
    %2774 = vmatpush1.bf16.msra.mxu0 %v2108
    %2775 = vmatprep.subr.bf16.mxu0 %v2116
    %2776 = vmatpush1.bf16.msra.mxu0 %v2115
    %2777 = vmatprep.subr.bf16.mxu0 %v2123
    %2778 = vmatpush1.bf16.msra.mxu0 %v2122
    %2779 = vmatprep.subr.bf16.mxu0 %v2130
    %2780 = vmatpush1.bf16.msra.mxu0 %v2129
    %2781 = vmatprep.subr.bf16.mxu0 %v2137
    %2782 = vmatpush1.bf16.msra.mxu0 %v2136
    %2783 = vmatprep.subr.bf16.mxu0 %v2144
    %2784 = vmatpush1.bf16.msra.mxu0 %v2143
    %2785 = vmatprep.mubr.bf16.mxu0 %v683
    %2786 = vmatmul.mubr.bf16.gmra.mrb[0].mxu0 %v682
    %v2787 = vpop.f32.mrb[0].mxu0
    %v2788 = vadd.f32 %v2745, %v2787
    %v2789 = vpop.f32.mrb[0].mxu0
    %v2790 = vadd.f32 %v2747, %v2789
    %v2791 = vpop.f32.mrb[0].mxu0
    %v2792 = vadd.f32 %v2749, %v2791
    %v2793 = vpop.f32.mrb[0].mxu0
    %v2794 = vadd.f32 %v2751, %v2793
    %2795 = vdwg.mxu0
    %2796 = vmatprep.subr.bf16.mxu0 %v2151
    %2797 = vmatpush1.bf16.msra.mxu0 %v2150
    %2798 = vmatprep.subr.bf16.mxu0 %v2158
    %2799 = vmatpush1.bf16.msra.mxu0 %v2157
    %2800 = vmatprep.subr.bf16.mxu0 %v2165
    %2801 = vmatpush1.bf16.msra.mxu0 %v2164
    %2802 = vmatprep.subr.bf16.mxu0 %v2172
    %2803 = vmatpush1.bf16.msra.mxu0 %v2171
    %2804 = vmatprep.subr.bf16.mxu0 %v2179
    %2805 = vmatpush1.bf16.msra.mxu0 %v2178
    %2806 = vmatprep.subr.bf16.mxu0 %v2186
    %2807 = vmatpush1.bf16.msra.mxu0 %v2185
    %2808 = vmatprep.subr.bf16.mxu0 %v2193
    %2809 = vmatpush1.bf16.msra.mxu0 %v2192
    %2810 = vmatprep.subr.bf16.mxu0 %v2200
    %2811 = vmatpush1.bf16.msra.mxu0 %v2199
    %2812 = vmatprep.subr.bf16.mxu0 %v2207
    %2813 = vmatpush1.bf16.msra.mxu0 %v2206
    %2814 = vmatprep.subr.bf16.mxu0 %v2214
    %2815 = vmatpush1.bf16.msra.mxu0 %v2213
    %2816 = vmatprep.subr.bf16.mxu0 %v2221
    %2817 = vmatpush1.bf16.msra.mxu0 %v2220
    %2818 = vmatprep.subr.bf16.mxu0 %v2228
    %2819 = vmatpush1.bf16.msra.mxu0 %v2227
    %2820 = vmatprep.subr.bf16.mxu0 %v2235
    %2821 = vmatpush1.bf16.msra.mxu0 %v2234
    %2822 = vmatprep.subr.bf16.mxu0 %v2242
    %2823 = vmatpush1.bf16.msra.mxu0 %v2241
    %2824 = vmatprep.subr.bf16.mxu0 %v2249
    %2825 = vmatpush1.bf16.msra.mxu0 %v2248
    %2826 = vmatprep.subr.bf16.mxu0 %v2256
    %2827 = vmatpush1.bf16.msra.mxu0 %v2255
    %2828 = vmatprep.mubr.bf16.mxu0 %v685
    %2829 = vmatmul.mubr.bf16.gmra.mrb[0].mxu0 %v684
    %v2830 = vpop.f32.mrb[0].mxu0
    %v2831 = vadd.f32 %v2788, %v2830
    %v2832 = vpop.f32.mrb[0].mxu0
    %v2833 = vadd.f32 %v2790, %v2832
    %v2834 = vpop.f32.mrb[0].mxu0
    %v2835 = vadd.f32 %v2792, %v2834
    %v2836 = vpop.f32.mrb[0].mxu0
    %v2837 = vadd.f32 %v2794, %v2836
    %2838 = vdwg.mxu0
    %2839 = vmatprep.subr.bf16.mxu0 %v2263
    %2840 = vmatpush1.bf16.msra.mxu0 %v2262
    %2841 = vmatprep.subr.bf16.mxu0 %v2270
    %2842 = vmatpush1.bf16.msra.mxu0 %v2269
    %2843 = vmatprep.subr.bf16.mxu0 %v2277
    %2844 = vmatpush1.bf16.msra.mxu0 %v2276
    %2845 = vmatprep.subr.bf16.mxu0 %v2284
    %2846 = vmatpush1.bf16.msra.mxu0 %v2283
    %2847 = vmatprep.subr.bf16.mxu0 %v2291
    %2848 = vmatpush1.bf16.msra.mxu0 %v2290
    %2849 = vmatprep.subr.bf16.mxu0 %v2298
    %2850 = vmatpush1.bf16.msra.mxu0 %v2297
    %2851 = vmatprep.subr.bf16.mxu0 %v2305
    %2852 = vmatpush1.bf16.msra.mxu0 %v2304
    %2853 = vmatprep.subr.bf16.mxu0 %v2312
    %2854 = vmatpush1.bf16.msra.mxu0 %v2311
    %2855 = vmatprep.subr.bf16.mxu0 0
    %2856 = vmatpush1.bf16.msra.mxu0 0
    %2857 = vmatprep.subr.bf16.mxu0 0
    %2858 = vmatpush1.bf16.msra.mxu0 0
    %2859 = vmatprep.subr.bf16.mxu0 0
    %2860 = vmatpush1.bf16.msra.mxu0 0
    %2861 = vmatprep.subr.bf16.mxu0 0
    %2862 = vmatpush1.bf16.msra.mxu0 0
    %2863 = vmatprep.subr.bf16.mxu0 0
    %2864 = vmatpush1.bf16.msra.mxu0 0
    %2865 = vmatprep.subr.bf16.mxu0 0
    %2866 = vmatpush1.bf16.msra.mxu0 0
    %2867 = vmatprep.subr.bf16.mxu0 0
    %2868 = vmatpush1.bf16.msra.mxu0 0
    %2869 = vmatprep.subr.bf16.mxu0 0
    %2870 = vmatpush1.bf16.msra.mxu0 0
    %2871 = vmatprep.mubr.bf16.mxu0 0
    %2872 = vmatmul.mubr.bf16.gmra.mrb[0].mxu0 %v686
    %v2873 = vpop.f32.mrb[0].mxu0
    %v2874 = vadd.f32 %v2831, %v2873
    %v2875 = vpop.f32.mrb[0].mxu0
    %v2876 = vadd.f32 %v2833, %v2875
    %v2877 = vpop.f32.mrb[0].mxu0
    %v2878 = vadd.f32 %v2835, %v2877
    %v2879 = vpop.f32.mrb[0].mxu0
    %v2880 = vadd.f32 %v2837, %v2879
    %2881 = vdwg.mxu0
    %2882 = vmatprep.subr.bf16.mxu0 %v1929
    %2883 = vmatpush1.bf16.msra.mxu0 %v1928
    %2884 = vmatprep.subr.bf16.mxu0 %v1936
    %2885 = vmatpush1.bf16.msra.mxu0 %v1935
    %2886 = vmatprep.subr.bf16.mxu0 %v1943
    %2887 = vmatpush1.bf16.msra.mxu0 %v1942
    %2888 = vmatprep.subr.bf16.mxu0 %v1950
    %2889 = vmatpush1.bf16.msra.mxu0 %v1949
    %2890 = vmatprep.subr.bf16.mxu0 %v1957
    %2891 = vmatpush1.bf16.msra.mxu0 %v1956
    %2892 = vmatprep.subr.bf16.mxu0 %v1964
    %2893 = vmatpush1.bf16.msra.mxu0 %v1963
    %2894 = vmatprep.subr.bf16.mxu0 %v1971
    %2895 = vmatpush1.bf16.msra.mxu0 %v1970
    %2896 = vmatprep.subr.bf16.mxu0 %v1978
    %2897 = vmatpush1.bf16.msra.mxu0 %v1977
    %2898 = vmatprep.subr.bf16.mxu0 %v1985
    %2899 = vmatpush1.bf16.msra.mxu0 %v1984
    %2900 = vmatprep.subr.bf16.mxu0 %v1992
    %2901 = vmatpush1.bf16.msra.mxu0 %v1991
    %2902 = vmatprep.subr.bf16.mxu0 %v1999
    %2903 = vmatpush1.bf16.msra.mxu0 %v1998
    %2904 = vmatprep.subr.bf16.mxu0 %v2006
    %2905 = vmatpush1.bf16.msra.mxu0 %v2005
    %2906 = vmatprep.subr.bf16.mxu0 %v2013
    %2907 = vmatpush1.bf16.msra.mxu0 %v2012
    %2908 = vmatprep.subr.bf16.mxu0 %v2020
    %2909 = vmatpush1.bf16.msra.mxu0 %v2019
    %2910 = vmatprep.subr.bf16.mxu0 %v2027
    %2911 = vmatpush1.bf16.msra.mxu0 %v2026
    %2912 = vmatprep.subr.bf16.mxu0 %v2034
    %2913 = vmatpush1.bf16.msra.mxu0 %v2033
    %2914 = vmatprep.mubr.bf16.mxu0 %v681
    %2915 = vmatmul.mubr.bf16.gmra.mrb[0].mxu0 %v680
    %v2916 = vpop.f32.mrb[0].mxu0
    %v2917 = vadd.f32 %v634, %v2916
    %v2918 = vpop.f32.mrb[0].mxu0
    %v2919 = vadd.f32 %v638, %v2918
    %v2920 = vpop.f32.mrb[0].mxu0
    %v2921 = vadd.f32 %v634, %v2920
    %v2922 = vpop.f32.mrb[0].mxu0
    %v2923 = vadd.f32 %v638, %v2922
    %2924 = vdwg.mxu0
    %2925 = vmatprep.subr.bf16.mxu0 %v2041
    %2926 = vmatpush1.bf16.msra.mxu0 %v2040
    %2927 = vmatprep.subr.bf16.mxu0 %v2048
    %2928 = vmatpush1.bf16.msra.mxu0 %v2047
    %2929 = vmatprep.subr.bf16.mxu0 %v2055
    %2930 = vmatpush1.bf16.msra.mxu0 %v2054
    %2931 = vmatprep.subr.bf16.mxu0 %v2062
    %2932 = vmatpush1.bf16.msra.mxu0 %v2061
    %2933 = vmatprep.subr.bf16.mxu0 %v2069
    %2934 = vmatpush1.bf16.msra.mxu0 %v2068
    %2935 = vmatprep.subr.bf16.mxu0 %v2076
    %2936 = vmatpush1.bf16.msra.mxu0 %v2075
    %2937 = vmatprep.subr.bf16.mxu0 %v2083
    %2938 = vmatpush1.bf16.msra.mxu0 %v2082
    %2939 = vmatprep.subr.bf16.mxu0 %v2090
    %2940 = vmatpush1.bf16.msra.mxu0 %v2089
    %2941 = vmatprep.subr.bf16.mxu0 %v2097
    %2942 = vmatpush1.bf16.msra.mxu0 %v2096
    %2943 = vmatprep.subr.bf16.mxu0 %v2104
    %2944 = vmatpush1.bf16.msra.mxu0 %v2103
    %2945 = vmatprep.subr.bf16.mxu0 %v2111
    %2946 = vmatpush1.bf16.msra.mxu0 %v2110
    %2947 = vmatprep.subr.bf16.mxu0 %v2118
    %2948 = vmatpush1.bf16.msra.mxu0 %v2117
    %2949 = vmatprep.subr.bf16.mxu0 %v2125
    %2950 = vmatpush1.bf16.msra.mxu0 %v2124
    %2951 = vmatprep.subr.bf16.mxu0 %v2132
    %2952 = vmatpush1.bf16.msra.mxu0 %v2131
    %2953 = vmatprep.subr.bf16.mxu0 %v2139
    %2954 = vmatpush1.bf16.msra.mxu0 %v2138
    %2955 = vmatprep.subr.bf16.mxu0 %v2146
    %2956 = vmatpush1.bf16.msra.mxu0 %v2145
    %2957 = vmatprep.mubr.bf16.mxu0 %v683
    %2958 = vmatmul.mubr.bf16.gmra.mrb[0].mxu0 %v682
    %v2959 = vpop.f32.mrb[0].mxu0
    %v2960 = vadd.f32 %v2917, %v2959
    %v2961 = vpop.f32.mrb[0].mxu0
    %v2962 = vadd.f32 %v2919, %v2961
    %v2963 = vpop.f32.mrb[0].mxu0
    %v2964 = vadd.f32 %v2921, %v2963
    %v2965 = vpop.f32.mrb[0].mxu0
    %v2966 = vadd.f32 %v2923, %v2965
    %2967 = vdwg.mxu0
    %2968 = vmatprep.subr.bf16.mxu0 %v2153
    %2969 = vmatpush1.bf16.msra.mxu0 %v2152
    %2970 = vmatprep.subr.bf16.mxu0 %v2160
    %2971 = vmatpush1.bf16.msra.mxu0 %v2159
    %2972 = vmatprep.subr.bf16.mxu0 %v2167
    %2973 = vmatpush1.bf16.msra.mxu0 %v2166
    %2974 = vmatprep.subr.bf16.mxu0 %v2174
    %2975 = vmatpush1.bf16.msra.mxu0 %v2173
    %2976 = vmatprep.subr.bf16.mxu0 %v2181
    %2977 = vmatpush1.bf16.msra.mxu0 %v2180
    %2978 = vmatprep.subr.bf16.mxu0 %v2188
    %2979 = vmatpush1.bf16.msra.mxu0 %v2187
    %2980 = vmatprep.subr.bf16.mxu0 %v2195
    %2981 = vmatpush1.bf16.msra.mxu0 %v2194
    %2982 = vmatprep.subr.bf16.mxu0 %v2202
    %2983 = vmatpush1.bf16.msra.mxu0 %v2201
    %2984 = vmatprep.subr.bf16.mxu0 %v2209
    %2985 = vmatpush1.bf16.msra.mxu0 %v2208
    %2986 = vmatprep.subr.bf16.mxu0 %v2216
    %2987 = vmatpush1.bf16.msra.mxu0 %v2215
    %2988 = vmatprep.subr.bf16.mxu0 %v2223
    %2989 = vmatpush1.bf16.msra.mxu0 %v2222
    %2990 = vmatprep.subr.bf16.mxu0 %v2230
    %2991 = vmatpush1.bf16.msra.mxu0 %v2229
    %2992 = vmatprep.subr.bf16.mxu0 %v2237
    %2993 = vmatpush1.bf16.msra.mxu0 %v2236
    %2994 = vmatprep.subr.bf16.mxu0 %v2244
    %2995 = vmatpush1.bf16.msra.mxu0 %v2243
    %2996 = vmatprep.subr.bf16.mxu0 %v2251
    %2997 = vmatpush1.bf16.msra.mxu0 %v2250
    %2998 = vmatprep.subr.bf16.mxu0 %v2258
    %2999 = vmatpush1.bf16.msra.mxu0 %v2257
    %3000 = vmatprep.mubr.bf16.mxu0 %v685
    %3001 = vmatmul.mubr.bf16.gmra.mrb[0].mxu0 %v684
    %v3002 = vpop.f32.mrb[0].mxu0
    %v3003 = vadd.f32 %v2960, %v3002
    %v3004 = vpop.f32.mrb[0].mxu0
    %v3005 = vadd.f32 %v2962, %v3004
    %v3006 = vpop.f32.mrb[0].mxu0
    %v3007 = vadd.f32 %v2964, %v3006
    %v3008 = vpop.f32.mrb[0].mxu0
    %v3009 = vadd.f32 %v2966, %v3008
    %3010 = vdwg.mxu0
    %3011 = vmatprep.subr.bf16.mxu0 %v2265
    %3012 = vmatpush1.bf16.msra.mxu0 %v2264
    %3013 = vmatprep.subr.bf16.mxu0 %v2272
    %3014 = vmatpush1.bf16.msra.mxu0 %v2271
    %3015 = vmatprep.subr.bf16.mxu0 %v2279
    %3016 = vmatpush1.bf16.msra.mxu0 %v2278
    %3017 = vmatprep.subr.bf16.mxu0 %v2286
    %3018 = vmatpush1.bf16.msra.mxu0 %v2285
    %3019 = vmatprep.subr.bf16.mxu0 %v2293
    %3020 = vmatpush1.bf16.msra.mxu0 %v2292
    %3021 = vmatprep.subr.bf16.mxu0 %v2300
    %3022 = vmatpush1.bf16.msra.mxu0 %v2299
    %3023 = vmatprep.subr.bf16.mxu0 %v2307
    %3024 = vmatpush1.bf16.msra.mxu0 %v2306
    %3025 = vmatprep.subr.bf16.mxu0 %v2314
    %3026 = vmatpush1.bf16.msra.mxu0 %v2313
    %3027 = vmatprep.subr.bf16.mxu0 0
    %3028 = vmatpush1.bf16.msra.mxu0 0
    %3029 = vmatprep.subr.bf16.mxu0 0
    %3030 = vmatpush1.bf16.msra.mxu0 0
    %3031 = vmatprep.subr.bf16.mxu0 0
    %3032 = vmatpush1.bf16.msra.mxu0 0
    %3033 = vmatprep.subr.bf16.mxu0 0
    %3034 = vmatpush1.bf16.msra.mxu0 0
    %3035 = vmatprep.subr.bf16.mxu0 0
    %3036 = vmatpush1.bf16.msra.mxu0 0
    %3037 = vmatprep.subr.bf16.mxu0 0
    %3038 = vmatpush1.bf16.msra.mxu0 0
    %3039 = vmatprep.subr.bf16.mxu0 0
    %3040 = vmatpush1.bf16.msra.mxu0 0
    %3041 = vmatprep.subr.bf16.mxu0 0
    %3042 = vmatpush1.bf16.msra.mxu0 0
    %3043 = vmatprep.mubr.bf16.mxu0 0
    %3044 = vmatmul.mubr.bf16.gmra.mrb[0].mxu0 %v686
    %v3045 = vpop.f32.mrb[0].mxu0
    %v3046 = vadd.f32 %v3003, %v3045
    %v3047 = vpop.f32.mrb[0].mxu0
    %v3048 = vadd.f32 %v3005, %v3047
    %v3049 = vpop.f32.mrb[0].mxu0
    %v3050 = vadd.f32 %v3007, %v3049
    %v3051 = vpop.f32.mrb[0].mxu0
    %v3052 = vadd.f32 %v3009, %v3051
    %3053 = vdwg.mxu0
    %3054 = vmatprep.subr.bf16.mxu0 %v1931
    %3055 = vmatpush1.bf16.msra.mxu0 %v1930
    %3056 = vmatprep.subr.bf16.mxu0 %v1938
    %3057 = vmatpush1.bf16.msra.mxu0 %v1937
    %3058 = vmatprep.subr.bf16.mxu0 %v1945
    %3059 = vmatpush1.bf16.msra.mxu0 %v1944
    %3060 = vmatprep.subr.bf16.mxu0 %v1952
    %3061 = vmatpush1.bf16.msra.mxu0 %v1951
    %3062 = vmatprep.subr.bf16.mxu0 %v1959
    %3063 = vmatpush1.bf16.msra.mxu0 %v1958
    %3064 = vmatprep.subr.bf16.mxu0 %v1966
    %3065 = vmatpush1.bf16.msra.mxu0 %v1965
    %3066 = vmatprep.subr.bf16.mxu0 %v1973
    %3067 = vmatpush1.bf16.msra.mxu0 %v1972
    %3068 = vmatprep.subr.bf16.mxu0 %v1980
    %3069 = vmatpush1.bf16.msra.mxu0 %v1979
    %3070 = vmatprep.subr.bf16.mxu0 %v1987
    %3071 = vmatpush1.bf16.msra.mxu0 %v1986
    %3072 = vmatprep.subr.bf16.mxu0 %v1994
    %3073 = vmatpush1.bf16.msra.mxu0 %v1993
    %3074 = vmatprep.subr.bf16.mxu0 %v2001
    %3075 = vmatpush1.bf16.msra.mxu0 %v2000
    %3076 = vmatprep.subr.bf16.mxu0 %v2008
    %3077 = vmatpush1.bf16.msra.mxu0 %v2007
    %3078 = vmatprep.subr.bf16.mxu0 %v2015
    %3079 = vmatpush1.bf16.msra.mxu0 %v2014
    %3080 = vmatprep.subr.bf16.mxu0 %v2022
    %3081 = vmatpush1.bf16.msra.mxu0 %v2021
    %3082 = vmatprep.subr.bf16.mxu0 %v2029
    %3083 = vmatpush1.bf16.msra.mxu0 %v2028
    %3084 = vmatprep.subr.bf16.mxu0 %v2036
    %3085 = vmatpush1.bf16.msra.mxu0 %v2035
    %3086 = vmatprep.mubr.bf16.mxu0 %v681
    %3087 = vmatmul.mubr.bf16.gmra.mrb[0].mxu0 %v680
    %v3088 = vpop.f32.mrb[0].mxu0
    %v3089 = vadd.f32 %v642, %v3088
    %v3090 = vpop.f32.mrb[0].mxu0
    %v3091 = vadd.f32 %v646, %v3090
    %v3092 = vpop.f32.mrb[0].mxu0
    %v3093 = vadd.f32 %v642, %v3092
    %v3094 = vpop.f32.mrb[0].mxu0
    %v3095 = vadd.f32 %v646, %v3094
    %3096 = vdwg.mxu0
    %3097 = vmatprep.subr.bf16.mxu0 %v2043
    %3098 = vmatpush1.bf16.msra.mxu0 %v2042
    %3099 = vmatprep.subr.bf16.mxu0 %v2050
    %3100 = vmatpush1.bf16.msra.mxu0 %v2049
    %3101 = vmatprep.subr.bf16.mxu0 %v2057
    %3102 = vmatpush1.bf16.msra.mxu0 %v2056
    %3103 = vmatprep.subr.bf16.mxu0 %v2064
    %3104 = vmatpush1.bf16.msra.mxu0 %v2063
    %3105 = vmatprep.subr.bf16.mxu0 %v2071
    %3106 = vmatpush1.bf16.msra.mxu0 %v2070
    %3107 = vmatprep.subr.bf16.mxu0 %v2078
    %3108 = vmatpush1.bf16.msra.mxu0 %v2077
    %3109 = vmatprep.subr.bf16.mxu0 %v2085
    %3110 = vmatpush1.bf16.msra.mxu0 %v2084
    %3111 = vmatprep.subr.bf16.mxu0 %v2092
    %3112 = vmatpush1.bf16.msra.mxu0 %v2091
    %3113 = vmatprep.subr.bf16.mxu0 %v2099
    %3114 = vmatpush1.bf16.msra.mxu0 %v2098
    %3115 = vmatprep.subr.bf16.mxu0 %v2106
    %3116 = vmatpush1.bf16.msra.mxu0 %v2105
    %3117 = vmatprep.subr.bf16.mxu0 %v2113
    %3118 = vmatpush1.bf16.msra.mxu0 %v2112
    %3119 = vmatprep.subr.bf16.mxu0 %v2120
    %3120 = vmatpush1.bf16.msra.mxu0 %v2119
    %3121 = vmatprep.subr.bf16.mxu0 %v2127
    %3122 = vmatpush1.bf16.msra.mxu0 %v2126
    %3123 = vmatprep.subr.bf16.mxu0 %v2134
    %3124 = vmatpush1.bf16.msra.mxu0 %v2133
    %3125 = vmatprep.subr.bf16.mxu0 %v2141
    %3126 = vmatpush1.bf16.msra.mxu0 %v2140
    %3127 = vmatprep.subr.bf16.mxu0 %v2148
    %3128 = vmatpush1.bf16.msra.mxu0 %v2147
    %3129 = vmatprep.mubr.bf16.mxu0 %v683
    %3130 = vmatmul.mubr.bf16.gmra.mrb[0].mxu0 %v682
    %v3131 = vpop.f32.mrb[0].mxu0
    %v3132 = vadd.f32 %v3089, %v3131
    %v3133 = vpop.f32.mrb[0].mxu0
    %v3134 = vadd.f32 %v3091, %v3133
    %v3135 = vpop.f32.mrb[0].mxu0
    %v3136 = vadd.f32 %v3093, %v3135
    %v3137 = vpop.f32.mrb[0].mxu0
    %v3138 = vadd.f32 %v3095, %v3137
    %3139 = vdwg.mxu0
    %3140 = vmatprep.subr.bf16.mxu0 %v2155
    %3141 = vmatpush1.bf16.msra.mxu0 %v2154
    %3142 = vmatprep.subr.bf16.mxu0 %v2162
    %3143 = vmatpush1.bf16.msra.mxu0 %v2161
    %3144 = vmatprep.subr.bf16.mxu0 %v2169
    %3145 = vmatpush1.bf16.msra.mxu0 %v2168
    %3146 = vmatprep.subr.bf16.mxu0 %v2176
    %3147 = vmatpush1.bf16.msra.mxu0 %v2175
    %3148 = vmatprep.subr.bf16.mxu0 %v2183
    %3149 = vmatpush1.bf16.msra.mxu0 %v2182
    %3150 = vmatprep.subr.bf16.mxu0 %v2190
    %3151 = vmatpush1.bf16.msra.mxu0 %v2189
    %3152 = vmatprep.subr.bf16.mxu0 %v2197
    %3153 = vmatpush1.bf16.msra.mxu0 %v2196
    %3154 = vmatprep.subr.bf16.mxu0 %v2204
    %3155 = vmatpush1.bf16.msra.mxu0 %v2203
    %3156 = vmatprep.subr.bf16.mxu0 %v2211
    %3157 = vmatpush1.bf16.msra.mxu0 %v2210
    %3158 = vmatprep.subr.bf16.mxu0 %v2218
    %3159 = vmatpush1.bf16.msra.mxu0 %v2217
    %3160 = vmatprep.subr.bf16.mxu0 %v2225
    %3161 = vmatpush1.bf16.msra.mxu0 %v2224
    %3162 = vmatprep.subr.bf16.mxu0 %v2232
    %3163 = vmatpush1.bf16.msra.mxu0 %v2231
    %3164 = vmatprep.subr.bf16.mxu0 %v2239
    %3165 = vmatpush1.bf16.msra.mxu0 %v2238
    %3166 = vmatprep.subr.bf16.mxu0 %v2246
    %3167 = vmatpush1.bf16.msra.mxu0 %v2245
    %3168 = vmatprep.subr.bf16.mxu0 %v2253
    %3169 = vmatpush1.bf16.msra.mxu0 %v2252
    %3170 = vmatprep.subr.bf16.mxu0 %v2260
    %3171 = vmatpush1.bf16.msra.mxu0 %v2259
    %3172 = vmatprep.mubr.bf16.mxu0 %v685
    %3173 = vmatmul.mubr.bf16.gmra.mrb[0].mxu0 %v684
    %v3174 = vpop.f32.mrb[0].mxu0
    %v3175 = vadd.f32 %v3132, %v3174
    %v3176 = vpop.f32.mrb[0].mxu0
    %v3177 = vadd.f32 %v3134, %v3176
    %v3178 = vpop.f32.mrb[0].mxu0
    %v3179 = vadd.f32 %v3136, %v3178
    %v3180 = vpop.f32.mrb[0].mxu0
    %v3181 = vadd.f32 %v3138, %v3180
    %3182 = vdwg.mxu0
    %3183 = vmatprep.subr.bf16.mxu0 %v2267
    %3184 = vmatpush1.bf16.msra.mxu0 %v2266
    %3185 = vmatprep.subr.bf16.mxu0 %v2274
    %3186 = vmatpush1.bf16.msra.mxu0 %v2273
    %3187 = vmatprep.subr.bf16.mxu0 %v2281
    %3188 = vmatpush1.bf16.msra.mxu0 %v2280
    %3189 = vmatprep.subr.bf16.mxu0 %v2288
    %3190 = vmatpush1.bf16.msra.mxu0 %v2287
    %3191 = vmatprep.subr.bf16.mxu0 %v2295
    %3192 = vmatpush1.bf16.msra.mxu0 %v2294
    %3193 = vmatprep.subr.bf16.mxu0 %v2302
    %3194 = vmatpush1.bf16.msra.mxu0 %v2301
    %3195 = vmatprep.subr.bf16.mxu0 %v2309
    %3196 = vmatpush1.bf16.msra.mxu0 %v2308
    %3197 = vmatprep.subr.bf16.mxu0 %v2316
    %3198 = vmatpush1.bf16.msra.mxu0 %v2315
    %3199 = vmatprep.subr.bf16.mxu0 0
    %3200 = vmatpush1.bf16.msra.mxu0 0
    %3201 = vmatprep.subr.bf16.mxu0 0
    %3202 = vmatpush1.bf16.msra.mxu0 0
    %3203 = vmatprep.subr.bf16.mxu0 0
    %3204 = vmatpush1.bf16.msra.mxu0 0
    %3205 = vmatprep.subr.bf16.mxu0 0
    %3206 = vmatpush1.bf16.msra.mxu0 0
    %3207 = vmatprep.subr.bf16.mxu0 0
    %3208 = vmatpush1.bf16.msra.mxu0 0
    %3209 = vmatprep.subr.bf16.mxu0 0
    %3210 = vmatpush1.bf16.msra.mxu0 0
    %3211 = vmatprep.subr.bf16.mxu0 0
    %3212 = vmatpush1.bf16.msra.mxu0 0
    %3213 = vmatprep.subr.bf16.mxu0 0
    %3214 = vmatpush1.bf16.msra.mxu0 0
    %3215 = vmatprep.mubr.bf16.mxu0 0
    %3216 = vmatmul.mubr.bf16.gmra.mrb[0].mxu0 %v686
    %v3217 = vpop.f32.mrb[0].mxu0
    %v3218 = vadd.f32 %v3175, %v3217
    %v3219 = vpop.f32.mrb[0].mxu0
    %v3220 = vadd.f32 %v3177, %v3219
    %v3221 = vpop.f32.mrb[0].mxu0
    %v3222 = vadd.f32 %v3179, %v3221
    %v3223 = vpop.f32.mrb[0].mxu0
    %v3224 = vadd.f32 %v3181, %v3223
    %3225 = vdwg.mxu0
    %3226 = vmatprep.subr.bf16.mxu0 0
    %3227 = vmatpush1.bf16.msra.mxu0 %v1932
    %3228 = vmatprep.subr.bf16.mxu0 0
    %3229 = vmatpush1.bf16.msra.mxu0 %v1939
    %3230 = vmatprep.subr.bf16.mxu0 0
    %3231 = vmatpush1.bf16.msra.mxu0 %v1946
    %3232 = vmatprep.subr.bf16.mxu0 0
    %3233 = vmatpush1.bf16.msra.mxu0 %v1953
    %3234 = vmatprep.subr.bf16.mxu0 0
    %3235 = vmatpush1.bf16.msra.mxu0 %v1960
    %3236 = vmatprep.subr.bf16.mxu0 0
    %3237 = vmatpush1.bf16.msra.mxu0 %v1967
    %3238 = vmatprep.subr.bf16.mxu0 0
    %3239 = vmatpush1.bf16.msra.mxu0 %v1974
    %3240 = vmatprep.subr.bf16.mxu0 0
    %3241 = vmatpush1.bf16.msra.mxu0 %v1981
    %3242 = vmatprep.subr.bf16.mxu0 0
    %3243 = vmatpush1.bf16.msra.mxu0 %v1988
    %3244 = vmatprep.subr.bf16.mxu0 0
    %3245 = vmatpush1.bf16.msra.mxu0 %v1995
    %3246 = vmatprep.subr.bf16.mxu0 0
    %3247 = vmatpush1.bf16.msra.mxu0 %v2002
    %3248 = vmatprep.subr.bf16.mxu0 0
    %3249 = vmatpush1.bf16.msra.mxu0 %v2009
    %3250 = vmatprep.subr.bf16.mxu0 0
    %3251 = vmatpush1.bf16.msra.mxu0 %v2016
    %3252 = vmatprep.subr.bf16.mxu0 0
    %3253 = vmatpush1.bf16.msra.mxu0 %v2023
    %3254 = vmatprep.subr.bf16.mxu0 0
    %3255 = vmatpush1.bf16.msra.mxu0 %v2030
    %3256 = vmatprep.subr.bf16.mxu0 0
    %3257 = vmatpush1.bf16.msra.mxu0 %v2037
    %3258 = vmatprep.mubr.bf16.mxu0 %v681
    %3259 = vmatmul.mubr.bf16.gmra.mrb[0].mxu0 %v680
    %v3260 = vpop.f32.mrb[0].mxu0
    %v3261 = vadd.f32 %v650, %v3260
    %v3262 = vpop.f32.mrb[0].mxu0
    %v3263 = vpop.f32.mrb[0].mxu0
    %v3264 = vadd.f32 %v650, %v3263
    %v3265 = vpop.f32.mrb[0].mxu0
    %3266 = vdwg.mxu0
    %3267 = vmatprep.subr.bf16.mxu0 0
    %3268 = vmatpush1.bf16.msra.mxu0 %v2044
    %3269 = vmatprep.subr.bf16.mxu0 0
    %3270 = vmatpush1.bf16.msra.mxu0 %v2051
    %3271 = vmatprep.subr.bf16.mxu0 0
    %3272 = vmatpush1.bf16.msra.mxu0 %v2058
    %3273 = vmatprep.subr.bf16.mxu0 0
    %3274 = vmatpush1.bf16.msra.mxu0 %v2065
    %3275 = vmatprep.subr.bf16.mxu0 0
    %3276 = vmatpush1.bf16.msra.mxu0 %v2072
    %3277 = vmatprep.subr.bf16.mxu0 0
    %3278 = vmatpush1.bf16.msra.mxu0 %v2079
    %3279 = vmatprep.subr.bf16.mxu0 0
    %3280 = vmatpush1.bf16.msra.mxu0 %v2086
    %3281 = vmatprep.subr.bf16.mxu0 0
    %3282 = vmatpush1.bf16.msra.mxu0 %v2093
    %3283 = vmatprep.subr.bf16.mxu0 0
    %3284 = vmatpush1.bf16.msra.mxu0 %v2100
    %3285 = vmatprep.subr.bf16.mxu0 0
    %3286 = vmatpush1.bf16.msra.mxu0 %v2107
    %3287 = vmatprep.subr.bf16.mxu0 0
    %3288 = vmatpush1.bf16.msra.mxu0 %v2114
    %3289 = vmatprep.subr.bf16.mxu0 0
    %3290 = vmatpush1.bf16.msra.mxu0 %v2121
    %3291 = vmatprep.subr.bf16.mxu0 0
    %3292 = vmatpush1.bf16.msra.mxu0 %v2128
    %3293 = vmatprep.subr.bf16.mxu0 0
    %3294 = vmatpush1.bf16.msra.mxu0 %v2135
    %3295 = vmatprep.subr.bf16.mxu0 0
    %3296 = vmatpush1.bf16.msra.mxu0 %v2142
    %3297 = vmatprep.subr.bf16.mxu0 0
    %3298 = vmatpush1.bf16.msra.mxu0 %v2149
    %3299 = vmatprep.mubr.bf16.mxu0 %v683
    %3300 = vmatmul.mubr.bf16.gmra.mrb[0].mxu0 %v682
    %v3301 = vpop.f32.mrb[0].mxu0
    %v3302 = vadd.f32 %v3261, %v3301
    %v3303 = vpop.f32.mrb[0].mxu0
    %v3304 = vpop.f32.mrb[0].mxu0
    %v3305 = vadd.f32 %v3264, %v3304
    %v3306 = vpop.f32.mrb[0].mxu0
    %3307 = vdwg.mxu0
    %3308 = vmatprep.subr.bf16.mxu0 0
    %3309 = vmatpush1.bf16.msra.mxu0 %v2156
    %3310 = vmatprep.subr.bf16.mxu0 0
    %3311 = vmatpush1.bf16.msra.mxu0 %v2163
    %3312 = vmatprep.subr.bf16.mxu0 0
    %3313 = vmatpush1.bf16.msra.mxu0 %v2170
    %3314 = vmatprep.subr.bf16.mxu0 0
    %3315 = vmatpush1.bf16.msra.mxu0 %v2177
    %3316 = vmatprep.subr.bf16.mxu0 0
    %3317 = vmatpush1.bf16.msra.mxu0 %v2184
    %3318 = vmatprep.subr.bf16.mxu0 0
    %3319 = vmatpush1.bf16.msra.mxu0 %v2191
    %3320 = vmatprep.subr.bf16.mxu0 0
    %3321 = vmatpush1.bf16.msra.mxu0 %v2198
    %3322 = vmatprep.subr.bf16.mxu0 0
    %3323 = vmatpush1.bf16.msra.mxu0 %v2205
    %3324 = vmatprep.subr.bf16.mxu0 0
    %3325 = vmatpush1.bf16.msra.mxu0 %v2212
    %3326 = vmatprep.subr.bf16.mxu0 0
    %3327 = vmatpush1.bf16.msra.mxu0 %v2219
    %3328 = vmatprep.subr.bf16.mxu0 0
    %3329 = vmatpush1.bf16.msra.mxu0 %v2226
    %3330 = vmatprep.subr.bf16.mxu0 0
    %3331 = vmatpush1.bf16.msra.mxu0 %v2233
    %3332 = vmatprep.subr.bf16.mxu0 0
    %3333 = vmatpush1.bf16.msra.mxu0 %v2240
    %3334 = vmatprep.subr.bf16.mxu0 0
    %3335 = vmatpush1.bf16.msra.mxu0 %v2247
    %3336 = vmatprep.subr.bf16.mxu0 0
    %3337 = vmatpush1.bf16.msra.mxu0 %v2254
    %3338 = vmatprep.subr.bf16.mxu0 0
    %3339 = vmatpush1.bf16.msra.mxu0 %v2261
    %3340 = vmatprep.mubr.bf16.mxu0 %v685
    %3341 = vmatmul.mubr.bf16.gmra.mrb[0].mxu0 %v684
    %v3342 = vpop.f32.mrb[0].mxu0
    %v3343 = vadd.f32 %v3302, %v3342
    %v3344 = vpop.f32.mrb[0].mxu0
    %v3345 = vpop.f32.mrb[0].mxu0
    %v3346 = vadd.f32 %v3305, %v3345
    %v3347 = vpop.f32.mrb[0].mxu0
    %3348 = vdwg.mxu0
    %3349 = vmatprep.subr.bf16.mxu0 0
    %3350 = vmatpush1.bf16.msra.mxu0 %v2268
    %3351 = vmatprep.subr.bf16.mxu0 0
    %3352 = vmatpush1.bf16.msra.mxu0 %v2275
    %3353 = vmatprep.subr.bf16.mxu0 0
    %3354 = vmatpush1.bf16.msra.mxu0 %v2282
    %3355 = vmatprep.subr.bf16.mxu0 0
    %3356 = vmatpush1.bf16.msra.mxu0 %v2289
    %3357 = vmatprep.subr.bf16.mxu0 0
    %3358 = vmatpush1.bf16.msra.mxu0 %v2296
    %3359 = vmatprep.subr.bf16.mxu0 0
    %3360 = vmatpush1.bf16.msra.mxu0 %v2303
    %3361 = vmatprep.subr.bf16.mxu0 0
    %3362 = vmatpush1.bf16.msra.mxu0 %v2310
    %3363 = vmatprep.subr.bf16.mxu0 0
    %3364 = vmatpush1.bf16.msra.mxu0 %v2317
    %3365 = vmatprep.subr.bf16.mxu0 0
    %3366 = vmatpush1.bf16.msra.mxu0 0
    %3367 = vmatprep.subr.bf16.mxu0 0
    %3368 = vmatpush1.bf16.msra.mxu0 0
    %3369 = vmatprep.subr.bf16.mxu0 0
    %3370 = vmatpush1.bf16.msra.mxu0 0
    %3371 = vmatprep.subr.bf16.mxu0 0
    %3372 = vmatpush1.bf16.msra.mxu0 0
    %3373 = vmatprep.subr.bf16.mxu0 0
    %3374 = vmatpush1.bf16.msra.mxu0 0
    %3375 = vmatprep.subr.bf16.mxu0 0
    %3376 = vmatpush1.bf16.msra.mxu0 0
    %3377 = vmatprep.subr.bf16.mxu0 0
    %3378 = vmatpush1.bf16.msra.mxu0 0
    %3379 = vmatprep.subr.bf16.mxu0 0
    %3380 = vmatpush1.bf16.msra.mxu0 0
    %3381 = vmatprep.mubr.bf16.mxu0 0
    %3382 = vmatmul.mubr.bf16.gmra.mrb[0].mxu0 %v686
    %v3383 = vpop.f32.mrb[0].mxu0
    %v3384 = vadd.f32 %v3343, %v3383
    %v3385 = vpop.f32.mrb[0].mxu0
    %v3386 = vpop.f32.mrb[0].mxu0
    %v3387 = vadd.f32 %v3346, %v3386
    %v3388 = vpop.f32.mrb[0].mxu0
    %3389 = vdwg.mxu0
    %v3390 = vmax.f32 %v2874, 0.0
    %v3391 = vmax.f32 %v2876, 0.0
    %v3392 = vmax.f32 %v3046, 0.0
    %v3393 = vmax.f32 %v3048, 0.0
    %v3394 = vmax.f32 %v3218, 0.0
    %v3395 = vmax.f32 %v3220, 0.0
    %v3396 = vmax.f32 %v3384, 0.0
    %v3397 = vmax.f32 %v2878, 0.0
    %v3398 = vmax.f32 %v2880, 0.0
    %v3399 = vmax.f32 %v3050, 0.0
    %v3400 = vmax.f32 %v3052, 0.0
    %v3401 = vmax.f32 %v3222, 0.0
    %v3402 = vmax.f32 %v3224, 0.0
    %v3403 = vmax.f32 %v3387, 0.0
    %v3404 = vpack.c.bf16 %v3397, %v3390
    %v3405 = vpack.c.bf16 %v3398, %v3391
    %v3406 = vpack.c.bf16 %v3399, %v3392
    %v3407 = vpack.c.bf16 %v3400, %v3393
    %v3408 = vpack.c.bf16 %v3401, %v3394
    %v3409 = vpack.c.bf16 %v3402, %v3395
    %v3410 = vpack.c.bf16 %v3403, %v3396
    %v3411 = vld [vmem:[#allocation6] sm:$0xff]
    %v3412 = vld [vmem:[#allocation6 + $0x8] sm:$0xff]
    %v3413 = vld [vmem:[#allocation6 + $0x10] sm:$0xff]
    %v3414 = vld [vmem:[#allocation6 + $0x18] sm:$0xff]
    %v3415 = vld [vmem:[#allocation6 + $0x20] sm:$0xff]
    %v3416 = vld [vmem:[#allocation6 + $0x28] sm:$0xff]
    %v3417 = vld [vmem:[#allocation6 + $0x30] sm:$0xff]
    %v3418 = vld [vmem:[#allocation6 + $0x38] sm:$0xff]
    %v3419 = vld [vmem:[#allocation6 + $0x40] sm:$0xff]
    %v3420 = vld [vmem:[#allocation6 + $0x48] sm:$0xff]
    %v3421 = vld [vmem:[#allocation6 + $0x50] sm:$0xff]
    %v3422 = vld [vmem:[#allocation6 + $0x58] sm:$0xff]
    %v3423 = vld [vmem:[#allocation6 + $0x60] sm:$0xff]
    %v3424 = vld [vmem:[#allocation6 + $0x68] sm:$0xff]
    %v3425 = vld [vmem:[#allocation6 + $0x70] sm:$0xff]
    %v3426 = vld [vmem:[#allocation6 + $0x78] sm:$0xff]
    %v3427 = vld [vmem:[#allocation6 + $0x80] sm:$0xff]
    %v3428 = vld [vmem:[#allocation6 + $0x88] sm:$0xff]
    %v3429 = vld [vmem:[#allocation6 + $0x90] sm:$0xff]
    %v3430 = vld [vmem:[#allocation6 + $0x98] sm:$0xff]
    %v3431 = vld [vmem:[#allocation6 + $0xa0] sm:$0xff]
    %v3432 = vld [vmem:[#allocation6 + $0xa8] sm:$0xff]
    %v3433 = vld [vmem:[#allocation6 + $0xb0] sm:$0xff]
    %v3434 = vld [vmem:[#allocation6 + $0xb8] sm:$0xff]
    %v3435 = vld [vmem:[#allocation6 + $0xc0] sm:$0xff]
    %v3436 = vld [vmem:[#allocation6 + $0xc8] sm:$0xff]
    %v3437 = vld [vmem:[#allocation6 + $0xd0] sm:$0xff]
    %v3438 = vld [vmem:[#allocation6 + $0xd8] sm:$0xff]
    %v3439 = vld [vmem:[#allocation6 + $0xe0] sm:$0xff]
    %v3440 = vld [vmem:[#allocation6 + $0xe8] sm:$0xff]
    %v3441 = vld [vmem:[#allocation6 + $0xf0] sm:$0xff]
    %v3442 = vld [vmem:[#allocation6 + $0xf8] sm:$0xff]
    %v3443 = vld [vmem:[#allocation6 + $0x100] sm:$0xff]
    %v3444 = vld [vmem:[#allocation6 + $0x108] sm:$0xff]
    %v3445 = vld [vmem:[#allocation6 + $0x110] sm:$0xff]
    %v3446 = vld [vmem:[#allocation6 + $0x118] sm:$0xff]
    %v3447 = vld [vmem:[#allocation6 + $0x120] sm:$0xff]
    %v3448 = vld [vmem:[#allocation6 + $0x128] sm:$0xff]
    %v3449 = vld [vmem:[#allocation6 + $0x130] sm:$0xff]
    %v3450 = vld [vmem:[#allocation6 + $0x138] sm:$0xff]
    %v3451 = vld [vmem:[#allocation6 + $0x140] sm:$0xff]
    %v3452 = vld [vmem:[#allocation6 + $0x148] sm:$0xff]
    %v3453 = vld [vmem:[#allocation6 + $0x150] sm:$0xff]
    %v3454 = vld [vmem:[#allocation6 + $0x158] sm:$0xff]
    %v3455 = vld [vmem:[#allocation6 + $0x160] sm:$0xff]
    %v3456 = vld [vmem:[#allocation6 + $0x168] sm:$0xff]
    %v3457 = vld [vmem:[#allocation6 + $0x170] sm:$0xff]
    %v3458 = vld [vmem:[#allocation6 + $0x178] sm:$0xff]
    %v3459 = vld [vmem:[#allocation6 + $0x180] sm:$0xff]
    %v3460 = vld [vmem:[#allocation6 + $0x188] sm:$0xff]
    %v3461 = vld [vmem:[#allocation6 + $0x190] sm:$0xff]
    %v3462 = vld [vmem:[#allocation6 + $0x198] sm:$0xff]
    %v3463 = vld [vmem:[#allocation6 + $0x1a0] sm:$0xff]
    %v3464 = vld [vmem:[#allocation6 + $0x1a8] sm:$0xff]
    %v3465 = vld [vmem:[#allocation6 + $0x1b0] sm:$0xff]
    %v3466 = vld [vmem:[#allocation6 + $0x1b8] sm:$0xff]
    %v3467 = vld [vmem:[#allocation6 + $0x1c0] sm:$0xff]
    %v3468 = vld [vmem:[#allocation6 + $0x1c8] sm:$0xff]
    %v3469 = vld [vmem:[#allocation6 + $0x1d0] sm:$0xff]
    %v3470 = vld [vmem:[#allocation6 + $0x1d8] sm:$0xff]
    %v3471 = vld [vmem:[#allocation6 + $0x1e0] sm:$0xff]
    %v3472 = vld [vmem:[#allocation6 + $0x1e8] sm:$0xff]
    %v3473 = vld [vmem:[#allocation6 + $0x1f0] sm:$0xff]
    %v3474 = vld [vmem:[#allocation6 + $0x1f8] sm:$0xff]
    %v3475 = vld [vmem:[#allocation6 + $0x200] sm:$0xff]
    %v3476 = vld [vmem:[#allocation6 + $0x208] sm:$0xff]
    %v3477 = vld [vmem:[#allocation6 + $0x210] sm:$0xff]
    %v3478 = vld [vmem:[#allocation6 + $0x218] sm:$0xff]
    %v3479 = vld [vmem:[#allocation6 + $0x220] sm:$0xff]
    %v3480 = vld [vmem:[#allocation6 + $0x228] sm:$0xff]
    %v3481 = vld [vmem:[#allocation6 + $0x230] sm:$0xff]
    %v3482 = vld [vmem:[#allocation6 + $0x238] sm:$0xff]
    %v3483 = vld [vmem:[#allocation6 + $0x240] sm:$0xff]
    %v3484 = vld [vmem:[#allocation6 + $0x248] sm:$0xff]
    %v3485 = vld [vmem:[#allocation6 + $0x250] sm:$0xff]
    %v3486 = vld [vmem:[#allocation6 + $0x258] sm:$0xff]
    %v3487 = vld [vmem:[#allocation6 + $0x260] sm:$0xff]
    %v3488 = vld [vmem:[#allocation6 + $0x268] sm:$0xff]
    %v3489 = vld [vmem:[#allocation6 + $0x270] sm:$0xff]
    %v3490 = vld [vmem:[#allocation6 + $0x278] sm:$0xff]
    %v3491 = vld [vmem:[#allocation6 + $0x280] sm:$0xff]
    %v3492 = vld [vmem:[#allocation6 + $0x288] sm:$0xff]
    %v3493 = vld [vmem:[#allocation6 + $0x290] sm:$0xff]
    %v3494 = vld [vmem:[#allocation6 + $0x298] sm:$0xff]
    %v3495 = vld [vmem:[#allocation6 + $0x2a0] sm:$0xff]
    %v3496 = vld [vmem:[#allocation6 + $0x2a8] sm:$0xff]
    %v3497 = vld [vmem:[#allocation6 + $0x2b0] sm:$0xff]
    %v3498 = vld [vmem:[#allocation6 + $0x2b8] sm:$0xff]
    %v3499 = vld [vmem:[#allocation6 + $0x2c0] sm:$0xff]
    %v3500 = vld [vmem:[#allocation6 + $0x2c8] sm:$0xff]
    %v3501 = vld [vmem:[#allocation6 + $0x2d0] sm:$0xff]
    %v3502 = vld [vmem:[#allocation6 + $0x2d8] sm:$0xff]
    %v3503 = vld [vmem:[#allocation6 + $0x2e0] sm:$0xff]
    %v3504 = vld [vmem:[#allocation6 + $0x2e8] sm:$0xff]
    %v3505 = vld [vmem:[#allocation6 + $0x2f0] sm:$0xff]
    %v3506 = vld [vmem:[#allocation6 + $0x2f8] sm:$0xff]
    %v3507 = vld [vmem:[#allocation6 + $0x300] sm:$0xff]
    %v3508 = vld [vmem:[#allocation6 + $0x308] sm:$0xff]
    %v3509 = vld [vmem:[#allocation6 + $0x310] sm:$0xff]
    %v3510 = vld [vmem:[#allocation6 + $0x318] sm:$0xff]
    %v3511 = vld [vmem:[#allocation6 + $0x320] sm:$0xff]
    %v3512 = vld [vmem:[#allocation6 + $0x328] sm:$0xff]
    %v3513 = vld [vmem:[#allocation6 + $0x330] sm:$0xff]
    %v3514 = vld [vmem:[#allocation6 + $0x338] sm:$0xff]
    %v3515 = vld [vmem:[#allocation6 + $0x340] sm:$0xff]
    %v3516 = vld [vmem:[#allocation6 + $0x348] sm:$0xff]
    %v3517 = vld [vmem:[#allocation6 + $0x350] sm:$0xff]
    %v3518 = vld [vmem:[#allocation6 + $0x358] sm:$0xff]
    %v3519 = vld [vmem:[#allocation6 + $0x360] sm:$0xff]
    %v3520 = vld [vmem:[#allocation6 + $0x368] sm:$0xff]
    %v3521 = vld [vmem:[#allocation6 + $0x370] sm:$0xff]
    %v3522 = vld [vmem:[#allocation6 + $0x378] sm:$0xff]
    %v3523 = vld [vmem:[#allocation7] sm:$0x3]
    %v3525 = vlaneseq
    %v3526 = vshrl.u32 %v3525, 7
    %v3527 = vsub.s32 0, %v3526
    %v3528 = vrot.slane %v3523, %v3527
    %v3529 = vlaneseq
    %v3530 = vshrl.u32 %v3529, 7
    %v3531 = vsub.s32 1, %v3530
    %v3532 = vrot.slane %v3523, %v3531
    %v3647 = vunpack.c.l.b16 %v3411
    %v3648 = vunpack.c.h.b16 %v3411
    %v3649 = vunpack.c.l.b16 %v3412
    %v3650 = vunpack.c.h.b16 %v3412
    %v3651 = vunpack.c.l.b16 %v3413
    %v3652 = vunpack.c.h.b16 %v3413
    %v3653 = vunpack.c.l.b16 %v3414
    %v3654 = vunpack.c.h.b16 %v3414
    %v3655 = vunpack.c.l.b16 %v3415
    %v3656 = vunpack.c.h.b16 %v3415
    %v3657 = vunpack.c.l.b16 %v3416
    %v3658 = vunpack.c.h.b16 %v3416
    %v3659 = vunpack.c.l.b16 %v3417
    %v3660 = vunpack.c.h.b16 %v3417
    %v3661 = vunpack.c.l.b16 %v3418
    %v3662 = vunpack.c.h.b16 %v3418
    %v3663 = vunpack.c.l.b16 %v3419
    %v3664 = vunpack.c.h.b16 %v3419
    %v3665 = vunpack.c.l.b16 %v3420
    %v3666 = vunpack.c.h.b16 %v3420
    %v3667 = vunpack.c.l.b16 %v3421
    %v3668 = vunpack.c.h.b16 %v3421
    %v3669 = vunpack.c.l.b16 %v3422
    %v3670 = vunpack.c.h.b16 %v3422
    %v3671 = vunpack.c.l.b16 %v3423
    %v3672 = vunpack.c.h.b16 %v3423
    %v3673 = vunpack.c.l.b16 %v3424
    %v3674 = vunpack.c.h.b16 %v3424
    %v3675 = vunpack.c.l.b16 %v3425
    %v3676 = vunpack.c.h.b16 %v3425
    %v3677 = vunpack.c.l.b16 %v3426
    %v3678 = vunpack.c.h.b16 %v3426
    %v3679 = vunpack.c.l.b16 %v3427
    %v3680 = vunpack.c.h.b16 %v3427
    %v3681 = vunpack.c.l.b16 %v3428
    %v3682 = vunpack.c.h.b16 %v3428
    %v3683 = vunpack.c.l.b16 %v3429
    %v3684 = vunpack.c.h.b16 %v3429
    %v3685 = vunpack.c.l.b16 %v3430
    %v3686 = vunpack.c.h.b16 %v3430
    %v3687 = vunpack.c.l.b16 %v3431
    %v3688 = vunpack.c.h.b16 %v3431
    %v3689 = vunpack.c.l.b16 %v3432
    %v3690 = vunpack.c.h.b16 %v3432
    %v3691 = vunpack.c.l.b16 %v3433
    %v3692 = vunpack.c.h.b16 %v3433
    %v3693 = vunpack.c.l.b16 %v3434
    %v3694 = vunpack.c.h.b16 %v3434
    %v3695 = vunpack.c.l.b16 %v3435
    %v3696 = vunpack.c.h.b16 %v3435
    %v3697 = vunpack.c.l.b16 %v3436
    %v3698 = vunpack.c.h.b16 %v3436
    %v3699 = vunpack.c.l.b16 %v3437
    %v3700 = vunpack.c.h.b16 %v3437
    %v3701 = vunpack.c.l.b16 %v3438
    %v3702 = vunpack.c.h.b16 %v3438
    %v3703 = vunpack.c.l.b16 %v3439
    %v3704 = vunpack.c.h.b16 %v3439
    %v3705 = vunpack.c.l.b16 %v3440
    %v3706 = vunpack.c.h.b16 %v3440
    %v3707 = vunpack.c.l.b16 %v3441
    %v3708 = vunpack.c.h.b16 %v3441
    %v3709 = vunpack.c.l.b16 %v3442
    %v3710 = vunpack.c.h.b16 %v3442
    %v3711 = vunpack.c.l.b16 %v3443
    %v3712 = vunpack.c.h.b16 %v3443
    %v3713 = vunpack.c.l.b16 %v3444
    %v3714 = vunpack.c.h.b16 %v3444
    %v3715 = vunpack.c.l.b16 %v3445
    %v3716 = vunpack.c.h.b16 %v3445
    %v3717 = vunpack.c.l.b16 %v3446
    %v3718 = vunpack.c.h.b16 %v3446
    %v3719 = vunpack.c.l.b16 %v3447
    %v3720 = vunpack.c.h.b16 %v3447
    %v3721 = vunpack.c.l.b16 %v3448
    %v3722 = vunpack.c.h.b16 %v3448
    %v3723 = vunpack.c.l.b16 %v3449
    %v3724 = vunpack.c.h.b16 %v3449
    %v3725 = vunpack.c.l.b16 %v3450
    %v3726 = vunpack.c.h.b16 %v3450
    %v3727 = vunpack.c.l.b16 %v3451
    %v3728 = vunpack.c.h.b16 %v3451
    %v3729 = vunpack.c.l.b16 %v3452
    %v3730 = vunpack.c.h.b16 %v3452
    %v3731 = vunpack.c.l.b16 %v3453
    %v3732 = vunpack.c.h.b16 %v3453
    %v3733 = vunpack.c.l.b16 %v3454
    %v3734 = vunpack.c.h.b16 %v3454
    %v3735 = vunpack.c.l.b16 %v3455
    %v3736 = vunpack.c.h.b16 %v3455
    %v3737 = vunpack.c.l.b16 %v3456
    %v3738 = vunpack.c.h.b16 %v3456
    %v3739 = vunpack.c.l.b16 %v3457
    %v3740 = vunpack.c.h.b16 %v3457
    %v3741 = vunpack.c.l.b16 %v3458
    %v3742 = vunpack.c.h.b16 %v3458
    %v3743 = vunpack.c.l.b16 %v3459
    %v3744 = vunpack.c.h.b16 %v3459
    %v3745 = vunpack.c.l.b16 %v3460
    %v3746 = vunpack.c.h.b16 %v3460
    %v3747 = vunpack.c.l.b16 %v3461
    %v3748 = vunpack.c.h.b16 %v3461
    %v3749 = vunpack.c.l.b16 %v3462
    %v3750 = vunpack.c.h.b16 %v3462
    %v3751 = vunpack.c.l.b16 %v3463
    %v3752 = vunpack.c.h.b16 %v3463
    %v3753 = vunpack.c.l.b16 %v3464
    %v3754 = vunpack.c.h.b16 %v3464
    %v3755 = vunpack.c.l.b16 %v3465
    %v3756 = vunpack.c.h.b16 %v3465
    %v3757 = vunpack.c.l.b16 %v3466
    %v3758 = vunpack.c.h.b16 %v3466
    %v3759 = vunpack.c.l.b16 %v3467
    %v3760 = vunpack.c.h.b16 %v3467
    %v3761 = vunpack.c.l.b16 %v3468
    %v3762 = vunpack.c.h.b16 %v3468
    %v3763 = vunpack.c.l.b16 %v3469
    %v3764 = vunpack.c.h.b16 %v3469
    %v3765 = vunpack.c.l.b16 %v3470
    %v3766 = vunpack.c.h.b16 %v3470
    %v3767 = vunpack.c.l.b16 %v3471
    %v3768 = vunpack.c.h.b16 %v3471
    %v3769 = vunpack.c.l.b16 %v3472
    %v3770 = vunpack.c.h.b16 %v3472
    %v3771 = vunpack.c.l.b16 %v3473
    %v3772 = vunpack.c.h.b16 %v3473
    %v3773 = vunpack.c.l.b16 %v3474
    %v3774 = vunpack.c.h.b16 %v3474
    %v3775 = vunpack.c.l.b16 %v3475
    %v3776 = vunpack.c.h.b16 %v3475
    %v3777 = vunpack.c.l.b16 %v3476
    %v3778 = vunpack.c.h.b16 %v3476
    %v3779 = vunpack.c.l.b16 %v3477
    %v3780 = vunpack.c.h.b16 %v3477
    %v3781 = vunpack.c.l.b16 %v3478
    %v3782 = vunpack.c.h.b16 %v3478
    %v3783 = vunpack.c.l.b16 %v3479
    %v3784 = vunpack.c.h.b16 %v3479
    %v3785 = vunpack.c.l.b16 %v3480
    %v3786 = vunpack.c.h.b16 %v3480
    %v3787 = vunpack.c.l.b16 %v3481
    %v3788 = vunpack.c.h.b16 %v3481
    %v3789 = vunpack.c.l.b16 %v3482
    %v3790 = vunpack.c.h.b16 %v3482
    %v3791 = vunpack.c.l.b16 %v3483
    %v3792 = vunpack.c.h.b16 %v3483
    %v3793 = vunpack.c.l.b16 %v3484
    %v3794 = vunpack.c.h.b16 %v3484
    %v3795 = vunpack.c.l.b16 %v3485
    %v3796 = vunpack.c.h.b16 %v3485
    %v3797 = vunpack.c.l.b16 %v3486
    %v3798 = vunpack.c.h.b16 %v3486
    %v3799 = vunpack.c.l.b16 %v3487
    %v3800 = vunpack.c.h.b16 %v3487
    %v3801 = vunpack.c.l.b16 %v3488
    %v3802 = vunpack.c.h.b16 %v3488
    %v3803 = vunpack.c.l.b16 %v3489
    %v3804 = vunpack.c.h.b16 %v3489
    %v3805 = vunpack.c.l.b16 %v3490
    %v3806 = vunpack.c.h.b16 %v3490
    %v3807 = vunpack.c.l.b16 %v3491
    %v3808 = vunpack.c.h.b16 %v3491
    %v3809 = vunpack.c.l.b16 %v3492
    %v3810 = vunpack.c.h.b16 %v3492
    %v3811 = vunpack.c.l.b16 %v3493
    %v3812 = vunpack.c.h.b16 %v3493
    %v3813 = vunpack.c.l.b16 %v3494
    %v3814 = vunpack.c.h.b16 %v3494
    %v3815 = vunpack.c.l.b16 %v3495
    %v3816 = vunpack.c.h.b16 %v3495
    %v3817 = vunpack.c.l.b16 %v3496
    %v3818 = vunpack.c.h.b16 %v3496
    %v3819 = vunpack.c.l.b16 %v3497
    %v3820 = vunpack.c.h.b16 %v3497
    %v3821 = vunpack.c.l.b16 %v3498
    %v3822 = vunpack.c.h.b16 %v3498
    %v3823 = vunpack.c.l.b16 %v3499
    %v3824 = vunpack.c.h.b16 %v3499
    %v3825 = vunpack.c.l.b16 %v3500
    %v3826 = vunpack.c.h.b16 %v3500
    %v3827 = vunpack.c.l.b16 %v3501
    %v3828 = vunpack.c.h.b16 %v3501
    %v3829 = vunpack.c.l.b16 %v3502
    %v3830 = vunpack.c.h.b16 %v3502
    %v3831 = vunpack.c.l.b16 %v3503
    %v3832 = vunpack.c.h.b16 %v3503
    %v3833 = vunpack.c.l.b16 %v3504
    %v3834 = vunpack.c.h.b16 %v3504
    %v3835 = vunpack.c.l.b16 %v3505
    %v3836 = vunpack.c.h.b16 %v3505
    %v3837 = vunpack.c.l.b16 %v3506
    %v3838 = vunpack.c.h.b16 %v3506
    %v3839 = vunpack.c.l.b16 %v3507
    %v3840 = vunpack.c.h.b16 %v3507
    %v3841 = vunpack.c.l.b16 %v3508
    %v3842 = vunpack.c.h.b16 %v3508
    %v3843 = vunpack.c.l.b16 %v3509
    %v3844 = vunpack.c.h.b16 %v3509
    %v3845 = vunpack.c.l.b16 %v3510
    %v3846 = vunpack.c.h.b16 %v3510
    %v3847 = vunpack.c.l.b16 %v3511
    %v3848 = vunpack.c.h.b16 %v3511
    %v3849 = vunpack.c.l.b16 %v3512
    %v3850 = vunpack.c.h.b16 %v3512
    %v3851 = vunpack.c.l.b16 %v3513
    %v3852 = vunpack.c.h.b16 %v3513
    %v3853 = vunpack.c.l.b16 %v3514
    %v3854 = vunpack.c.h.b16 %v3514
    %v3855 = vunpack.c.l.b16 %v3515
    %v3856 = vunpack.c.h.b16 %v3515
    %v3857 = vunpack.c.l.b16 %v3516
    %v3858 = vunpack.c.h.b16 %v3516
    %v3859 = vunpack.c.l.b16 %v3517
    %v3860 = vunpack.c.h.b16 %v3517
    %v3861 = vunpack.c.l.b16 %v3518
    %v3862 = vunpack.c.h.b16 %v3518
    %v3863 = vunpack.c.l.b16 %v3519
    %v3864 = vunpack.c.h.b16 %v3519
    %v3865 = vunpack.c.l.b16 %v3520
    %v3866 = vunpack.c.h.b16 %v3520
    %v3867 = vunpack.c.l.b16 %v3521
    %v3868 = vunpack.c.h.b16 %v3521
    %v3869 = vunpack.c.l.b16 %v3522
    %v3870 = vunpack.c.h.b16 %v3522
    %v3871 = vpack.c.b16 %v3649, %v3647
    %v3872 = vpack.c.b16 %v3650, %v3648
    %v3873 = vpack.c.b16 %v3653, %v3651
    %v3874 = vpack.c.b16 %v3654, %v3652
    %v3875 = vpack.c.b16 %v3657, %v3655
    %v3876 = vpack.c.b16 %v3658, %v3656
    %v3877 = vpack.c.b16 %v3661, %v3659
    %v3878 = vpack.c.b16 %v3662, %v3660
    %v3879 = vpack.c.b16 %v3665, %v3663
    %v3880 = vpack.c.b16 %v3666, %v3664
    %v3881 = vpack.c.b16 %v3669, %v3667
    %v3882 = vpack.c.b16 %v3670, %v3668
    %v3883 = vpack.c.b16 %v3673, %v3671
    %v3884 = vpack.c.b16 %v3674, %v3672
    %v3885 = vpack.c.b16 %v3677, %v3675
    %v3886 = vpack.c.b16 %v3678, %v3676
    %v3887 = vpack.c.b16 %v3681, %v3679
    %v3888 = vpack.c.b16 %v3682, %v3680
    %v3889 = vpack.c.b16 %v3685, %v3683
    %v3890 = vpack.c.b16 %v3686, %v3684
    %v3891 = vpack.c.b16 %v3689, %v3687
    %v3892 = vpack.c.b16 %v3690, %v3688
    %v3893 = vpack.c.b16 %v3693, %v3691
    %v3894 = vpack.c.b16 %v3694, %v3692
    %v3895 = vpack.c.b16 %v3697, %v3695
    %v3896 = vpack.c.b16 %v3698, %v3696
    %v3897 = vpack.c.b16 %v3701, %v3699
    %v3898 = vpack.c.b16 %v3702, %v3700
    %v3899 = vpack.c.b16 %v3705, %v3703
    %v3900 = vpack.c.b16 %v3706, %v3704
    %v3901 = vpack.c.b16 %v3709, %v3707
    %v3902 = vpack.c.b16 %v3710, %v3708
    %v3903 = vpack.c.b16 %v3713, %v3711
    %v3904 = vpack.c.b16 %v3714, %v3712
    %v3905 = vpack.c.b16 %v3717, %v3715
    %v3906 = vpack.c.b16 %v3718, %v3716
    %v3907 = vpack.c.b16 %v3721, %v3719
    %v3908 = vpack.c.b16 %v3722, %v3720
    %v3909 = vpack.c.b16 %v3725, %v3723
    %v3910 = vpack.c.b16 %v3726, %v3724
    %v3911 = vpack.c.b16 %v3729, %v3727
    %v3912 = vpack.c.b16 %v3730, %v3728
    %v3913 = vpack.c.b16 %v3733, %v3731
    %v3914 = vpack.c.b16 %v3734, %v3732
    %v3915 = vpack.c.b16 %v3737, %v3735
    %v3916 = vpack.c.b16 %v3738, %v3736
    %v3917 = vpack.c.b16 %v3741, %v3739
    %v3918 = vpack.c.b16 %v3742, %v3740
    %v3919 = vpack.c.b16 %v3745, %v3743
    %v3920 = vpack.c.b16 %v3746, %v3744
    %v3921 = vpack.c.b16 %v3749, %v3747
    %v3922 = vpack.c.b16 %v3750, %v3748
    %v3923 = vpack.c.b16 %v3753, %v3751
    %v3924 = vpack.c.b16 %v3754, %v3752
    %v3925 = vpack.c.b16 %v3757, %v3755
    %v3926 = vpack.c.b16 %v3758, %v3756
    %v3927 = vpack.c.b16 %v3761, %v3759
    %v3928 = vpack.c.b16 %v3762, %v3760
    %v3929 = vpack.c.b16 %v3765, %v3763
    %v3930 = vpack.c.b16 %v3766, %v3764
    %v3931 = vpack.c.b16 %v3769, %v3767
    %v3932 = vpack.c.b16 %v3770, %v3768
    %v3933 = vpack.c.b16 %v3773, %v3771
    %v3934 = vpack.c.b16 %v3774, %v3772
    %v3935 = vpack.c.b16 %v3777, %v3775
    %v3936 = vpack.c.b16 %v3778, %v3776
    %v3937 = vpack.c.b16 %v3781, %v3779
    %v3938 = vpack.c.b16 %v3782, %v3780
    %v3939 = vpack.c.b16 %v3785, %v3783
    %v3940 = vpack.c.b16 %v3786, %v3784
    %v3941 = vpack.c.b16 %v3789, %v3787
    %v3942 = vpack.c.b16 %v3790, %v3788
    %v3943 = vpack.c.b16 %v3793, %v3791
    %v3944 = vpack.c.b16 %v3794, %v3792
    %v3945 = vpack.c.b16 %v3797, %v3795
    %v3946 = vpack.c.b16 %v3798, %v3796
    %v3947 = vpack.c.b16 %v3801, %v3799
    %v3948 = vpack.c.b16 %v3802, %v3800
    %v3949 = vpack.c.b16 %v3805, %v3803
    %v3950 = vpack.c.b16 %v3806, %v3804
    %v3951 = vpack.c.b16 %v3809, %v3807
    %v3952 = vpack.c.b16 %v3810, %v3808
    %v3953 = vpack.c.b16 %v3813, %v3811
    %v3954 = vpack.c.b16 %v3814, %v3812
    %v3955 = vpack.c.b16 %v3817, %v3815
    %v3956 = vpack.c.b16 %v3818, %v3816
    %v3957 = vpack.c.b16 %v3821, %v3819
    %v3958 = vpack.c.b16 %v3822, %v3820
    %v3959 = vpack.c.b16 %v3825, %v3823
    %v3960 = vpack.c.b16 %v3826, %v3824
    %v3961 = vpack.c.b16 %v3829, %v3827
    %v3962 = vpack.c.b16 %v3830, %v3828
    %v3963 = vpack.c.b16 %v3833, %v3831
    %v3964 = vpack.c.b16 %v3834, %v3832
    %v3965 = vpack.c.b16 %v3837, %v3835
    %v3966 = vpack.c.b16 %v3838, %v3836
    %v3967 = vpack.c.b16 %v3841, %v3839
    %v3968 = vpack.c.b16 %v3842, %v3840
    %v3969 = vpack.c.b16 %v3845, %v3843
    %v3970 = vpack.c.b16 %v3846, %v3844
    %v3971 = vpack.c.b16 %v3849, %v3847
    %v3972 = vpack.c.b16 %v3850, %v3848
    %v3973 = vpack.c.b16 %v3853, %v3851
    %v3974 = vpack.c.b16 %v3854, %v3852
    %v3975 = vpack.c.b16 %v3857, %v3855
    %v3976 = vpack.c.b16 %v3858, %v3856
    %v3977 = vpack.c.b16 %v3861, %v3859
    %v3978 = vpack.c.b16 %v3862, %v3860
    %v3979 = vpack.c.b16 %v3865, %v3863
    %v3980 = vpack.c.b16 %v3866, %v3864
    %v3981 = vpack.c.b16 %v3869, %v3867
    %v3982 = vpack.c.b16 %v3870, %v3868
    %4095 = vmatprep.subr.bf16.mxu0 %v3872
    %4096 = vmatpush1.bf16.msra.mxu0 %v3871
    %4097 = vmatprep.subr.bf16.mxu0 %v3874
    %4098 = vmatpush1.bf16.msra.mxu0 %v3873
    %4099 = vmatprep.subr.bf16.mxu0 %v3876
    %4100 = vmatpush1.bf16.msra.mxu0 %v3875
    %4101 = vmatprep.subr.bf16.mxu0 %v3878
    %4102 = vmatpush1.bf16.msra.mxu0 %v3877
    %4103 = vmatprep.subr.bf16.mxu0 %v3880
    %4104 = vmatpush1.bf16.msra.mxu0 %v3879
    %4105 = vmatprep.subr.bf16.mxu0 %v3882
    %4106 = vmatpush1.bf16.msra.mxu0 %v3881
    %4107 = vmatprep.subr.bf16.mxu0 %v3884
    %4108 = vmatpush1.bf16.msra.mxu0 %v3883
    %4109 = vmatprep.subr.bf16.mxu0 %v3886
    %4110 = vmatpush1.bf16.msra.mxu0 %v3885
    %4111 = vmatprep.subr.bf16.mxu0 %v3888
    %4112 = vmatpush1.bf16.msra.mxu0 %v3887
    %4113 = vmatprep.subr.bf16.mxu0 %v3890
    %4114 = vmatpush1.bf16.msra.mxu0 %v3889
    %4115 = vmatprep.subr.bf16.mxu0 %v3892
    %4116 = vmatpush1.bf16.msra.mxu0 %v3891
    %4117 = vmatprep.subr.bf16.mxu0 %v3894
    %4118 = vmatpush1.bf16.msra.mxu0 %v3893
    %4119 = vmatprep.subr.bf16.mxu0 %v3896
    %4120 = vmatpush1.bf16.msra.mxu0 %v3895
    %4121 = vmatprep.subr.bf16.mxu0 %v3898
    %4122 = vmatpush1.bf16.msra.mxu0 %v3897
    %4123 = vmatprep.subr.bf16.mxu0 %v3900
    %4124 = vmatpush1.bf16.msra.mxu0 %v3899
    %4125 = vmatprep.subr.bf16.mxu0 %v3902
    %4126 = vmatpush1.bf16.msra.mxu0 %v3901
    %4127 = vmatprep.mubr.bf16.mxu0 %v3405
    %4128 = vmatmul.mubr.bf16.gmra.mrb[0].mxu0 %v3404
    %v4129 = vpop.f32.mrb[0].mxu0
    %v4130 = vadd.f32 %v3528, %v4129
    %v4131 = vpop.f32.mrb[0].mxu0
    %v4132 = vadd.f32 %v3532, %v4131
    %v4133 = vpop.f32.mrb[0].mxu0
    %v4134 = vadd.f32 %v3528, %v4133
    %v4135 = vpop.f32.mrb[0].mxu0
    %v4136 = vadd.f32 %v3532, %v4135
    %4137 = vdwg.mxu0
    %4138 = vmatprep.subr.bf16.mxu0 %v3904
    %4139 = vmatpush1.bf16.msra.mxu0 %v3903
    %4140 = vmatprep.subr.bf16.mxu0 %v3906
    %4141 = vmatpush1.bf16.msra.mxu0 %v3905
    %4142 = vmatprep.subr.bf16.mxu0 %v3908
    %4143 = vmatpush1.bf16.msra.mxu0 %v3907
    %4144 = vmatprep.subr.bf16.mxu0 %v3910
    %4145 = vmatpush1.bf16.msra.mxu0 %v3909
    %4146 = vmatprep.subr.bf16.mxu0 %v3912
    %4147 = vmatpush1.bf16.msra.mxu0 %v3911
    %4148 = vmatprep.subr.bf16.mxu0 %v3914
    %4149 = vmatpush1.bf16.msra.mxu0 %v3913
    %4150 = vmatprep.subr.bf16.mxu0 %v3916
    %4151 = vmatpush1.bf16.msra.mxu0 %v3915
    %4152 = vmatprep.subr.bf16.mxu0 %v3918
    %4153 = vmatpush1.bf16.msra.mxu0 %v3917
    %4154 = vmatprep.subr.bf16.mxu0 %v3920
    %4155 = vmatpush1.bf16.msra.mxu0 %v3919
    %4156 = vmatprep.subr.bf16.mxu0 %v3922
    %4157 = vmatpush1.bf16.msra.mxu0 %v3921
    %4158 = vmatprep.subr.bf16.mxu0 %v3924
    %4159 = vmatpush1.bf16.msra.mxu0 %v3923
    %4160 = vmatprep.subr.bf16.mxu0 %v3926
    %4161 = vmatpush1.bf16.msra.mxu0 %v3925
    %4162 = vmatprep.subr.bf16.mxu0 %v3928
    %4163 = vmatpush1.bf16.msra.mxu0 %v3927
    %4164 = vmatprep.subr.bf16.mxu0 %v3930
    %4165 = vmatpush1.bf16.msra.mxu0 %v3929
    %4166 = vmatprep.subr.bf16.mxu0 %v3932
    %4167 = vmatpush1.bf16.msra.mxu0 %v3931
    %4168 = vmatprep.subr.bf16.mxu0 %v3934
    %4169 = vmatpush1.bf16.msra.mxu0 %v3933
    %4170 = vmatprep.mubr.bf16.mxu0 %v3407
    %4171 = vmatmul.mubr.bf16.gmra.mrb[0].mxu0 %v3406
    %v4172 = vpop.f32.mrb[0].mxu0
    %v4173 = vadd.f32 %v4130, %v4172
    %v4174 = vpop.f32.mrb[0].mxu0
    %v4175 = vadd.f32 %v4132, %v4174
    %v4176 = vpop.f32.mrb[0].mxu0
    %v4177 = vadd.f32 %v4134, %v4176
    %v4178 = vpop.f32.mrb[0].mxu0
    %v4179 = vadd.f32 %v4136, %v4178
    %4180 = vdwg.mxu0
    %4181 = vmatprep.subr.bf16.mxu0 %v3936
    %4182 = vmatpush1.bf16.msra.mxu0 %v3935
    %4183 = vmatprep.subr.bf16.mxu0 %v3938
    %4184 = vmatpush1.bf16.msra.mxu0 %v3937
    %4185 = vmatprep.subr.bf16.mxu0 %v3940
    %4186 = vmatpush1.bf16.msra.mxu0 %v3939
    %4187 = vmatprep.subr.bf16.mxu0 %v3942
    %4188 = vmatpush1.bf16.msra.mxu0 %v3941
    %4189 = vmatprep.subr.bf16.mxu0 %v3944
    %4190 = vmatpush1.bf16.msra.mxu0 %v3943
    %4191 = vmatprep.subr.bf16.mxu0 %v3946
    %4192 = vmatpush1.bf16.msra.mxu0 %v3945
    %4193 = vmatprep.subr.bf16.mxu0 %v3948
    %4194 = vmatpush1.bf16.msra.mxu0 %v3947
    %4195 = vmatprep.subr.bf16.mxu0 %v3950
    %4196 = vmatpush1.bf16.msra.mxu0 %v3949
    %4197 = vmatprep.subr.bf16.mxu0 %v3952
    %4198 = vmatpush1.bf16.msra.mxu0 %v3951
    %4199 = vmatprep.subr.bf16.mxu0 %v3954
    %4200 = vmatpush1.bf16.msra.mxu0 %v3953
    %4201 = vmatprep.subr.bf16.mxu0 %v3956
    %4202 = vmatpush1.bf16.msra.mxu0 %v3955
    %4203 = vmatprep.subr.bf16.mxu0 %v3958
    %4204 = vmatpush1.bf16.msra.mxu0 %v3957
    %4205 = vmatprep.subr.bf16.mxu0 %v3960
    %4206 = vmatpush1.bf16.msra.mxu0 %v3959
    %4207 = vmatprep.subr.bf16.mxu0 %v3962
    %4208 = vmatpush1.bf16.msra.mxu0 %v3961
    %4209 = vmatprep.subr.bf16.mxu0 %v3964
    %4210 = vmatpush1.bf16.msra.mxu0 %v3963
    %4211 = vmatprep.subr.bf16.mxu0 %v3966
    %4212 = vmatpush1.bf16.msra.mxu0 %v3965
    %4213 = vmatprep.mubr.bf16.mxu0 %v3409
    %4214 = vmatmul.mubr.bf16.gmra.mrb[0].mxu0 %v3408
    %v4215 = vpop.f32.mrb[0].mxu0
    %v4216 = vadd.f32 %v4173, %v4215
    %v4217 = vpop.f32.mrb[0].mxu0
    %v4218 = vadd.f32 %v4175, %v4217
    %v4219 = vpop.f32.mrb[0].mxu0
    %v4220 = vadd.f32 %v4177, %v4219
    %v4221 = vpop.f32.mrb[0].mxu0
    %v4222 = vadd.f32 %v4179, %v4221
    %4223 = vdwg.mxu0
    %4224 = vmatprep.subr.bf16.mxu0 %v3968
    %4225 = vmatpush1.bf16.msra.mxu0 %v3967
    %4226 = vmatprep.subr.bf16.mxu0 %v3970
    %4227 = vmatpush1.bf16.msra.mxu0 %v3969
    %4228 = vmatprep.subr.bf16.mxu0 %v3972
    %4229 = vmatpush1.bf16.msra.mxu0 %v3971
    %4230 = vmatprep.subr.bf16.mxu0 %v3974
    %4231 = vmatpush1.bf16.msra.mxu0 %v3973
    %4232 = vmatprep.subr.bf16.mxu0 %v3976
    %4233 = vmatpush1.bf16.msra.mxu0 %v3975
    %4234 = vmatprep.subr.bf16.mxu0 %v3978
    %4235 = vmatpush1.bf16.msra.mxu0 %v3977
    %4236 = vmatprep.subr.bf16.mxu0 %v3980
    %4237 = vmatpush1.bf16.msra.mxu0 %v3979
    %4238 = vmatprep.subr.bf16.mxu0 %v3982
    %4239 = vmatpush1.bf16.msra.mxu0 %v3981
    %4240 = vmatprep.subr.bf16.mxu0 0
    %4241 = vmatpush1.bf16.msra.mxu0 0
    %4242 = vmatprep.subr.bf16.mxu0 0
    %4243 = vmatpush1.bf16.msra.mxu0 0
    %4244 = vmatprep.subr.bf16.mxu0 0
    %4245 = vmatpush1.bf16.msra.mxu0 0
    %4246 = vmatprep.subr.bf16.mxu0 0
    %4247 = vmatpush1.bf16.msra.mxu0 0
    %4248 = vmatprep.subr.bf16.mxu0 0
    %4249 = vmatpush1.bf16.msra.mxu0 0
    %4250 = vmatprep.subr.bf16.mxu0 0
    %4251 = vmatpush1.bf16.msra.mxu0 0
    %4252 = vmatprep.subr.bf16.mxu0 0
    %4253 = vmatpush1.bf16.msra.mxu0 0
    %4254 = vmatprep.subr.bf16.mxu0 0
    %4255 = vmatpush1.bf16.msra.mxu0 0
    %4256 = vmatprep.mubr.bf16.mxu0 0
    %4257 = vmatmul.mubr.bf16.gmra.mrb[0].mxu0 %v3410
    %v4258 = vpop.f32.mrb[0].mxu0
    %v4259 = vadd.f32 %v4216, %v4258
    %v4260 = vpop.f32.mrb[0].mxu0
    %v4261 = vadd.f32 %v4218, %v4260
    %v4262 = vpop.f32.mrb[0].mxu0
    %v4263 = vadd.f32 %v4220, %v4262
    %v4264 = vpop.f32.mrb[0].mxu0
    %v4265 = vadd.f32 %v4222, %v4264
    %4266 = vdwg.mxu0
    %v4267 = vmax.f32 %v4259, 0.0
    %v4268 = vmax.f32 %v4261, 0.0
    %v4269 = vmax.f32 %v4263, 0.0
    %v4270 = vmax.f32 %v4265, 0.0
    %v4271 = vpack.c.bf16 %v4269, %v4267
    %v4272 = vpack.c.bf16 %v4270, %v4268
    %v4273 = vld [vmem:[#allocation9] sm:$0xf]
    %v4274 = vld [vmem:[#allocation9 + $0x4] sm:$0xf]
    %v4275 = vld [vmem:[#allocation9 + $0x8] sm:$0xf]
    %v4276 = vld [vmem:[#allocation9 + $0xc] sm:$0xf]
    %v4277 = vld [vmem:[#allocation9 + $0x10] sm:$0xf]
    %v4278 = vld [vmem:[#allocation9 + $0x14] sm:$0xf]
    %v4279 = vld [vmem:[#allocation9 + $0x18] sm:$0xf]
    %v4280 = vld [vmem:[#allocation9 + $0x1c] sm:$0xf]
    %v4281 = vld [vmem:[#allocation9 + $0x20] sm:$0xf]
    %v4282 = vld [vmem:[#allocation9 + $0x24] sm:$0xf]
    %v4283 = vld [vmem:[#allocation9 + $0x28] sm:$0xf]
    %v4284 = vld [vmem:[#allocation9 + $0x2c] sm:$0xf]
    %v4285 = vld [vmem:[#allocation9 + $0x30] sm:$0xf]
    %v4286 = vld [vmem:[#allocation9 + $0x34] sm:$0xf]
    %v4287 = vld [vmem:[#allocation9 + $0x38] sm:$0xf]
    %v4288 = vld [vmem:[#allocation9 + $0x3c] sm:$0xf]
    %v4289 = vld [vmem:[#allocation9 + $0x40] sm:$0xf]
    %v4290 = vld [vmem:[#allocation9 + $0x44] sm:$0xf]
    %v4291 = vld [vmem:[#allocation9 + $0x48] sm:$0xf]
    %v4292 = vld [vmem:[#allocation9 + $0x4c] sm:$0xf]
    %v4293 = vld [vmem:[#allocation9 + $0x50] sm:$0xf]
    %v4294 = vld [vmem:[#allocation9 + $0x54] sm:$0xf]
    %v4295 = vld [vmem:[#allocation9 + $0x58] sm:$0xf]
    %v4296 = vld [vmem:[#allocation9 + $0x5c] sm:$0xf]
    %v4297 = vld [vmem:[#allocation9 + $0x60] sm:$0xf]
    %v4298 = vld [vmem:[#allocation9 + $0x64] sm:$0xf]
    %v4299 = vld [vmem:[#allocation9 + $0x68] sm:$0xf]
    %v4300 = vld [vmem:[#allocation9 + $0x6c] sm:$0xf]
    %v4301 = vld [vmem:[#allocation9 + $0x70] sm:$0xf]
    %v4302 = vld [vmem:[#allocation9 + $0x74] sm:$0xf]
    %v4303 = vld [vmem:[#allocation9 + $0x78] sm:$0xf]
    %v4304 = vld [vmem:[#allocation9 + $0x7c] sm:$0xf]
    %v4305 = vld [vmem:[#allocation10] sm:$0x1]
    %v4307 = vlaneseq
    %v4308 = vshrl.u32 %v4307, 7
    %v4309 = vsub.s32 0, %v4308
    %v4310 = vrot.slane %v4305, %v4309
    %v4344 = vunpack.c.l.b16 %v4273
    %v4345 = vunpack.c.l.b16 %v4274
    %v4346 = vunpack.c.l.b16 %v4275
    %v4347 = vunpack.c.l.b16 %v4276
    %v4348 = vunpack.c.l.b16 %v4277
    %v4349 = vunpack.c.l.b16 %v4278
    %v4350 = vunpack.c.l.b16 %v4279
    %v4351 = vunpack.c.l.b16 %v4280
    %v4352 = vunpack.c.l.b16 %v4281
    %v4353 = vunpack.c.l.b16 %v4282
    %v4354 = vunpack.c.l.b16 %v4283
    %v4355 = vunpack.c.l.b16 %v4284
    %v4356 = vunpack.c.l.b16 %v4285
    %v4357 = vunpack.c.l.b16 %v4286
    %v4358 = vunpack.c.l.b16 %v4287
    %v4359 = vunpack.c.l.b16 %v4288
    %v4360 = vunpack.c.l.b16 %v4289
    %v4361 = vunpack.c.l.b16 %v4290
    %v4362 = vunpack.c.l.b16 %v4291
    %v4363 = vunpack.c.l.b16 %v4292
    %v4364 = vunpack.c.l.b16 %v4293
    %v4365 = vunpack.c.l.b16 %v4294
    %v4366 = vunpack.c.l.b16 %v4295
    %v4367 = vunpack.c.l.b16 %v4296
    %v4368 = vunpack.c.l.b16 %v4297
    %v4369 = vunpack.c.l.b16 %v4298
    %v4370 = vunpack.c.l.b16 %v4299
    %v4371 = vunpack.c.l.b16 %v4300
    %v4372 = vunpack.c.l.b16 %v4301
    %v4373 = vunpack.c.l.b16 %v4302
    %v4374 = vunpack.c.l.b16 %v4303
    %v4375 = vunpack.c.l.b16 %v4304
    %v4376 = vpack.c.b16 %v4345, %v4344
    %v4377 = vpack.c.b16 %v4347, %v4346
    %v4378 = vpack.c.b16 %v4349, %v4348
    %v4379 = vpack.c.b16 %v4351, %v4350
    %v4380 = vpack.c.b16 %v4353, %v4352
    %v4381 = vpack.c.b16 %v4355, %v4354
    %v4382 = vpack.c.b16 %v4357, %v4356
    %v4383 = vpack.c.b16 %v4359, %v4358
    %v4384 = vpack.c.b16 %v4361, %v4360
    %v4385 = vpack.c.b16 %v4363, %v4362
    %v4386 = vpack.c.b16 %v4365, %v4364
    %v4387 = vpack.c.b16 %v4367, %v4366
    %v4388 = vpack.c.b16 %v4369, %v4368
    %v4389 = vpack.c.b16 %v4371, %v4370
    %v4390 = vpack.c.b16 %v4373, %v4372
    %v4391 = vpack.c.b16 %v4375, %v4374
    %4408 = vmatprep.subr.bf16.mxu0 0
    %4409 = vmatpush1.bf16.msra.mxu0 %v4376
    %4410 = vmatprep.subr.bf16.mxu0 0
    %4411 = vmatpush1.bf16.msra.mxu0 %v4377
    %4412 = vmatprep.subr.bf16.mxu0 0
    %4413 = vmatpush1.bf16.msra.mxu0 %v4378
    %4414 = vmatprep.subr.bf16.mxu0 0
    %4415 = vmatpush1.bf16.msra.mxu0 %v4379
    %4416 = vmatprep.subr.bf16.mxu0 0
    %4417 = vmatpush1.bf16.msra.mxu0 %v4380
    %4418 = vmatprep.subr.bf16.mxu0 0
    %4419 = vmatpush1.bf16.msra.mxu0 %v4381
    %4420 = vmatprep.subr.bf16.mxu0 0
    %4421 = vmatpush1.bf16.msra.mxu0 %v4382
    %4422 = vmatprep.subr.bf16.mxu0 0
    %4423 = vmatpush1.bf16.msra.mxu0 %v4383
    %4424 = vmatprep.subr.bf16.mxu0 0
    %4425 = vmatpush1.bf16.msra.mxu0 %v4384
    %4426 = vmatprep.subr.bf16.mxu0 0
    %4427 = vmatpush1.bf16.msra.mxu0 %v4385
    %4428 = vmatprep.subr.bf16.mxu0 0
    %4429 = vmatpush1.bf16.msra.mxu0 %v4386
    %4430 = vmatprep.subr.bf16.mxu0 0
    %4431 = vmatpush1.bf16.msra.mxu0 %v4387
    %4432 = vmatprep.subr.bf16.mxu0 0
    %4433 = vmatpush1.bf16.msra.mxu0 %v4388
    %4434 = vmatprep.subr.bf16.mxu0 0
    %4435 = vmatpush1.bf16.msra.mxu0 %v4389
    %4436 = vmatprep.subr.bf16.mxu0 0
    %4437 = vmatpush1.bf16.msra.mxu0 %v4390
    %4438 = vmatprep.subr.bf16.mxu0 0
    %4439 = vmatpush1.bf16.msra.mxu0 %v4391
    %4440 = vmatprep.mubr.bf16.mxu0 %v4272
    %4441 = vmatmul.mubr.bf16.gmra.mrb[0].mxu0 %v4271
    %v4442 = vpop.f32.mrb[0].mxu0
    %v4443 = vadd.f32 %v4310, %v4442
    %v4444 = vpop.f32.mrb[0].mxu0
    %v4445 = vpop.f32.mrb[0].mxu0
    %v4446 = vadd.f32 %v4310, %v4445
    %v4447 = vpop.f32.mrb[0].mxu0
    %4448 = vdwg.mxu0
    %v4449 = vmax.f32 %v4443, 0.0
    %v4450 = vmax.f32 %v4446, 0.0
    %v4451 = vpack.c.bf16 %v4450, %v4449
    %v4452 = vld [vmem:[#allocation12] sm:$0xf]
    %v4453 = vld [vmem:[#allocation12 + $0x4] sm:$0xf]
    %v4454 = vld [vmem:[#allocation12 + $0x8] sm:$0xf]
    %v4455 = vld [vmem:[#allocation12 + $0xc] sm:$0xf]
    %v4456 = vld [vmem:[#allocation12 + $0x10] sm:$0xf]
    %v4457 = vld [vmem:[#allocation12 + $0x14] sm:$0xf]
    %v4458 = vld [vmem:[#allocation12 + $0x18] sm:$0xf]
    %v4459 = vld [vmem:[#allocation12 + $0x1c] sm:$0xf]
    %v4460 = vld [vmem:[#allocation12 + $0x20] sm:$0xf]
    %v4461 = vld [vmem:[#allocation12 + $0x24] sm:$0xf]
    %v4462 = vld [vmem:[#allocation12 + $0x28] sm:$0xf]
    %v4463 = vld [vmem:[#allocation12 + $0x2c] sm:$0xf]
    %v4464 = vld [vmem:[#allocation12 + $0x30] sm:$0xf]
    %v4465 = vld [vmem:[#allocation12 + $0x34] sm:$0xf]
    %v4466 = vld [vmem:[#allocation12 + $0x38] sm:$0xf]
    %v4467 = vld [vmem:[#allocation12 + $0x3c] sm:$0xf]
    %v4468 = vld [vmem:[#allocation13] sm:$0x1]
    %v4470 = vlaneseq
    %v4471 = vshrl.u32 %v4470, 7
    %v4472 = vsub.s32 0, %v4471
    %v4473 = vrot.slane %v4468, %v4472
    %v4491 = vunpack.c.l.b16 %v4452
    %v4492 = vunpack.c.l.b16 %v4453
    %v4493 = vunpack.c.l.b16 %v4454
    %v4494 = vunpack.c.l.b16 %v4455
    %v4495 = vunpack.c.l.b16 %v4456
    %v4496 = vunpack.c.l.b16 %v4457
    %v4497 = vunpack.c.l.b16 %v4458
    %v4498 = vunpack.c.l.b16 %v4459
    %v4499 = vunpack.c.l.b16 %v4460
    %v4500 = vunpack.c.l.b16 %v4461
    %v4501 = vunpack.c.l.b16 %v4462
    %v4502 = vunpack.c.l.b16 %v4463
    %v4503 = vunpack.c.l.b16 %v4464
    %v4504 = vunpack.c.l.b16 %v4465
    %v4505 = vunpack.c.l.b16 %v4466
    %v4506 = vunpack.c.l.b16 %v4467
    %v4507 = vpack.c.b16 %v4492, %v4491
    %v4508 = vpack.c.b16 %v4494, %v4493
    %v4509 = vpack.c.b16 %v4496, %v4495
    %v4510 = vpack.c.b16 %v4498, %v4497
    %v4511 = vpack.c.b16 %v4500, %v4499
    %v4512 = vpack.c.b16 %v4502, %v4501
    %v4513 = vpack.c.b16 %v4504, %v4503
    %v4514 = vpack.c.b16 %v4506, %v4505
    %4523 = vmatprep.subr.bf16.mxu0 0
    %4524 = vmatpush1.bf16.msra.mxu0 %v4507
    %4525 = vmatprep.subr.bf16.mxu0 0
    %4526 = vmatpush1.bf16.msra.mxu0 %v4508
    %4527 = vmatprep.subr.bf16.mxu0 0
    %4528 = vmatpush1.bf16.msra.mxu0 %v4509
    %4529 = vmatprep.subr.bf16.mxu0 0
    %4530 = vmatpush1.bf16.msra.mxu0 %v4510
    %4531 = vmatprep.subr.bf16.mxu0 0
    %4532 = vmatpush1.bf16.msra.mxu0 %v4511
    %4533 = vmatprep.subr.bf16.mxu0 0
    %4534 = vmatpush1.bf16.msra.mxu0 %v4512
    %4535 = vmatprep.subr.bf16.mxu0 0
    %4536 = vmatpush1.bf16.msra.mxu0 %v4513
    %4537 = vmatprep.subr.bf16.mxu0 0
    %4538 = vmatpush1.bf16.msra.mxu0 %v4514
    %4539 = vmatprep.subr.bf16.mxu0 0
    %4540 = vmatpush1.bf16.msra.mxu0 0
    %4541 = vmatprep.subr.bf16.mxu0 0
    %4542 = vmatpush1.bf16.msra.mxu0 0
    %4543 = vmatprep.subr.bf16.mxu0 0
    %4544 = vmatpush1.bf16.msra.mxu0 0
    %4545 = vmatprep.subr.bf16.mxu0 0
    %4546 = vmatpush1.bf16.msra.mxu0 0
    %4547 = vmatprep.subr.bf16.mxu0 0
    %4548 = vmatpush1.bf16.msra.mxu0 0
    %4549 = vmatprep.subr.bf16.mxu0 0
    %4550 = vmatpush1.bf16.msra.mxu0 0
    %4551 = vmatprep.subr.bf16.mxu0 0
    %4552 = vmatpush1.bf16.msra.mxu0 0
    %4553 = vmatprep.subr.bf16.mxu0 0
    %4554 = vmatpush1.bf16.msra.mxu0 0
    %4555 = vmatprep.mubr.bf16.mxu0 0
    %4556 = vmatmul.mubr.bf16.gmra.mrb[0].mxu0 %v4451
    %v4557 = vpop.f32.mrb[0].mxu0
    %v4558 = vadd.f32 %v4473, %v4557
    %v4559 = vpop.f32.mrb[0].mxu0
    %v4560 = vpop.f32.mrb[0].mxu0
    %v4561 = vadd.f32 %v4473, %v4560
    %v4562 = vpop.f32.mrb[0].mxu0
    %4563 = vdwg.mxu0
    %v4564 = vmax.f32 %v4558, 0.0
    %v4565 = vmax.f32 %v4561, 0.0
    %v4566 = vpack.c.bf16 %v4565, %v4564
    %v4567 = vld [vmem:[#allocation15] sm:$0xf]
    %v4568 = vld [vmem:[#allocation15 + $0x4] sm:$0xf]
    %v4569 = vld [vmem:[#allocation15 + $0x8] sm:$0xf]
    %v4570 = vld [vmem:[#allocation15 + $0xc] sm:$0xf]
    %v4571 = vld [vmem:[#allocation15 + $0x10] sm:$0xf]
    %v4572 = vld [vmem:[#allocation15 + $0x14] sm:$0xf]
    %v4573 = vld [vmem:[#allocation15 + $0x18] sm:$0xf]
    %v4574 = vld [vmem:[#allocation15 + $0x1c] sm:$0xf]
    %v4575 = vld [vmem:[#allocation15 + $0x20] sm:$0xf]
    %v4576 = vld [vmem:[#allocation15 + $0x24] sm:$0xf]
    %v4577 = vld [vmem:[#allocation15 + $0x28] sm:$0xf]
    %v4578 = vld [vmem:[#allocation15 + $0x2c] sm:$0xf]
    %v4579 = vld [vmem:[#allocation15 + $0x30] sm:$0xf]
    %v4580 = vld [vmem:[#allocation15 + $0x34] sm:$0xf]
    %v4581 = vld [vmem:[#allocation15 + $0x38] sm:$0xf]
    %v4582 = vld [vmem:[#allocation15 + $0x3c] sm:$0xf]
    %v4583 = vld [vmem:[#allocation16] sm:$0x1]
    %v4585 = vlaneseq
    %v4586 = vshrl.u32 %v4585, 7
    %v4587 = vsub.s32 0, %v4586
    %v4588 = vrot.slane %v4583, %v4587
    %v4606 = vunpack.c.l.b16 %v4567
    %v4607 = vunpack.c.l.b16 %v4568
    %v4608 = vunpack.c.l.b16 %v4569
    %v4609 = vunpack.c.l.b16 %v4570
    %v4610 = vunpack.c.l.b16 %v4571
    %v4611 = vunpack.c.l.b16 %v4572
    %v4612 = vunpack.c.l.b16 %v4573
    %v4613 = vunpack.c.l.b16 %v4574
    %v4614 = vunpack.c.l.b16 %v4575
    %v4615 = vunpack.c.l.b16 %v4576
    %v4616 = vunpack.c.l.b16 %v4577
    %v4617 = vunpack.c.l.b16 %v4578
    %v4618 = vunpack.c.l.b16 %v4579
    %v4619 = vunpack.c.l.b16 %v4580
    %v4620 = vunpack.c.l.b16 %v4581
    %v4621 = vunpack.c.l.b16 %v4582
    %v4622 = vpack.c.b16 %v4607, %v4606
    %v4623 = vpack.c.b16 %v4609, %v4608
    %v4624 = vpack.c.b16 %v4611, %v4610
    %v4625 = vpack.c.b16 %v4613, %v4612
    %v4626 = vpack.c.b16 %v4615, %v4614
    %v4627 = vpack.c.b16 %v4617, %v4616
    %v4628 = vpack.c.b16 %v4619, %v4618
    %v4629 = vpack.c.b16 %v4621, %v4620
    %4638 = vmatprep.subr.bf16.mxu0 0
    %4639 = vmatpush1.bf16.msra.mxu0 %v4622
    %4640 = vmatprep.subr.bf16.mxu0 0
    %4641 = vmatpush1.bf16.msra.mxu0 %v4623
    %4642 = vmatprep.subr.bf16.mxu0 0
    %4643 = vmatpush1.bf16.msra.mxu0 %v4624
    %4644 = vmatprep.subr.bf16.mxu0 0
    %4645 = vmatpush1.bf16.msra.mxu0 %v4625
    %4646 = vmatprep.subr.bf16.mxu0 0
    %4647 = vmatpush1.bf16.msra.mxu0 %v4626
    %4648 = vmatprep.subr.bf16.mxu0 0
    %4649 = vmatpush1.bf16.msra.mxu0 %v4627
    %4650 = vmatprep.subr.bf16.mxu0 0
    %4651 = vmatpush1.bf16.msra.mxu0 %v4628
    %4652 = vmatprep.subr.bf16.mxu0 0
    %4653 = vmatpush1.bf16.msra.mxu0 %v4629
    %4654 = vmatprep.subr.bf16.mxu0 0
    %4655 = vmatpush1.bf16.msra.mxu0 0
    %4656 = vmatprep.subr.bf16.mxu0 0
    %4657 = vmatpush1.bf16.msra.mxu0 0
    %4658 = vmatprep.subr.bf16.mxu0 0
    %4659 = vmatpush1.bf16.msra.mxu0 0
    %4660 = vmatprep.subr.bf16.mxu0 0
    %4661 = vmatpush1.bf16.msra.mxu0 0
    %4662 = vmatprep.subr.bf16.mxu0 0
    %4663 = vmatpush1.bf16.msra.mxu0 0
    %4664 = vmatprep.subr.bf16.mxu0 0
    %4665 = vmatpush1.bf16.msra.mxu0 0
    %4666 = vmatprep.subr.bf16.mxu0 0
    %4667 = vmatpush1.bf16.msra.mxu0 0
    %4668 = vmatprep.subr.bf16.mxu0 0
    %4669 = vmatpush1.bf16.msra.mxu0 0
    %4670 = vmatprep.mubr.bf16.mxu0 0
    %4671 = vmatmul.mubr.bf16.gmra.mrb[0].mxu0 %v4566
    %v4672 = vpop.f32.mrb[0].mxu0
    %v4673 = vadd.f32 %v4588, %v4672
    %v4674 = vpop.f32.mrb[0].mxu0
    %v4675 = vpop.f32.mrb[0].mxu0
    %v4676 = vadd.f32 %v4588, %v4675
    %v4677 = vpop.f32.mrb[0].mxu0
    %4678 = vdwg.mxu0
    %v4679 = vmax.f32 %v4673, 0.0
    %v4680 = vmax.f32 %v4676, 0.0
    %4681 = vst [vmem:[%s11] sm:$0xff] %v4679
    %4682 = vst [vmem:[%s11 + $0x8] sm:$0xff] %v4680
    // Predicated region
    $region86: #{lenet5_forward.1} parent=1 // pred_check
      _
    $region87: #{lenet5_forward.1} parent=1 // pred_check_branch
      %4684 = sbr.rel (0) target = $region89
    $region88: #{lenet5_forward.1} parent=1 // pred_region
      _
    $region89: #{lenet5_forward.1} parent=1 // pred_fallthru
      _
    // Predicated region
    $region90: #{lenet5_forward.1} parent=1 // pred_check
      _
    $region91: #{lenet5_forward.1} parent=1 // pred_check_branch
      %4686 = sbr.rel (0) target = $region93
    $region92: #{lenet5_forward.1} parent=1 // pred_region
      _
    $region93: #{lenet5_forward.1} parent=1 // pred_fallthru
      _
    %4687 = vsyncpa [#allocation3], 1
    %4688 = vsyncpa [#allocation5], 1
    %4689 = vsyncpa [#allocation8], 1
    %4690 = vsyncpa [#allocation11], 1
    %4691 = vsyncpa [#allocation14], 1
    %4692 = vsyncpa [#allocation17], 1

</llo_original>
